<compile_context>
chip_gen: v5e
topology: v5e:2x2
jax: 0.10.0
libtpu: 0.0.40
codegen_flags: <defaults>
</compile_context>

<pallas_src>
import functools

import jax
import jax.numpy as jnp
from jax.experimental import pallas as pl
from jax.experimental.pallas import tpu as pltpu


def _lstm_fc_kernel(x_ref, wih_ref, whh_ref, b_ref, wfc_ref, bfc_ref, o_ref,
                    *, seq_len, bf16_gates):
    """Per-(batch, pixel-tile) LSTM recurrence (T unrolled) + Linear head.

    Transposed (feature-major) layout: pixels live on the 128-lane axis.

    x_ref   : (T*F, tile_p)  f32   per-pixel sequences (cast to bf16 in-kernel)
    wih_ref : (4H, F)        bf16  input->gates weights (i/f/o rows pre-scaled by 0.5)
    whh_ref : (4H, H)        bf16  hidden->gates weights (pre-scaled likewise)
    b_ref   : (4H, 1)        f32   combined bias b_ih + b_hh (pre-scaled)
    wfc_ref : (C, H)         bf16  fc weights
    bfc_ref : (C, 1)         f32   fc bias
    o_ref   : (C, tile_p)    f32   output logits per pixel (lane-dense)
    """
    F = wih_ref.shape[1]
    H = whh_ref.shape[1]
    T = seq_len

    gate_dtype = jnp.bfloat16 if bf16_gates else jnp.float32
    half = jnp.asarray(0.5, dtype=gate_dtype)

    w_ih = wih_ref[...]                      # (4H, F)  bf16
    w_hh = whh_ref[...]                      # (4H, H)  bf16
    b = b_ref[...]                           # (4H, 1)  f32

    c = None
    h_bf = None
    # T is small and static -> fully unrolled python loop (LLO-visible).
    for t in range(T):
        # Per-timestep input projection: result is consumed immediately.
        x_t = x_ref[t * F:(t + 1) * F, :].astype(jnp.bfloat16)      # (F, tile_p)
        gates = jnp.dot(w_ih, x_t, preferred_element_type=jnp.float32)
        if h_bf is not None:
            gates = gates + jnp.dot(w_hh, h_bf,
                                    preferred_element_type=jnp.float32)
        gates = gates + b                                            # (4H, tile_p) f32

        # Single tanh over all four gates; sigmoid(z) = 0.5 + 0.5*tanh(z/2)
        # (the /2 is already folded into the i/f/o weights & bias).
        a = jnp.tanh(gates.astype(gate_dtype))                       # (4H, tile_p)
        i_g = half + half * a[0 * H:1 * H, :]
        f_g = half + half * a[1 * H:2 * H, :]
        g_g = a[2 * H:3 * H, :]
        o_g = half + half * a[3 * H:4 * H, :]

        ig_gg = (i_g * g_g).astype(jnp.float32)
        if c is None:
            c = ig_gg                                                # f32 state
        else:
            c = f_g.astype(jnp.float32) * c + ig_gg                  # f32 accumulation
        h = o_g.astype(jnp.float32) * jnp.tanh(c)                    # f32 state
        h_bf = h.astype(jnp.bfloat16)                                # bf16 MXU operand

    out = (jnp.dot(wfc_ref[...], h_bf, preferred_element_type=jnp.float32)
           + bfc_ref[...])                                           # (C, tile_p) f32
    o_ref[...] = out.astype(o_ref.dtype)


def _pick_tile_p(P, want):
    """Largest pixel-tile <= want that divides P and is a multiple of 128."""
    t = min(want, P)
    if P % t == 0 and (t % 128 == 0 or t == P):
        return t
    for cand in range((t // 128) * 128, 0, -128):
        if P % cand == 0:
            return cand
    return P    # fallback: one tile per batch row (always legal)


def lstm_pixel_forward(x_nchw, params, *, lstm_inputs=12, lstm_outputs=64,
                       num_classes=4, seq_len=6, tile_p=2048, bf16_gates=None):
    """Full forward pass matching LSTM.forward (spatial size parameterized)."""
    W_ih, W_hh, b_ih, b_hh, W_fc, b_fc = params
    B, CC, Sh, Sw = x_nchw.shape
    T, F, H, C = seq_len, lstm_inputs, lstm_outputs, num_classes
    assert CC == T * F, f"expected {T * F} input channels, got {CC}"
    P = Sh * Sw

    if bf16_gates is None:
        # bf16 gate math only where the VPU/EUP support it (v6e / v7x).
        try:
            kind = jax.devices()[0].device_kind.lower()
        except Exception:  # pragma: no cover
            kind = ""
        bf16_gates = not any(tag in kind for tag in ("v2", "v3", "v4", "v5"))

    # --- x: pure reshape (channel dim is already t*F+f ordered, P contiguous),
    # no transpose and no extra HBM pass; bf16 cast happens inside the kernel.
    x3 = x_nchw.reshape(B, T * F, P)

    # --- kernel-friendly parameter layouts (torch gate order i, f, g, o).
    # Fold the sigmoid-via-tanh 0.5 pre-scale into the i/f/o gate weights/bias.
    gate_scale = jnp.concatenate([
        jnp.full((2 * H,), 0.5, jnp.float32),   # i, f
        jnp.ones((H,), jnp.float32),            # g (tanh, unscaled)
        jnp.full((H,), 0.5, jnp.float32),       # o
    ])
    w_ih = (W_ih.astype(jnp.float32) * gate_scale[:, None]).astype(jnp.bfloat16)
    w_hh = (W_hh.astype(jnp.float32) * gate_scale[:, None]).astype(jnp.bfloat16)
    b_col = ((b_ih + b_hh).astype(jnp.float32) * gate_scale).reshape(4 * H, 1)
    w_fc = W_fc.astype(jnp.bfloat16)
    b_fc_col = b_fc.reshape(C, 1).astype(jnp.float32)

    tile_p = _pick_tile_p(P, tile_p)
    grid = (B, P // tile_p)

    kernel = functools.partial(_lstm_fc_kernel, seq_len=T,
                               bf16_gates=bool(bf16_gates))

    full2d = lambda arr: pl.BlockSpec(arr.shape, lambda b, i: (0, 0))

    out3 = pl.pallas_call(
        kernel,
        out_shape=jax.ShapeDtypeStruct((B, C, P), jnp.float32),
        grid_spec=pltpu.PrefetchScalarGridSpec(
            num_scalar_prefetch=0,
            grid=grid,
            in_specs=[
                # x tiles: batch dim squeezed out, pixels on the lane axis.
                pl.BlockSpec((pl.Squeezed(), T * F, tile_p),
                             lambda b, i: (b, 0, i)),
                full2d(w_ih),       # W_ih (pre-scaled)
                full2d(w_hh),       # W_hh (pre-scaled)
                full2d(b_col),      # combined bias
                full2d(w_fc),       # W_fc
                full2d(b_fc_col),   # b_fc
            ],
            out_specs=pl.BlockSpec((pl.Squeezed(), C, tile_p),
                                   lambda b, i: (b, 0, i)),
        ),
        compiler_params=pltpu.CompilerParams(
            dimension_semantics=("parallel", "parallel"),
            vmem_limit_bytes=32 * 1024 * 1024),
    )(x3, w_ih, w_hh, b_col, w_fc, b_fc_col)

    # (B, C, P) -> (B, C, S, S): free reshape, no transpose.
    return out3.reshape(B, C, Sh, Sw)


def lstm_pixel_reference(x_nchw, params, *, lstm_inputs=12, lstm_outputs=64,
                         num_classes=4, seq_len=6):
    """Pure-JAX f32 reference mirroring torch.nn.LSTM (gate order i,f,g,o) + Linear."""
    W_ih, W_hh, b_ih, b_hh, W_fc, b_fc = params
    B, _, Sh, Sw = x_nchw.shape
    T, F, H, C = seq_len, lstm_inputs, lstm_outputs, num_classes
    P = Sh * Sw
    seq = x_nchw.reshape(B, T, F, P).transpose(0, 3, 1, 2).reshape(B * P, T, F)
    seq = seq.astype(jnp.float32)
    h = jnp.zeros((B * P, H), jnp.float32)
    c = jnp.zeros((B * P, H), jnp.float32)
    for t in range(T):
        g = seq[:, t] @ W_ih.T + b_ih + h @ W_hh.T + b_hh
        i_g = jax.nn.sigmoid(g[:, :H])
        f_g = jax.nn.sigmoid(g[:, H:2 * H])
        g_g = jnp.tanh(g[:, 2 * H:3 * H])
        o_g = jax.nn.sigmoid(g[:, 3 * H:])
        c = f_g * c + i_g * g_g
        h = o_g * jnp.tanh(c)
    out = h @ W_fc.T + b_fc
    return out.reshape(B, P, C).transpose(0, 2, 1).reshape(B, C, Sh, Sw)


def init_params(key, *, lstm_inputs=12, lstm_outputs=64, num_classes=4):
    """Deterministic synthetic parameters with the torch module's shapes."""
    F, H, C = lstm_inputs, lstm_outputs, num_classes
    k = jax.random.split(key, 6)
    scale = 1.0 / jnp.sqrt(H)
    W_ih = jax.random.uniform(k[0], (4 * H, F), jnp.float32, -scale, scale)
    W_hh = jax.random.uniform(k[1], (4 * H, H), jnp.float32, -scale, scale)
    b_ih = jax.random.uniform(k[2], (4 * H,), jnp.float32, -scale, scale)
    b_hh = jax.random.uniform(k[3], (4 * H,), jnp.float32, -scale, scale)
    W_fc = jax.random.uniform(k[4], (C, H), jnp.float32, -scale, scale)
    b_fc = jax.random.uniform(k[5], (C,), jnp.float32, -scale, scale)
    return (W_ih, W_hh, b_ih, b_hh, W_fc, b_fc)


if __name__ == "__main__":
    LSTM_INPUTS, LSTM_OUTPUTS, NUM_CLASSES, SEQ_LEN = 12, 64, 4, 6
    B, S = 2, 16   # small spatial grid (module hardcodes 128; semantics identical)

    key = jax.random.PRNGKey(0)
    kx, kp = jax.random.split(key)
    x = jax.random.normal(kx, (B, SEQ_LEN * LSTM_INPUTS, S, S), jnp.float32)
    params = init_params(kp, lstm_inputs=LSTM_INPUTS,
                         lstm_outputs=LSTM_OUTPUTS, num_classes=NUM_CLASSES)

    # tile_p=128 keeps the grid at (2, 2) for this tiny test (v7x: both TCs
    # busy); for the real 128x128 case the default tile_p=2048 gives B*8 tiles.
    fwd = jax.jit(functools.partial(
        lstm_pixel_forward, lstm_inputs=LSTM_INPUTS, lstm_outputs=LSTM_OUTPUTS,
        num_classes=NUM_CLASSES, seq_len=SEQ_LEN, tile_p=128))

    out = jax.block_until_ready(fwd(x, params))
    assert out.shape == (B, NUM_CLASSES, S, S), out.shape

    ref = lstm_pixel_reference(x, params, lstm_inputs=LSTM_INPUTS,
                               lstm_outputs=LSTM_OUTPUTS,
                               num_classes=NUM_CLASSES, seq_len=SEQ_LEN)
    # bf16 MXU operands + (on v6e/v7x) bf16 gate nonlinearity, f32 c/h state
    # and f32 accumulation => modest tolerance vs the pure-f32 reference.
    max_err = float(jnp.max(jnp.abs(out - ref)))
    assert jnp.allclose(out, ref, rtol=5e-2, atol=5e-2), max_err

    print("KERNEL_OK")
</pallas_src>

<mosaic_0001>
module attributes {stable_mosaic.version = 11 : i64} {
  func.func @_lstm_fc_kernel(%arg0: i32, %arg1: i32, %arg2: memref<1x72x128xf32, #tpu.memory_space<vmem>>, %arg3: memref<256x12xbf16, #tpu.memory_space<vmem>>, %arg4: memref<256x64xbf16, #tpu.memory_space<vmem>>, %arg5: memref<256x1xf32, #tpu.memory_space<vmem>>, %arg6: memref<4x64xbf16, #tpu.memory_space<vmem>>, %arg7: memref<4x1xf32, #tpu.memory_space<vmem>>, %arg8: memref<1x4x128xf32, #tpu.memory_space<vmem>>) attributes {dimension_semantics = [#tpu.dimension_semantics<parallel>, #tpu.dimension_semantics<parallel>], iteration_bounds = array<i64: 2, 2>, scalar_prefetch = 0 : i64, scratch_operands = 0 : i64, tpu.core_type = #tpu.core_type<tc>, window_params = [{transform_indices = @transform_0, window_bounds = array<i64: 1, 72, 128>}, {pipeline_mode = #tpu.pipeline_mode<synchronous>, transform_indices = @transform_1, window_bounds = array<i64: 256, 12>}, {pipeline_mode = #tpu.pipeline_mode<synchronous>, transform_indices = @transform_2, window_bounds = array<i64: 256, 64>}, {pipeline_mode = #tpu.pipeline_mode<synchronous>, transform_indices = @transform_3, window_bounds = array<i64: 256, 1>}, {pipeline_mode = #tpu.pipeline_mode<synchronous>, transform_indices = @transform_4, window_bounds = array<i64: 4, 64>}, {pipeline_mode = #tpu.pipeline_mode<synchronous>, transform_indices = @transform_5, window_bounds = array<i64: 4, 1>}, {transform_indices = @transform_6, window_bounds = array<i64: 1, 4, 128>}]} {
    %c0 = arith.constant 0 : index
    %c0_0 = arith.constant 0 : index
    %0 = vector.load %arg3[%c0, %c0_0] : memref<256x12xbf16, #tpu.memory_space<vmem>>, vector<256x12xbf16>
    %c0_1 = arith.constant 0 : index
    %c0_2 = arith.constant 0 : index
    %1 = vector.load %arg4[%c0_1, %c0_2] : memref<256x64xbf16, #tpu.memory_space<vmem>>, vector<256x64xbf16>
    %c0_3 = arith.constant 0 : index
    %c0_4 = arith.constant 0 : index
    %2 = vector.load %arg5[%c0_3, %c0_4] : memref<256x1xf32, #tpu.memory_space<vmem>>, vector<256x1xf32>
    %c0_5 = arith.constant 0 : index
    %c0_6 = arith.constant 0 : index
    %c0_7 = arith.constant 0 : index
    %3 = vector.load %arg2[%c0_5, %c0_6, %c0_7] : memref<1x72x128xf32, #tpu.memory_space<vmem>>, vector<1x12x128xf32>
    %4 = vector.shape_cast %3 : vector<1x12x128xf32> to vector<12x128xf32>
    %5 = arith.truncf %4 : vector<12x128xf32> to vector<12x128xbf16>
    %cst = arith.constant dense<0.000000e+00> : vector<256x128xf32>
    %6 = tpu.matmul %0, %5, %cst {dimension_numbers = #tpu.dot_dimension_numbers<[1], [0], [0], [1], [0, 0, 1, 1], [], []>} : vector<256x12xbf16>, vector<12x128xbf16>, vector<256x128xf32> -> vector<256x128xf32>
    %7 = vector.broadcast %2 : vector<256x1xf32> to vector<256x128xf32>
    %8 = arith.addf %6, %7 : vector<256x128xf32>
    %9 = arith.truncf %8 : vector<256x128xf32> to vector<256x128xbf16>
    %10 = math.tanh %9 : vector<256x128xbf16>
    %11 = vector.extract_strided_slice %10 {offsets = [0, 0], sizes = [64, 128], strides = [1, 1]} : vector<256x128xbf16> to vector<64x128xbf16>
    %cst_8 = arith.constant 5.000000e-01 : bf16
    %12 = vector.broadcast %cst_8 : bf16 to vector<64x128xbf16>
    %13 = arith.mulf %12, %11 : vector<64x128xbf16>
    %cst_9 = arith.constant 5.000000e-01 : bf16
    %14 = vector.broadcast %cst_9 : bf16 to vector<64x128xbf16>
    %15 = arith.addf %14, %13 : vector<64x128xbf16>
    %16 = vector.extract_strided_slice %10 {offsets = [128, 0], sizes = [64, 128], strides = [1, 1]} : vector<256x128xbf16> to vector<64x128xbf16>
    %17 = vector.extract_strided_slice %10 {offsets = [192, 0], sizes = [64, 128], strides = [1, 1]} : vector<256x128xbf16> to vector<64x128xbf16>
    %cst_10 = arith.constant 5.000000e-01 : bf16
    %18 = vector.broadcast %cst_10 : bf16 to vector<64x128xbf16>
    %19 = arith.mulf %18, %17 : vector<64x128xbf16>
    %cst_11 = arith.constant 5.000000e-01 : bf16
    %20 = vector.broadcast %cst_11 : bf16 to vector<64x128xbf16>
    %21 = arith.addf %20, %19 : vector<64x128xbf16>
    %22 = arith.mulf %15, %16 : vector<64x128xbf16>
    %23 = arith.extf %22 : vector<64x128xbf16> to vector<64x128xf32>
    %24 = arith.extf %21 : vector<64x128xbf16> to vector<64x128xf32>
    %25 = math.tanh %23 : vector<64x128xf32>
    %26 = arith.mulf %24, %25 : vector<64x128xf32>
    %27 = arith.truncf %26 : vector<64x128xf32> to vector<64x128xbf16>
    %c0_12 = arith.constant 0 : index
    %c12 = arith.constant 12 : index
    %c0_13 = arith.constant 0 : index
    %28 = vector.load %arg2[%c0_12, %c12, %c0_13] : memref<1x72x128xf32, #tpu.memory_space<vmem>>, vector<1x12x128xf32>
    %29 = vector.shape_cast %28 : vector<1x12x128xf32> to vector<12x128xf32>
    %30 = arith.truncf %29 : vector<12x128xf32> to vector<12x128xbf16>
    %cst_14 = arith.constant dense<0.000000e+00> : vector<256x128xf32>
    %31 = tpu.matmul %0, %30, %cst_14 {dimension_numbers = #tpu.dot_dimension_numbers<[1], [0], [0], [1], [0, 0, 1, 1], [], []>} : vector<256x12xbf16>, vector<12x128xbf16>, vector<256x128xf32> -> vector<256x128xf32>
    %cst_15 = arith.constant dense<0.000000e+00> : vector<256x128xf32>
    %32 = tpu.matmul %1, %27, %cst_15 {dimension_numbers = #tpu.dot_dimension_numbers<[1], [0], [0], [1], [0, 0, 1, 1], [], []>} : vector<256x64xbf16>, vector<64x128xbf16>, vector<256x128xf32> -> vector<256x128xf32>
    %33 = arith.addf %31, %32 : vector<256x128xf32>
    %34 = vector.broadcast %2 : vector<256x1xf32> to vector<256x128xf32>
    %35 = arith.addf %33, %34 : vector<256x128xf32>
    %36 = arith.truncf %35 : vector<256x128xf32> to vector<256x128xbf16>
    %37 = math.tanh %36 : vector<256x128xbf16>
    %38 = vector.extract_strided_slice %37 {offsets = [0, 0], sizes = [64, 128], strides = [1, 1]} : vector<256x128xbf16> to vector<64x128xbf16>
    %cst_16 = arith.constant 5.000000e-01 : bf16
    %39 = vector.broadcast %cst_16 : bf16 to vector<64x128xbf16>
    %40 = arith.mulf %39, %38 : vector<64x128xbf16>
    %cst_17 = arith.constant 5.000000e-01 : bf16
    %41 = vector.broadcast %cst_17 : bf16 to vector<64x128xbf16>
    %42 = arith.addf %41, %40 : vector<64x128xbf16>
    %43 = vector.extract_strided_slice %37 {offsets = [64, 0], sizes = [64, 128], strides = [1, 1]} : vector<256x128xbf16> to vector<64x128xbf16>
    %cst_18 = arith.constant 5.000000e-01 : bf16
    %44 = vector.broadcast %cst_18 : bf16 to vector<64x128xbf16>
    %45 = arith.mulf %44, %43 : vector<64x128xbf16>
    %cst_19 = arith.constant 5.000000e-01 : bf16
    %46 = vector.broadcast %cst_19 : bf16 to vector<64x128xbf16>
    %47 = arith.addf %46, %45 : vector<64x128xbf16>
    %48 = vector.extract_strided_slice %37 {offsets = [128, 0], sizes = [64, 128], strides = [1, 1]} : vector<256x128xbf16> to vector<64x128xbf16>
    %49 = vector.extract_strided_slice %37 {offsets = [192, 0], sizes = [64, 128], strides = [1, 1]} : vector<256x128xbf16> to vector<64x128xbf16>
    %cst_20 = arith.constant 5.000000e-01 : bf16
    %50 = vector.broadcast %cst_20 : bf16 to vector<64x128xbf16>
    %51 = arith.mulf %50, %49 : vector<64x128xbf16>
    %cst_21 = arith.constant 5.000000e-01 : bf16
    %52 = vector.broadcast %cst_21 : bf16 to vector<64x128xbf16>
    %53 = arith.addf %52, %51 : vector<64x128xbf16>
    %54 = arith.mulf %42, %48 : vector<64x128xbf16>
    %55 = arith.extf %54 : vector<64x128xbf16> to vector<64x128xf32>
    %56 = arith.extf %47 : vector<64x128xbf16> to vector<64x128xf32>
    %57 = arith.mulf %56, %23 : vector<64x128xf32>
    %58 = arith.addf %57, %55 : vector<64x128xf32>
    %59 = arith.extf %53 : vector<64x128xbf16> to vector<64x128xf32>
    %60 = math.tanh %58 : vector<64x128xf32>
    %61 = arith.mulf %59, %60 : vector<64x128xf32>
    %62 = arith.truncf %61 : vector<64x128xf32> to vector<64x128xbf16>
    %c0_22 = arith.constant 0 : index
    %c24 = arith.constant 24 : index
    %c0_23 = arith.constant 0 : index
    %63 = vector.load %arg2[%c0_22, %c24, %c0_23] : memref<1x72x128xf32, #tpu.memory_space<vmem>>, vector<1x12x128xf32>
    %64 = vector.shape_cast %63 : vector<1x12x128xf32> to vector<12x128xf32>
    %65 = arith.truncf %64 : vector<12x128xf32> to vector<12x128xbf16>
    %cst_24 = arith.constant dense<0.000000e+00> : vector<256x128xf32>
    %66 = tpu.matmul %0, %65, %cst_24 {dimension_numbers = #tpu.dot_dimension_numbers<[1], [0], [0], [1], [0, 0, 1, 1], [], []>} : vector<256x12xbf16>, vector<12x128xbf16>, vector<256x128xf32> -> vector<256x128xf32>
    %cst_25 = arith.constant dense<0.000000e+00> : vector<256x128xf32>
    %67 = tpu.matmul %1, %62, %cst_25 {dimension_numbers = #tpu.dot_dimension_numbers<[1], [0], [0], [1], [0, 0, 1, 1], [], []>} : vector<256x64xbf16>, vector<64x128xbf16>, vector<256x128xf32> -> vector<256x128xf32>
    %68 = arith.addf %66, %67 : vector<256x128xf32>
    %69 = vector.broadcast %2 : vector<256x1xf32> to vector<256x128xf32>
    %70 = arith.addf %68, %69 : vector<256x128xf32>
    %71 = arith.truncf %70 : vector<256x128xf32> to vector<256x128xbf16>
    %72 = math.tanh %71 : vector<256x128xbf16>
    %73 = vector.extract_strided_slice %72 {offsets = [0, 0], sizes = [64, 128], strides = [1, 1]} : vector<256x128xbf16> to vector<64x128xbf16>
    %cst_26 = arith.constant 5.000000e-01 : bf16
    %74 = vector.broadcast %cst_26 : bf16 to vector<64x128xbf16>
    %75 = arith.mulf %74, %73 : vector<64x128xbf16>
    %cst_27 = arith.constant 5.000000e-01 : bf16
    %76 = vector.broadcast %cst_27 : bf16 to vector<64x128xbf16>
    %77 = arith.addf %76, %75 : vector<64x128xbf16>
    %78 = vector.extract_strided_slice %72 {offsets = [64, 0], sizes = [64, 128], strides = [1, 1]} : vector<256x128xbf16> to vector<64x128xbf16>
    %cst_28 = arith.constant 5.000000e-01 : bf16
    %79 = vector.broadcast %cst_28 : bf16 to vector<64x128xbf16>
    %80 = arith.mulf %79, %78 : vector<64x128xbf16>
    %cst_29 = arith.constant 5.000000e-01 : bf16
    %81 = vector.broadcast %cst_29 : bf16 to vector<64x128xbf16>
    %82 = arith.addf %81, %80 : vector<64x128xbf16>
    %83 = vector.extract_strided_slice %72 {offsets = [128, 0], sizes = [64, 128], strides = [1, 1]} : vector<256x128xbf16> to vector<64x128xbf16>
    %84 = vector.extract_strided_slice %72 {offsets = [192, 0], sizes = [64, 128], strides = [1, 1]} : vector<256x128xbf16> to vector<64x128xbf16>
    %cst_30 = arith.constant 5.000000e-01 : bf16
    %85 = vector.broadcast %cst_30 : bf16 to vector<64x128xbf16>
    %86 = arith.mulf %85, %84 : vector<64x128xbf16>
    %cst_31 = arith.constant 5.000000e-01 : bf16
    %87 = vector.broadcast %cst_31 : bf16 to vector<64x128xbf16>
    %88 = arith.addf %87, %86 : vector<64x128xbf16>
    %89 = arith.mulf %77, %83 : vector<64x128xbf16>
    %90 = arith.extf %89 : vector<64x128xbf16> to vector<64x128xf32>
    %91 = arith.extf %82 : vector<64x128xbf16> to vector<64x128xf32>
    %92 = arith.mulf %91, %58 : vector<64x128xf32>
    %93 = arith.addf %92, %90 : vector<64x128xf32>
    %94 = arith.extf %88 : vector<64x128xbf16> to vector<64x128xf32>
    %95 = math.tanh %93 : vector<64x128xf32>
    %96 = arith.mulf %94, %95 : vector<64x128xf32>
    %97 = arith.truncf %96 : vector<64x128xf32> to vector<64x128xbf16>
    %c0_32 = arith.constant 0 : index
    %c36 = arith.constant 36 : index
    %c0_33 = arith.constant 0 : index
    %98 = vector.load %arg2[%c0_32, %c36, %c0_33] : memref<1x72x128xf32, #tpu.memory_space<vmem>>, vector<1x12x128xf32>
    %99 = vector.shape_cast %98 : vector<1x12x128xf32> to vector<12x128xf32>
    %100 = arith.truncf %99 : vector<12x128xf32> to vector<12x128xbf16>
    %cst_34 = arith.constant dense<0.000000e+00> : vector<256x128xf32>
    %101 = tpu.matmul %0, %100, %cst_34 {dimension_numbers = #tpu.dot_dimension_numbers<[1], [0], [0], [1], [0, 0, 1, 1], [], []>} : vector<256x12xbf16>, vector<12x128xbf16>, vector<256x128xf32> -> vector<256x128xf32>
    %cst_35 = arith.constant dense<0.000000e+00> : vector<256x128xf32>
    %102 = tpu.matmul %1, %97, %cst_35 {dimension_numbers = #tpu.dot_dimension_numbers<[1], [0], [0], [1], [0, 0, 1, 1], [], []>} : vector<256x64xbf16>, vector<64x128xbf16>, vector<256x128xf32> -> vector<256x128xf32>
    %103 = arith.addf %101, %102 : vector<256x128xf32>
    %104 = vector.broadcast %2 : vector<256x1xf32> to vector<256x128xf32>
    %105 = arith.addf %103, %104 : vector<256x128xf32>
    %106 = arith.truncf %105 : vector<256x128xf32> to vector<256x128xbf16>
    %107 = math.tanh %106 : vector<256x128xbf16>
    %108 = vector.extract_strided_slice %107 {offsets = [0, 0], sizes = [64, 128], strides = [1, 1]} : vector<256x128xbf16> to vector<64x128xbf16>
    %cst_36 = arith.constant 5.000000e-01 : bf16
    %109 = vector.broadcast %cst_36 : bf16 to vector<64x128xbf16>
    %110 = arith.mulf %109, %108 : vector<64x128xbf16>
    %cst_37 = arith.constant 5.000000e-01 : bf16
    %111 = vector.broadcast %cst_37 : bf16 to vector<64x128xbf16>
    %112 = arith.addf %111, %110 : vector<64x128xbf16>
    %113 = vector.extract_strided_slice %107 {offsets = [64, 0], sizes = [64, 128], strides = [1, 1]} : vector<256x128xbf16> to vector<64x128xbf16>
    %cst_38 = arith.constant 5.000000e-01 : bf16
    %114 = vector.broadcast %cst_38 : bf16 to vector<64x128xbf16>
    %115 = arith.mulf %114, %113 : vector<64x128xbf16>
    %cst_39 = arith.constant 5.000000e-01 : bf16
    %116 = vector.broadcast %cst_39 : bf16 to vector<64x128xbf16>
    %117 = arith.addf %116, %115 : vector<64x128xbf16>
    %118 = vector.extract_strided_slice %107 {offsets = [128, 0], sizes = [64, 128], strides = [1, 1]} : vector<256x128xbf16> to vector<64x128xbf16>
    %119 = vector.extract_strided_slice %107 {offsets = [192, 0], sizes = [64, 128], strides = [1, 1]} : vector<256x128xbf16> to vector<64x128xbf16>
    %cst_40 = arith.constant 5.000000e-01 : bf16
    %120 = vector.broadcast %cst_40 : bf16 to vector<64x128xbf16>
    %121 = arith.mulf %120, %119 : vector<64x128xbf16>
    %cst_41 = arith.constant 5.000000e-01 : bf16
    %122 = vector.broadcast %cst_41 : bf16 to vector<64x128xbf16>
    %123 = arith.addf %122, %121 : vector<64x128xbf16>
    %124 = arith.mulf %112, %118 : vector<64x128xbf16>
    %125 = arith.extf %124 : vector<64x128xbf16> to vector<64x128xf32>
    %126 = arith.extf %117 : vector<64x128xbf16> to vector<64x128xf32>
    %127 = arith.mulf %126, %93 : vector<64x128xf32>
    %128 = arith.addf %127, %125 : vector<64x128xf32>
    %129 = arith.extf %123 : vector<64x128xbf16> to vector<64x128xf32>
    %130 = math.tanh %128 : vector<64x128xf32>
    %131 = arith.mulf %129, %130 : vector<64x128xf32>
    %132 = arith.truncf %131 : vector<64x128xf32> to vector<64x128xbf16>
    %c0_42 = arith.constant 0 : index
    %c48 = arith.constant 48 : index
    %c0_43 = arith.constant 0 : index
    %133 = vector.load %arg2[%c0_42, %c48, %c0_43] : memref<1x72x128xf32, #tpu.memory_space<vmem>>, vector<1x12x128xf32>
    %134 = vector.shape_cast %133 : vector<1x12x128xf32> to vector<12x128xf32>
    %135 = arith.truncf %134 : vector<12x128xf32> to vector<12x128xbf16>
    %cst_44 = arith.constant dense<0.000000e+00> : vector<256x128xf32>
    %136 = tpu.matmul %0, %135, %cst_44 {dimension_numbers = #tpu.dot_dimension_numbers<[1], [0], [0], [1], [0, 0, 1, 1], [], []>} : vector<256x12xbf16>, vector<12x128xbf16>, vector<256x128xf32> -> vector<256x128xf32>
    %cst_45 = arith.constant dense<0.000000e+00> : vector<256x128xf32>
    %137 = tpu.matmul %1, %132, %cst_45 {dimension_numbers = #tpu.dot_dimension_numbers<[1], [0], [0], [1], [0, 0, 1, 1], [], []>} : vector<256x64xbf16>, vector<64x128xbf16>, vector<256x128xf32> -> vector<256x128xf32>
    %138 = arith.addf %136, %137 : vector<256x128xf32>
    %139 = vector.broadcast %2 : vector<256x1xf32> to vector<256x128xf32>
    %140 = arith.addf %138, %139 : vector<256x128xf32>
    %141 = arith.truncf %140 : vector<256x128xf32> to vector<256x128xbf16>
    %142 = math.tanh %141 : vector<256x128xbf16>
    %143 = vector.extract_strided_slice %142 {offsets = [0, 0], sizes = [64, 128], strides = [1, 1]} : vector<256x128xbf16> to vector<64x128xbf16>
    %cst_46 = arith.constant 5.000000e-01 : bf16
    %144 = vector.broadcast %cst_46 : bf16 to vector<64x128xbf16>
    %145 = arith.mulf %144, %143 : vector<64x128xbf16>
    %cst_47 = arith.constant 5.000000e-01 : bf16
    %146 = vector.broadcast %cst_47 : bf16 to vector<64x128xbf16>
    %147 = arith.addf %146, %145 : vector<64x128xbf16>
    %148 = vector.extract_strided_slice %142 {offsets = [64, 0], sizes = [64, 128], strides = [1, 1]} : vector<256x128xbf16> to vector<64x128xbf16>
    %cst_48 = arith.constant 5.000000e-01 : bf16
    %149 = vector.broadcast %cst_48 : bf16 to vector<64x128xbf16>
    %150 = arith.mulf %149, %148 : vector<64x128xbf16>
    %cst_49 = arith.constant 5.000000e-01 : bf16
    %151 = vector.broadcast %cst_49 : bf16 to vector<64x128xbf16>
    %152 = arith.addf %151, %150 : vector<64x128xbf16>
    %153 = vector.extract_strided_slice %142 {offsets = [128, 0], sizes = [64, 128], strides = [1, 1]} : vector<256x128xbf16> to vector<64x128xbf16>
    %154 = vector.extract_strided_slice %142 {offsets = [192, 0], sizes = [64, 128], strides = [1, 1]} : vector<256x128xbf16> to vector<64x128xbf16>
    %cst_50 = arith.constant 5.000000e-01 : bf16
    %155 = vector.broadcast %cst_50 : bf16 to vector<64x128xbf16>
    %156 = arith.mulf %155, %154 : vector<64x128xbf16>
    %cst_51 = arith.constant 5.000000e-01 : bf16
    %157 = vector.broadcast %cst_51 : bf16 to vector<64x128xbf16>
    %158 = arith.addf %157, %156 : vector<64x128xbf16>
    %159 = arith.mulf %147, %153 : vector<64x128xbf16>
    %160 = arith.extf %159 : vector<64x128xbf16> to vector<64x128xf32>
    %161 = arith.extf %152 : vector<64x128xbf16> to vector<64x128xf32>
    %162 = arith.mulf %161, %128 : vector<64x128xf32>
    %163 = arith.addf %162, %160 : vector<64x128xf32>
    %164 = arith.extf %158 : vector<64x128xbf16> to vector<64x128xf32>
    %165 = math.tanh %163 : vector<64x128xf32>
    %166 = arith.mulf %164, %165 : vector<64x128xf32>
    %167 = arith.truncf %166 : vector<64x128xf32> to vector<64x128xbf16>
    %c0_52 = arith.constant 0 : index
    %c60 = arith.constant 60 : index
    %c0_53 = arith.constant 0 : index
    %168 = vector.load %arg2[%c0_52, %c60, %c0_53] : memref<1x72x128xf32, #tpu.memory_space<vmem>>, vector<1x12x128xf32>
    %169 = vector.shape_cast %168 : vector<1x12x128xf32> to vector<12x128xf32>
    %170 = arith.truncf %169 : vector<12x128xf32> to vector<12x128xbf16>
    %cst_54 = arith.constant dense<0.000000e+00> : vector<256x128xf32>
    %171 = tpu.matmul %0, %170, %cst_54 {dimension_numbers = #tpu.dot_dimension_numbers<[1], [0], [0], [1], [0, 0, 1, 1], [], []>} : vector<256x12xbf16>, vector<12x128xbf16>, vector<256x128xf32> -> vector<256x128xf32>
    %cst_55 = arith.constant dense<0.000000e+00> : vector<256x128xf32>
    %172 = tpu.matmul %1, %167, %cst_55 {dimension_numbers = #tpu.dot_dimension_numbers<[1], [0], [0], [1], [0, 0, 1, 1], [], []>} : vector<256x64xbf16>, vector<64x128xbf16>, vector<256x128xf32> -> vector<256x128xf32>
    %173 = arith.addf %171, %172 : vector<256x128xf32>
    %174 = vector.broadcast %2 : vector<256x1xf32> to vector<256x128xf32>
    %175 = arith.addf %173, %174 : vector<256x128xf32>
    %176 = arith.truncf %175 : vector<256x128xf32> to vector<256x128xbf16>
    %177 = math.tanh %176 : vector<256x128xbf16>
    %178 = vector.extract_strided_slice %177 {offsets = [0, 0], sizes = [64, 128], strides = [1, 1]} : vector<256x128xbf16> to vector<64x128xbf16>
    %cst_56 = arith.constant 5.000000e-01 : bf16
    %179 = vector.broadcast %cst_56 : bf16 to vector<64x128xbf16>
    %180 = arith.mulf %179, %178 : vector<64x128xbf16>
    %cst_57 = arith.constant 5.000000e-01 : bf16
    %181 = vector.broadcast %cst_57 : bf16 to vector<64x128xbf16>
    %182 = arith.addf %181, %180 : vector<64x128xbf16>
    %183 = vector.extract_strided_slice %177 {offsets = [64, 0], sizes = [64, 128], strides = [1, 1]} : vector<256x128xbf16> to vector<64x128xbf16>
    %cst_58 = arith.constant 5.000000e-01 : bf16
    %184 = vector.broadcast %cst_58 : bf16 to vector<64x128xbf16>
    %185 = arith.mulf %184, %183 : vector<64x128xbf16>
    %cst_59 = arith.constant 5.000000e-01 : bf16
    %186 = vector.broadcast %cst_59 : bf16 to vector<64x128xbf16>
    %187 = arith.addf %186, %185 : vector<64x128xbf16>
    %188 = vector.extract_strided_slice %177 {offsets = [128, 0], sizes = [64, 128], strides = [1, 1]} : vector<256x128xbf16> to vector<64x128xbf16>
    %189 = vector.extract_strided_slice %177 {offsets = [192, 0], sizes = [64, 128], strides = [1, 1]} : vector<256x128xbf16> to vector<64x128xbf16>
    %cst_60 = arith.constant 5.000000e-01 : bf16
    %190 = vector.broadcast %cst_60 : bf16 to vector<64x128xbf16>
    %191 = arith.mulf %190, %189 : vector<64x128xbf16>
    %cst_61 = arith.constant 5.000000e-01 : bf16
    %192 = vector.broadcast %cst_61 : bf16 to vector<64x128xbf16>
    %193 = arith.addf %192, %191 : vector<64x128xbf16>
    %194 = arith.mulf %182, %188 : vector<64x128xbf16>
    %195 = arith.extf %194 : vector<64x128xbf16> to vector<64x128xf32>
    %196 = arith.extf %187 : vector<64x128xbf16> to vector<64x128xf32>
    %197 = arith.mulf %196, %163 : vector<64x128xf32>
    %198 = arith.addf %197, %195 : vector<64x128xf32>
    %199 = arith.extf %193 : vector<64x128xbf16> to vector<64x128xf32>
    %200 = math.tanh %198 : vector<64x128xf32>
    %201 = arith.mulf %199, %200 : vector<64x128xf32>
    %202 = arith.truncf %201 : vector<64x128xf32> to vector<64x128xbf16>
    %c0_62 = arith.constant 0 : index
    %c0_63 = arith.constant 0 : index
    %203 = vector.load %arg6[%c0_62, %c0_63] : memref<4x64xbf16, #tpu.memory_space<vmem>>, vector<4x64xbf16>
    %cst_64 = arith.constant dense<0.000000e+00> : vector<4x128xf32>
    %204 = tpu.matmul %203, %202, %cst_64 {dimension_numbers = #tpu.dot_dimension_numbers<[1], [0], [0], [1], [0, 0, 1, 1], [], []>} : vector<4x64xbf16>, vector<64x128xbf16>, vector<4x128xf32> -> vector<4x128xf32>
    %c0_65 = arith.constant 0 : index
    %c0_66 = arith.constant 0 : index
    %205 = vector.load %arg7[%c0_65, %c0_66] : memref<4x1xf32, #tpu.memory_space<vmem>>, vector<4x1xf32>
    %206 = vector.broadcast %205 : vector<4x1xf32> to vector<4x128xf32>
    %207 = arith.addf %204, %206 : vector<4x128xf32>
    %c0_67 = arith.constant 0 : index
    %c0_68 = arith.constant 0 : index
    %c0_69 = arith.constant 0 : index
    %208 = vector.load %arg8[%c0_67, %c0_68, %c0_69] : memref<1x4x128xf32, #tpu.memory_space<vmem>>, vector<1x4x128xf32>
    %209 = vector.shape_cast %208 : vector<1x4x128xf32> to vector<4x128xf32>
    %210 = vector.shape_cast %207 : vector<4x128xf32> to vector<1x4x128xf32>
    tpu.vector_store %arg8[%c0_67, %c0_68, %c0_69], %210 {strides = array<i32>} : memref<1x4x128xf32, #tpu.memory_space<vmem>>, vector<1x4x128xf32>,
    return
  }
  func.func @transform_0(%arg0: i32, %arg1: i32) -> (i32, i32, i32) {
    %c0_i32 = arith.constant 0 : i32
    %c0_i32_0 = arith.constant 0 : i32
    return %arg0, %c0_i32, %arg1 : i32, i32, i32
  }
  func.func @transform_1(%arg0: i32, %arg1: i32) -> (i32, i32) {
    %c0_i32 = arith.constant 0 : i32
    %c0_i32_0 = arith.constant 0 : i32
    %c0_i32_1 = arith.constant 0 : i32
    return %c0_i32, %c0_i32_0 : i32, i32
  }
  func.func @transform_2(%arg0: i32, %arg1: i32) -> (i32, i32) {
    %c0_i32 = arith.constant 0 : i32
    %c0_i32_0 = arith.constant 0 : i32
    %c0_i32_1 = arith.constant 0 : i32
    return %c0_i32, %c0_i32_0 : i32, i32
  }
  func.func @transform_3(%arg0: i32, %arg1: i32) -> (i32, i32) {
    %c0_i32 = arith.constant 0 : i32
    %c0_i32_0 = arith.constant 0 : i32
    %c0_i32_1 = arith.constant 0 : i32
    return %c0_i32, %c0_i32_0 : i32, i32
  }
  func.func @transform_4(%arg0: i32, %arg1: i32) -> (i32, i32) {
    %c0_i32 = arith.constant 0 : i32
    %c0_i32_0 = arith.constant 0 : i32
    %c0_i32_1 = arith.constant 0 : i32
    return %c0_i32, %c0_i32_0 : i32, i32
  }
  func.func @transform_5(%arg0: i32, %arg1: i32) -> (i32, i32) {
    %c0_i32 = arith.constant 0 : i32
    %c0_i32_0 = arith.constant 0 : i32
    %c0_i32_1 = arith.constant 0 : i32
    return %c0_i32, %c0_i32_0 : i32, i32
  }
  func.func @transform_6(%arg0: i32, %arg1: i32) -> (i32, i32, i32) {
    %c0_i32 = arith.constant 0 : i32
    %c0_i32_0 = arith.constant 0 : i32
    return %arg0, %c0_i32, %arg1 : i32, i32, i32
  }
}

</mosaic_0001>

<llo_original>
// kernel: lstm_pixel_forward.1
$region0: #{lstm_pixel_forward.1}
  #allocation0 [shape = 'u32[]', space=smem, size = 0x4, offset = 0x4, fixed_abs, tag = 'smem constant byte address 0x4 - core index']
  #allocation1 [shape = 'u32[72,128]{1,0:T(1,128)}', space=vmem, size = 0x9000, scoped, tag = 'internal scratch']
  %s0 = inlined_call_operand.vmem [shape: f32[2,72,256], index: 0, kind: input, shape index: {}]
  %s1 = inlined_call_operand.vmem [shape: bf16[256,12], index: 1, kind: input, shape index: {}]
  %s2 = inlined_call_operand.vmem [shape: bf16[256,64], index: 2, kind: input, shape index: {}]
  %s3 = inlined_call_operand.vmem [shape: f32[256,1], index: 3, kind: input, shape index: {}]
  %s4 = inlined_call_operand.vmem [shape: bf16[4,64], index: 4, kind: input, shape index: {}]
  %s5 = inlined_call_operand.vmem [shape: f32[4,1], index: 5, kind: input, shape index: {}]
  %s6 = inlined_call_operand.vmem [shape: f32[2,4,256], index: 6, kind: output, shape index: {}]
  %s7 = sld [smem:[#allocation0]]
  $region95: #{lstm_pixel_forward.1} parent=0
    _
  %s9 = ssub.s32 1, %s7
  %s10 = scalar_select 0, %s9, %s7
  $region1: #{lstm_pixel_forward.1} parent=0
    #allocation2 [shape = 'u8[73728]{0}', space=vmem, size = 0x12000, scoped, tag = 'input window, operand 0']
    loop: start=0, step=1, limit=6
    $region2: #{lstm_pixel_forward.1} parent=1 // loop_pre_header
      _
    $region3: #{lstm_pixel_forward.1} parent=1 // loop_header
      %s12 = sphi 0, %s16
      %p13 = scmp.ge.s32.totalorder %s12, 6
      %s19 = sphi 0, %s31
      %s20 = sphi 0, %s27
      %s21 = sphi 0, %s19
      %s22 = sphi 0, %s20
      %s23 = sphi 0, %s21
      %s24 = sphi 0, %s22
      %s36 = sphi 0, %s38
      %s39 = sphi 0, %s36
      %s40 = sphi 0, %s39
      %s56 = sphi 0, %s40
      %s60 = sphi 0, %s60
      %s62 = sphi 0, %s60
      %s63 = sphi 0, %s62
      %s77 = sphi 0, %s63
      %s81 = sphi 0, %s81
      %s83 = sphi 0, %s81
      %s84 = sphi 0, %s83
      %s98 = sphi 0, %s84
      %s102 = sphi 0, %s102
      %s104 = sphi 0, %s102
      %s105 = sphi 0, %s104
      %s119 = sphi 0, %s105
      %s123 = sphi 0, %s123
      %s125 = sphi 0, %s123
      %s126 = sphi 0, %s125
      %s140 = sphi 0, %s126
      %s144 = sphi 0, %s144
      %s146 = sphi 0, %s144
      %s147 = sphi 0, %s146
      %s161 = sphi 0, %s147
      %s169 = sphi 0, %s171
      %s172 = sphi 0, %s169
      %s173 = sphi 0, %s172
      %s189 = sphi 0, %s173
    $region4: #{lstm_pixel_forward.1} parent=1 // loop_header_branch
      %15 = sbr.rel (%p13) target = $region8
    $region5: #{lstm_pixel_forward.1} parent=1 // loop_body
      %s17 = ssub.s32 %s12, 1
      %s18 = ssub.s32 %s12, 2
      %s25 = sadd.s32 1, %s20
      %p26 = scmp.ge.s32.totalorder %s25, 2
      %s27 = scalar_select %p26, 0, %s25
      %s28 = sadd.s32 1, %s19
      %s29 = scalar_select %p26, %s28, %s19
      %p30 = scmp.ge.s32.totalorder %s29, 2
      %s31 = scalar_select %p30, 0, %s29
      %s32 = ssub.s32 %s19, %s31
      %s33 = ssub.s32 %s20, %s27
      %s34 = sor.u32 %s32, %s33
      %p35 = scmp.eq.s32.totalorder %s34, 0
      %s37 = sadd.s32 %s36, 1
      %s38 = scalar_select %p35, %s36, %s37
      %p41 = pneg %p35
      %p42 = scmp.eq.s32.totalorder %s12, 3
      %p43 = por %p41, %p42
      %p44 = scmp.ne.s32.totalorder %s36, %s39
      %p45 = scmp.eq.s32.totalorder %s12, 0
      %p46 = por %p44, %p45
      %p47 = scmp.ne.s32.totalorder %s36, %s39
      %p48 = scmp.eq.s32.totalorder %s17, 3
      %p49 = por %p47, %p48
      %p50 = scmp.ne.s32.totalorder %s39, %s40
      %p51 = scmp.eq.s32.totalorder %s17, 0
      %p52 = por %p50, %p51
      %p53 = scmp.ne.s32.totalorder %s39, %s40
      %p54 = scmp.eq.s32.totalorder %s18, 3
      %p55 = por %p53, %p54
      %p57 = scmp.ne.s32.totalorder %s40, %s56
      %p58 = scmp.eq.s32.totalorder %s18, 0
      %p59 = por %p57, %p58
      %s61 = sadd.s32 %s60, 1
      %p64 = scmp.eq.s32.totalorder %s12, 3
      %p65 = scmp.ne.s32.totalorder %s60, %s62
      %p66 = scmp.eq.s32.totalorder %s12, 0
      %p67 = por %p65, %p66
      %p68 = scmp.ne.s32.totalorder %s60, %s62
      %p69 = scmp.eq.s32.totalorder %s17, 3
      %p70 = por %p68, %p69
      %p71 = scmp.ne.s32.totalorder %s62, %s63
      %p72 = scmp.eq.s32.totalorder %s17, 0
      %p73 = por %p71, %p72
      %p74 = scmp.ne.s32.totalorder %s62, %s63
      %p75 = scmp.eq.s32.totalorder %s18, 3
      %p76 = por %p74, %p75
      %p78 = scmp.ne.s32.totalorder %s63, %s77
      %p79 = scmp.eq.s32.totalorder %s18, 0
      %p80 = por %p78, %p79
      %s82 = sadd.s32 %s81, 1
      %p85 = scmp.eq.s32.totalorder %s12, 3
      %p86 = scmp.ne.s32.totalorder %s81, %s83
      %p87 = scmp.eq.s32.totalorder %s12, 0
      %p88 = por %p86, %p87
      %p89 = scmp.ne.s32.totalorder %s81, %s83
      %p90 = scmp.eq.s32.totalorder %s17, 3
      %p91 = por %p89, %p90
      %p92 = scmp.ne.s32.totalorder %s83, %s84
      %p93 = scmp.eq.s32.totalorder %s17, 0
      %p94 = por %p92, %p93
      %p95 = scmp.ne.s32.totalorder %s83, %s84
      %p96 = scmp.eq.s32.totalorder %s18, 3
      %p97 = por %p95, %p96
      %p99 = scmp.ne.s32.totalorder %s84, %s98
      %p100 = scmp.eq.s32.totalorder %s18, 0
      %p101 = por %p99, %p100
      %s103 = sadd.s32 %s102, 1
      %p106 = scmp.eq.s32.totalorder %s12, 3
      %p107 = scmp.ne.s32.totalorder %s102, %s104
      %p108 = scmp.eq.s32.totalorder %s12, 0
      %p109 = por %p107, %p108
      %p110 = scmp.ne.s32.totalorder %s102, %s104
      %p111 = scmp.eq.s32.totalorder %s17, 3
      %p112 = por %p110, %p111
      %p113 = scmp.ne.s32.totalorder %s104, %s105
      %p114 = scmp.eq.s32.totalorder %s17, 0
      %p115 = por %p113, %p114
      %p116 = scmp.ne.s32.totalorder %s104, %s105
      %p117 = scmp.eq.s32.totalorder %s18, 3
      %p118 = por %p116, %p117
      %p120 = scmp.ne.s32.totalorder %s105, %s119
      %p121 = scmp.eq.s32.totalorder %s18, 0
      %p122 = por %p120, %p121
      %s124 = sadd.s32 %s123, 1
      %p127 = scmp.eq.s32.totalorder %s12, 3
      %p128 = scmp.ne.s32.totalorder %s123, %s125
      %p129 = scmp.eq.s32.totalorder %s12, 0
      %p130 = por %p128, %p129
      %p131 = scmp.ne.s32.totalorder %s123, %s125
      %p132 = scmp.eq.s32.totalorder %s17, 3
      %p133 = por %p131, %p132
      %p134 = scmp.ne.s32.totalorder %s125, %s126
      %p135 = scmp.eq.s32.totalorder %s17, 0
      %p136 = por %p134, %p135
      %p137 = scmp.ne.s32.totalorder %s125, %s126
      %p138 = scmp.eq.s32.totalorder %s18, 3
      %p139 = por %p137, %p138
      %p141 = scmp.ne.s32.totalorder %s126, %s140
      %p142 = scmp.eq.s32.totalorder %s18, 0
      %p143 = por %p141, %p142
      %s145 = sadd.s32 %s144, 1
      %p148 = scmp.eq.s32.totalorder %s12, 3
      %p149 = scmp.ne.s32.totalorder %s144, %s146
      %p150 = scmp.eq.s32.totalorder %s12, 0
      %p151 = por %p149, %p150
      %p152 = scmp.ne.s32.totalorder %s144, %s146
      %p153 = scmp.eq.s32.totalorder %s17, 3
      %p154 = por %p152, %p153
      %p155 = scmp.ne.s32.totalorder %s146, %s147
      %p156 = scmp.eq.s32.totalorder %s17, 0
      %p157 = por %p155, %p156
      %p158 = scmp.ne.s32.totalorder %s146, %s147
      %p159 = scmp.eq.s32.totalorder %s18, 3
      %p160 = por %p158, %p159
      %p162 = scmp.ne.s32.totalorder %s147, %s161
      %p163 = scmp.eq.s32.totalorder %s18, 0
      %p164 = por %p162, %p163
      %s165 = ssub.s32 %s19, %s31
      %s166 = ssub.s32 %s20, %s27
      %s167 = sor.u32 %s165, %s166
      %p168 = scmp.eq.s32.totalorder %s167, 0
      %s170 = sadd.s32 %s169, 1
      %s171 = scalar_select %p168, %s169, %s170
      %p174 = pneg %p168
      %p175 = scmp.eq.s32.totalorder %s12, 3
      %p176 = por %p174, %p175
      %p177 = scmp.ne.s32.totalorder %s169, %s172
      %p178 = scmp.eq.s32.totalorder %s12, 0
      %p179 = por %p177, %p178
      %p180 = scmp.ne.s32.totalorder %s169, %s172
      %p181 = scmp.eq.s32.totalorder %s17, 3
      %p182 = por %p180, %p181
      %p183 = scmp.ne.s32.totalorder %s172, %s173
      %p184 = scmp.eq.s32.totalorder %s17, 0
      %p185 = por %p183, %p184
      %p186 = scmp.ne.s32.totalorder %s172, %s173
      %p187 = scmp.eq.s32.totalorder %s18, 3
      %p188 = por %p186, %p187
      %p190 = scmp.ne.s32.totalorder %s173, %s189
      %p191 = scmp.eq.s32.totalorder %s18, 0
      %p192 = por %p190, %p191
      %p193 = scmp.le.s32.totalorder 1, %s12
      %p194 = scmp.lt.s32.totalorder %s12, 5
      %p195 = pnand %p193, %p194
      %p196 = pneg %p195
      // Predicated region
      $region9: #{lstm_pixel_forward.1} parent=5 // pred_check
        _
      $region10: #{lstm_pixel_forward.1} parent=5 // pred_check_branch
        %198 = sbr.rel (%p195) target = $region12
      $region11: #{lstm_pixel_forward.1} parent=5 // pred_region
        %s199 = ssub.s32 %s12, 1
        // Predicated region
        $region13: #{lstm_pixel_forward.1} parent=11 // pred_check
          %p200 = pneg %p73
        $region14: #{lstm_pixel_forward.1} parent=11 // pred_check_branch
          %202 = sbr.rel (%p200) target = $region16
        $region15: #{lstm_pixel_forward.1} parent=11 // pred_region
          _
        $region16: #{lstm_pixel_forward.1} parent=11 // pred_fallthru
          _
        // Predicated region
        $region17: #{lstm_pixel_forward.1} parent=11 // pred_check
          %p203 = pneg %p94
        $region18: #{lstm_pixel_forward.1} parent=11 // pred_check_branch
          %205 = sbr.rel (%p203) target = $region20
        $region19: #{lstm_pixel_forward.1} parent=11 // pred_region
          _
        $region20: #{lstm_pixel_forward.1} parent=11 // pred_fallthru
          _
        // Predicated region
        $region21: #{lstm_pixel_forward.1} parent=11 // pred_check
          %p206 = pneg %p115
        $region22: #{lstm_pixel_forward.1} parent=11 // pred_check_branch
          %208 = sbr.rel (%p206) target = $region24
        $region23: #{lstm_pixel_forward.1} parent=11 // pred_region
          _
        $region24: #{lstm_pixel_forward.1} parent=11 // pred_fallthru
          _
        // Predicated region
        $region25: #{lstm_pixel_forward.1} parent=11 // pred_check
          %p209 = pneg %p136
        $region26: #{lstm_pixel_forward.1} parent=11 // pred_check_branch
          %211 = sbr.rel (%p209) target = $region28
        $region27: #{lstm_pixel_forward.1} parent=11 // pred_region
          _
        $region28: #{lstm_pixel_forward.1} parent=11 // pred_fallthru
          _
        // Predicated region
        $region29: #{lstm_pixel_forward.1} parent=11 // pred_check
          %p212 = pneg %p157
        $region30: #{lstm_pixel_forward.1} parent=11 // pred_check_branch
          %214 = sbr.rel (%p212) target = $region32
        $region31: #{lstm_pixel_forward.1} parent=11 // pred_region
          _
        $region32: #{lstm_pixel_forward.1} parent=11 // pred_fallthru
          _
      $region12: #{lstm_pixel_forward.1} parent=5 // pred_fallthru
        _
      %p215 = scmp.lt.s32.totalorder %s12, 4
      // Predicated region
      $region33: #{lstm_pixel_forward.1} parent=5 // pred_check
        %p216 = pneg %p215
      $region34: #{lstm_pixel_forward.1} parent=5 // pred_check_branch
        %218 = sbr.rel (%p216) target = $region36
      $region35: #{lstm_pixel_forward.1} parent=5 // pred_region
        // Predicated region
        $region37: #{lstm_pixel_forward.1} parent=35 // pred_check
          %p219 = pneg %p46
        $region38: #{lstm_pixel_forward.1} parent=35 // pred_check_branch
          %221 = sbr.rel (%p219) target = $region40
        $region39: #{lstm_pixel_forward.1} parent=35 // pred_region
          %s222 = sand.u32 %s36, 1
          %s223 = sand.u32 %s36, 1
          %s224 = smul.addr %s223, 72
          %s225 = scalar_lea.vmem [#allocation2], %s224
          %s226 = smul.addr %s19, 18
          %s227 = sadd.s32 %s20, %s226
          %s228 = smul.addr %s227, 8
          %s229 = scalar_lea.vmem %s0, %s228
          // Predicated region
          $region41: #{lstm_pixel_forward.1} parent=39 // pred_check
            _
          $region42: #{lstm_pixel_forward.1} parent=39 // pred_check_branch
            %231 = sbr.rel (0) target = $region44
          $region43: #{lstm_pixel_forward.1} parent=39 // pred_region
            // Predicated region
            $region45: #{lstm_pixel_forward.1} parent=43 // pred_check
              _
            $region46: #{lstm_pixel_forward.1} parent=43 // pred_check_branch
              %233 = sbr.rel (0) target = $region48
            $region47: #{lstm_pixel_forward.1} parent=43 // pred_region
              // Predicated region
              $region60: #{lstm_pixel_forward.1} parent=47 // pred_check
                _
              $region61: #{lstm_pixel_forward.1} parent=47 // pred_check_branch
                %265 = sbr.rel (0) target = $region63
              $region62: #{lstm_pixel_forward.1} parent=47 // pred_region
                loop: start=0, step=1, limit=1
                $region64: #{lstm_pixel_forward.1} parent=62 // loop_pre_header
                  _
                $region65: #{lstm_pixel_forward.1} parent=62 // loop_header
                  %s267 = sphi 0, %s271
                  %p268 = scmp.ge.s32.totalorder %s267, 1
                  %s272 = sphi %s229, %s229
                  %s273 = sphi %s225, %s225
                $region66: #{lstm_pixel_forward.1} parent=62 // loop_header_branch
                  %270 = sbr.rel (%p268) target = $region70
                $region67: #{lstm_pixel_forward.1} parent=62 // loop_body
                  %v274 = vld [vmem:[%s272] sm:$0xff]
                  %275 = vst [vmem:[%s273] sm:$0xff] %v274
                  %v276 = vld [vmem:[%s272 + $0x10] sm:$0xff]
                  %277 = vst [vmem:[%s273 + $0x8] sm:$0xff] %v276
                  %v278 = vld [vmem:[%s272 + $0x20] sm:$0xff]
                  %279 = vst [vmem:[%s273 + $0x10] sm:$0xff] %v278
                  %v280 = vld [vmem:[%s272 + $0x30] sm:$0xff]
                  %281 = vst [vmem:[%s273 + $0x18] sm:$0xff] %v280
                  %v282 = vld [vmem:[%s272 + $0x40] sm:$0xff]
                  %283 = vst [vmem:[%s273 + $0x20] sm:$0xff] %v282
                  %v284 = vld [vmem:[%s272 + $0x50] sm:$0xff]
                  %285 = vst [vmem:[%s273 + $0x28] sm:$0xff] %v284
                  %v286 = vld [vmem:[%s272 + $0x60] sm:$0xff]
                  %287 = vst [vmem:[%s273 + $0x30] sm:$0xff] %v286
                  %v288 = vld [vmem:[%s272 + $0x70] sm:$0xff]
                  %289 = vst [vmem:[%s273 + $0x38] sm:$0xff] %v288
                  %v290 = vld [vmem:[%s272 + $0x80] sm:$0xff]
                  %291 = vst [vmem:[%s273 + $0x40] sm:$0xff] %v290
                $region68: #{lstm_pixel_forward.1} parent=62 // loop_footer
                  %s271 = sadd.s32 1, %s267
                $region69: #{lstm_pixel_forward.1} parent=62 // loop_footer_branch
                  %266 = sbr.rel target = $region65
                $region70: #{lstm_pixel_forward.1} parent=62 // loop_exit
                  _
              $region63: #{lstm_pixel_forward.1} parent=47 // pred_fallthru
                _
              // Predicated region
              $region71: #{lstm_pixel_forward.1} parent=47 // pred_check
                _
              $region72: #{lstm_pixel_forward.1} parent=47 // pred_check_branch
                %293 = sbr.rel target = $region74
              $region73: #{lstm_pixel_forward.1} parent=47 // pred_region
                _
              $region74: #{lstm_pixel_forward.1} parent=47 // pred_fallthru
                _
            $region48: #{lstm_pixel_forward.1} parent=43 // pred_fallthru
              _
            // Predicated region
            $region49: #{lstm_pixel_forward.1} parent=43 // pred_check
              _
            $region50: #{lstm_pixel_forward.1} parent=43 // pred_check_branch
              %235 = sbr.rel target = $region52
            $region51: #{lstm_pixel_forward.1} parent=43 // pred_region
              %s237 = ssub.s32 256, 1
              loop: start=0, step=1, limit=1
              $region53: #{lstm_pixel_forward.1} parent=51 // loop_pre_header
                _
              $region54: #{lstm_pixel_forward.1} parent=51 // loop_header
                %s239 = sphi 0, %s243
                %p240 = scmp.ge.s32.totalorder %s239, 1
                %s244 = sphi %s229, %s229
                %s245 = sphi %s225, %s225
              $region55: #{lstm_pixel_forward.1} parent=51 // loop_header_branch
                %242 = sbr.rel (%p240) target = $region59
              $region56: #{lstm_pixel_forward.1} parent=51 // loop_body
                %v246 = vld [vmem:[%s244] sm:%s237]
                %247 = vst [vmem:[%s245] sm:%s237] %v246
                %v248 = vld [vmem:[%s244 + $0x10] sm:%s237]
                %249 = vst [vmem:[%s245 + $0x8] sm:%s237] %v248
                %v250 = vld [vmem:[%s244 + $0x20] sm:%s237]
                %251 = vst [vmem:[%s245 + $0x10] sm:%s237] %v250
                %v252 = vld [vmem:[%s244 + $0x30] sm:%s237]
                %253 = vst [vmem:[%s245 + $0x18] sm:%s237] %v252
                %v254 = vld [vmem:[%s244 + $0x40] sm:%s237]
                %255 = vst [vmem:[%s245 + $0x20] sm:%s237] %v254
                %v256 = vld [vmem:[%s244 + $0x50] sm:%s237]
                %257 = vst [vmem:[%s245 + $0x28] sm:%s237] %v256
                %v258 = vld [vmem:[%s244 + $0x60] sm:%s237]
                %259 = vst [vmem:[%s245 + $0x30] sm:%s237] %v258
                %v260 = vld [vmem:[%s244 + $0x70] sm:%s237]
                %261 = vst [vmem:[%s245 + $0x38] sm:%s237] %v260
                %v262 = vld [vmem:[%s244 + $0x80] sm:%s237]
                %263 = vst [vmem:[%s245 + $0x40] sm:%s237] %v262
              $region57: #{lstm_pixel_forward.1} parent=51 // loop_footer
                %s243 = sadd.s32 1, %s239
              $region58: #{lstm_pixel_forward.1} parent=51 // loop_footer_branch
                %238 = sbr.rel target = $region54
              $region59: #{lstm_pixel_forward.1} parent=51 // loop_exit
                _
            $region52: #{lstm_pixel_forward.1} parent=43 // pred_fallthru
              _
          $region44: #{lstm_pixel_forward.1} parent=39 // pred_fallthru
            _
          %294 = vnop
        $region40: #{lstm_pixel_forward.1} parent=35 // pred_fallthru
          _
      $region36: #{lstm_pixel_forward.1} parent=5 // pred_fallthru
        _
      %p295 = scmp.le.s32.totalorder 1, %s12
      %p296 = scmp.lt.s32.totalorder %s12, 5
      %p297 = pnand %p295, %p296
      %p298 = pneg %p297
      // Predicated region
      $region75: #{lstm_pixel_forward.1} parent=5 // pred_check
        _
      $region76: #{lstm_pixel_forward.1} parent=5 // pred_check_branch
        %300 = sbr.rel (%p297) target = $region78
      $region77: #{lstm_pixel_forward.1} parent=5 // pred_region
        %s301 = ssub.s32 %s12, 1
        %s302 = sand.u32 %s39, 1
        %s303 = sand.u32 %s39, 1
        %s304 = smul.addr %s303, 72
        %s305 = scalar_lea.vmem [#allocation2], %s304
        // Predicated region
        $region79: #{lstm_pixel_forward.1} parent=77 // pred_check
          %p306 = pneg %p52
        $region80: #{lstm_pixel_forward.1} parent=77 // pred_check_branch
          %308 = sbr.rel (%p306) target = $region82
        $region81: #{lstm_pixel_forward.1} parent=77 // pred_region
          _
        $region82: #{lstm_pixel_forward.1} parent=77 // pred_fallthru
          _
        %s309 = sand.u32 %s39, 1
        %s310 = sand.u32 %s39, 1
        %s311 = smul.addr %s310, 72
        %s312 = scalar_lea.vmem [#allocation2], %s311
        %p313 = pneg %p52
        %p314 = pneg %p49
        %p315 = pneg %p73
        %p316 = pneg %p70
        %p317 = pneg %p94
        %p318 = pneg %p91
        %p319 = pneg %p115
        %p320 = pneg %p112
        %p321 = pneg %p136
        %p322 = pneg %p133
        %p323 = pneg %p157
        %p324 = pneg %p154
        %p325 = pneg %p185
        %p326 = pneg %p182
        %p327 = scmp.lt.s32.totalorder %s21, 1
        %s328 = scalar_select %p327, %s21, 1
        %p329 = scmp.lt.s32.totalorder %s22, 1
        %s330 = scalar_select %p329, %s22, 1
        %s331 = smul.addr %s328, 2
        %s332 = sadd.s32 %s330, %s331
        %s333 = smul.addr %s332, 4
        %s334 = scalar_lea.vmem %s6, %s333
        %p335 = scmp.lt.s32.totalorder %s21, 1
        %s336 = scalar_select %p335, %s21, 1
        %p337 = scmp.lt.s32.totalorder %s22, 1
        %s338 = scalar_select %p337, %s22, 1
        %s339 = smul.addr %s336, 2
        %s340 = sadd.s32 %s338, %s339
        %s341 = smul.addr %s340, 4
        %s342 = scalar_lea.vmem %s6, %s341
        %v344 = vld [vmem:[%s1] sm:$0xf]
        %v345 = vld [vmem:[%s1 + $0x4] sm:$0xf]
        %v346 = vld [vmem:[%s1 + $0x8] sm:$0xf]
        %v347 = vld [vmem:[%s1 + $0xc] sm:$0xf]
        %v348 = vld [vmem:[%s1 + $0x10] sm:$0xf]
        %v349 = vld [vmem:[%s1 + $0x14] sm:$0xf]
        %v350 = vld [vmem:[%s1 + $0x18] sm:$0xf]
        %v351 = vld [vmem:[%s1 + $0x1c] sm:$0xf]
        %v352 = vld [vmem:[%s1 + $0x20] sm:$0xf]
        %v353 = vld [vmem:[%s1 + $0x24] sm:$0xf]
        %v354 = vld [vmem:[%s1 + $0x28] sm:$0xf]
        %v355 = vld [vmem:[%s1 + $0x2c] sm:$0xf]
        %v356 = vld [vmem:[%s1 + $0x30] sm:$0xf]
        %v357 = vld [vmem:[%s1 + $0x34] sm:$0xf]
        %v358 = vld [vmem:[%s1 + $0x38] sm:$0xf]
        %v359 = vld [vmem:[%s1 + $0x3c] sm:$0xf]
        %v360 = vld [vmem:[%s1 + $0x40] sm:$0xf]
        %v361 = vld [vmem:[%s1 + $0x44] sm:$0xf]
        %v362 = vld [vmem:[%s1 + $0x48] sm:$0xf]
        %v363 = vld [vmem:[%s1 + $0x4c] sm:$0xf]
        %v364 = vld [vmem:[%s1 + $0x50] sm:$0xf]
        %v365 = vld [vmem:[%s1 + $0x54] sm:$0xf]
        %v366 = vld [vmem:[%s1 + $0x58] sm:$0xf]
        %v367 = vld [vmem:[%s1 + $0x5c] sm:$0xf]
        %v368 = vld [vmem:[%s1 + $0x60] sm:$0xf]
        %v369 = vld [vmem:[%s1 + $0x64] sm:$0xf]
        %v370 = vld [vmem:[%s1 + $0x68] sm:$0xf]
        %v371 = vld [vmem:[%s1 + $0x6c] sm:$0xf]
        %v372 = vld [vmem:[%s1 + $0x70] sm:$0xf]
        %v373 = vld [vmem:[%s1 + $0x74] sm:$0xf]
        %v374 = vld [vmem:[%s1 + $0x78] sm:$0xf]
        %v375 = vld [vmem:[%s1 + $0x7c] sm:$0xf]
        %v376 = vld [vmem:[%s2] sm:$0xf]
        %v377 = vld [vmem:[%s2 + $0x4] sm:$0xf]
        %v378 = vld [vmem:[%s2 + $0x8] sm:$0xf]
        %v379 = vld [vmem:[%s2 + $0xc] sm:$0xf]
        %v380 = vld [vmem:[%s2 + $0x10] sm:$0xf]
        %v381 = vld [vmem:[%s2 + $0x14] sm:$0xf]
        %v382 = vld [vmem:[%s2 + $0x18] sm:$0xf]
        %v383 = vld [vmem:[%s2 + $0x1c] sm:$0xf]
        %v384 = vld [vmem:[%s2 + $0x20] sm:$0xf]
        %v385 = vld [vmem:[%s2 + $0x24] sm:$0xf]
        %v386 = vld [vmem:[%s2 + $0x28] sm:$0xf]
        %v387 = vld [vmem:[%s2 + $0x2c] sm:$0xf]
        %v388 = vld [vmem:[%s2 + $0x30] sm:$0xf]
        %v389 = vld [vmem:[%s2 + $0x34] sm:$0xf]
        %v390 = vld [vmem:[%s2 + $0x38] sm:$0xf]
        %v391 = vld [vmem:[%s2 + $0x3c] sm:$0xf]
        %v392 = vld [vmem:[%s2 + $0x40] sm:$0xf]
        %v393 = vld [vmem:[%s2 + $0x44] sm:$0xf]
        %v394 = vld [vmem:[%s2 + $0x48] sm:$0xf]
        %v395 = vld [vmem:[%s2 + $0x4c] sm:$0xf]
        %v396 = vld [vmem:[%s2 + $0x50] sm:$0xf]
        %v397 = vld [vmem:[%s2 + $0x54] sm:$0xf]
        %v398 = vld [vmem:[%s2 + $0x58] sm:$0xf]
        %v399 = vld [vmem:[%s2 + $0x5c] sm:$0xf]
        %v400 = vld [vmem:[%s2 + $0x60] sm:$0xf]
        %v401 = vld [vmem:[%s2 + $0x64] sm:$0xf]
        %v402 = vld [vmem:[%s2 + $0x68] sm:$0xf]
        %v403 = vld [vmem:[%s2 + $0x6c] sm:$0xf]
        %v404 = vld [vmem:[%s2 + $0x70] sm:$0xf]
        %v405 = vld [vmem:[%s2 + $0x74] sm:$0xf]
        %v406 = vld [vmem:[%s2 + $0x78] sm:$0xf]
        %v407 = vld [vmem:[%s2 + $0x7c] sm:$0xf]
        %v408 = vld [vmem:[%s3] sm:$0xff]
        %v409 = vld [vmem:[%s3 + $0x8] sm:$0xff]
        %v410 = vld [vmem:[%s3 + $0x10] sm:$0xff]
        %v411 = vld [vmem:[%s3 + $0x18] sm:$0xff]
        %v412 = vld [vmem:[%s3 + $0x20] sm:$0xff]
        %v413 = vld [vmem:[%s3 + $0x28] sm:$0xff]
        %v414 = vld [vmem:[%s3 + $0x30] sm:$0xff]
        %v415 = vld [vmem:[%s3 + $0x38] sm:$0xff]
        %v416 = vld [vmem:[%s3 + $0x40] sm:$0xff]
        %v417 = vld [vmem:[%s3 + $0x48] sm:$0xff]
        %v418 = vld [vmem:[%s3 + $0x50] sm:$0xff]
        %v419 = vld [vmem:[%s3 + $0x58] sm:$0xff]
        %v420 = vld [vmem:[%s3 + $0x60] sm:$0xff]
        %v421 = vld [vmem:[%s3 + $0x68] sm:$0xff]
        %v422 = vld [vmem:[%s3 + $0x70] sm:$0xff]
        %v423 = vld [vmem:[%s3 + $0x78] sm:$0xff]
        %v424 = vld [vmem:[%s3 + $0x80] sm:$0xff]
        %v425 = vld [vmem:[%s3 + $0x88] sm:$0xff]
        %v426 = vld [vmem:[%s3 + $0x90] sm:$0xff]
        %v427 = vld [vmem:[%s3 + $0x98] sm:$0xff]
        %v428 = vld [vmem:[%s3 + $0xa0] sm:$0xff]
        %v429 = vld [vmem:[%s3 + $0xa8] sm:$0xff]
        %v430 = vld [vmem:[%s3 + $0xb0] sm:$0xff]
        %v431 = vld [vmem:[%s3 + $0xb8] sm:$0xff]
        %v432 = vld [vmem:[%s3 + $0xc0] sm:$0xff]
        %v433 = vld [vmem:[%s3 + $0xc8] sm:$0xff]
        %v434 = vld [vmem:[%s3 + $0xd0] sm:$0xff]
        %v435 = vld [vmem:[%s3 + $0xd8] sm:$0xff]
        %v436 = vld [vmem:[%s3 + $0xe0] sm:$0xff]
        %v437 = vld [vmem:[%s3 + $0xe8] sm:$0xff]
        %v438 = vld [vmem:[%s3 + $0xf0] sm:$0xff]
        %v439 = vld [vmem:[%s3 + $0xf8] sm:$0xff]
        %v440 = vld [vmem:[%s305] sm:$0xff]
        %v441 = vld [vmem:[%s305 + $0x8] sm:$0xf]
        %v442 = vpack.c.bf16 %v441, %v440
        %444 = vset.pattern.permute.xlu0 0
        %445 = vperm.xlu0 %444, %v408
        %v446 = vpop.permute.xlu0 %445
        %449 = vset.pattern.permute.xlu0 0
        %450 = vperm.xlu0 %449, %v409
        %v451 = vpop.permute.xlu0 %450
        %454 = vset.pattern.permute.xlu0 0
        %455 = vperm.xlu0 %454, %v410
        %v456 = vpop.permute.xlu0 %455
        %459 = vset.pattern.permute.xlu0 0
        %460 = vperm.xlu0 %459, %v411
        %v461 = vpop.permute.xlu0 %460
        %464 = vset.pattern.permute.xlu0 0
        %465 = vperm.xlu0 %464, %v412
        %v466 = vpop.permute.xlu0 %465
        %469 = vset.pattern.permute.xlu0 0
        %470 = vperm.xlu0 %469, %v413
        %v471 = vpop.permute.xlu0 %470
        %474 = vset.pattern.permute.xlu0 0
        %475 = vperm.xlu0 %474, %v414
        %v476 = vpop.permute.xlu0 %475
        %479 = vset.pattern.permute.xlu0 0
        %480 = vperm.xlu0 %479, %v415
        %v481 = vpop.permute.xlu0 %480
        %484 = vset.pattern.permute.xlu0 0
        %485 = vperm.xlu0 %484, %v416
        %v486 = vpop.permute.xlu0 %485
        %489 = vset.pattern.permute.xlu0 0
        %490 = vperm.xlu0 %489, %v417
        %v491 = vpop.permute.xlu0 %490
        %494 = vset.pattern.permute.xlu0 0
        %495 = vperm.xlu0 %494, %v418
        %v496 = vpop.permute.xlu0 %495
        %499 = vset.pattern.permute.xlu0 0
        %500 = vperm.xlu0 %499, %v419
        %v501 = vpop.permute.xlu0 %500
        %504 = vset.pattern.permute.xlu0 0
        %505 = vperm.xlu0 %504, %v420
        %v506 = vpop.permute.xlu0 %505
        %509 = vset.pattern.permute.xlu0 0
        %510 = vperm.xlu0 %509, %v421
        %v511 = vpop.permute.xlu0 %510
        %514 = vset.pattern.permute.xlu0 0
        %515 = vperm.xlu0 %514, %v422
        %v516 = vpop.permute.xlu0 %515
        %519 = vset.pattern.permute.xlu0 0
        %520 = vperm.xlu0 %519, %v423
        %v521 = vpop.permute.xlu0 %520
        %524 = vset.pattern.permute.xlu0 0
        %525 = vperm.xlu0 %524, %v424
        %v526 = vpop.permute.xlu0 %525
        %529 = vset.pattern.permute.xlu0 0
        %530 = vperm.xlu0 %529, %v425
        %v531 = vpop.permute.xlu0 %530
        %534 = vset.pattern.permute.xlu0 0
        %535 = vperm.xlu0 %534, %v426
        %v536 = vpop.permute.xlu0 %535
        %539 = vset.pattern.permute.xlu0 0
        %540 = vperm.xlu0 %539, %v427
        %v541 = vpop.permute.xlu0 %540
        %544 = vset.pattern.permute.xlu0 0
        %545 = vperm.xlu0 %544, %v428
        %v546 = vpop.permute.xlu0 %545
        %549 = vset.pattern.permute.xlu0 0
        %550 = vperm.xlu0 %549, %v429
        %v551 = vpop.permute.xlu0 %550
        %554 = vset.pattern.permute.xlu0 0
        %555 = vperm.xlu0 %554, %v430
        %v556 = vpop.permute.xlu0 %555
        %559 = vset.pattern.permute.xlu0 0
        %560 = vperm.xlu0 %559, %v431
        %v561 = vpop.permute.xlu0 %560
        %564 = vset.pattern.permute.xlu0 0
        %565 = vperm.xlu0 %564, %v432
        %v566 = vpop.permute.xlu0 %565
        %569 = vset.pattern.permute.xlu0 0
        %570 = vperm.xlu0 %569, %v433
        %v571 = vpop.permute.xlu0 %570
        %574 = vset.pattern.permute.xlu0 0
        %575 = vperm.xlu0 %574, %v434
        %v576 = vpop.permute.xlu0 %575
        %579 = vset.pattern.permute.xlu0 0
        %580 = vperm.xlu0 %579, %v435
        %v581 = vpop.permute.xlu0 %580
        %584 = vset.pattern.permute.xlu0 0
        %585 = vperm.xlu0 %584, %v436
        %v586 = vpop.permute.xlu0 %585
        %589 = vset.pattern.permute.xlu0 0
        %590 = vperm.xlu0 %589, %v437
        %v591 = vpop.permute.xlu0 %590
        %594 = vset.pattern.permute.xlu0 0
        %595 = vperm.xlu0 %594, %v438
        %v596 = vpop.permute.xlu0 %595
        %599 = vset.pattern.permute.xlu0 0
        %600 = vperm.xlu0 %599, %v439
        %v601 = vpop.permute.xlu0 %600
        %v635 = vunpack.c.l.b16 %v344
        %v636 = vunpack.c.l.b16 %v345
        %v637 = vunpack.c.l.b16 %v346
        %v638 = vunpack.c.l.b16 %v347
        %v639 = vunpack.c.l.b16 %v348
        %v640 = vunpack.c.l.b16 %v349
        %v641 = vunpack.c.l.b16 %v350
        %v642 = vunpack.c.l.b16 %v351
        %v643 = vunpack.c.l.b16 %v352
        %v644 = vunpack.c.l.b16 %v353
        %v645 = vunpack.c.l.b16 %v354
        %v646 = vunpack.c.l.b16 %v355
        %v647 = vunpack.c.l.b16 %v356
        %v648 = vunpack.c.l.b16 %v357
        %v649 = vunpack.c.l.b16 %v358
        %v650 = vunpack.c.l.b16 %v359
        %v651 = vunpack.c.l.b16 %v360
        %v652 = vunpack.c.l.b16 %v361
        %v653 = vunpack.c.l.b16 %v362
        %v654 = vunpack.c.l.b16 %v363
        %v655 = vunpack.c.l.b16 %v364
        %v656 = vunpack.c.l.b16 %v365
        %v657 = vunpack.c.l.b16 %v366
        %v658 = vunpack.c.l.b16 %v367
        %v659 = vunpack.c.l.b16 %v368
        %v660 = vunpack.c.l.b16 %v369
        %v661 = vunpack.c.l.b16 %v370
        %v662 = vunpack.c.l.b16 %v371
        %v663 = vunpack.c.l.b16 %v372
        %v664 = vunpack.c.l.b16 %v373
        %v665 = vunpack.c.l.b16 %v374
        %v666 = vunpack.c.l.b16 %v375
        %v667 = vpack.c.b16 %v636, %v635
        %v668 = vpack.c.b16 %v638, %v637
        %v669 = vpack.c.b16 %v640, %v639
        %v670 = vpack.c.b16 %v642, %v641
        %v671 = vpack.c.b16 %v644, %v643
        %v672 = vpack.c.b16 %v646, %v645
        %v673 = vpack.c.b16 %v648, %v647
        %v674 = vpack.c.b16 %v650, %v649
        %v675 = vpack.c.b16 %v652, %v651
        %v676 = vpack.c.b16 %v654, %v653
        %v677 = vpack.c.b16 %v656, %v655
        %v678 = vpack.c.b16 %v658, %v657
        %v679 = vpack.c.b16 %v660, %v659
        %v680 = vpack.c.b16 %v662, %v661
        %v681 = vpack.c.b16 %v664, %v663
        %v682 = vpack.c.b16 %v666, %v665
        %vm683 = vcmask 97280
        %v685 = vsel %vm683, %v667, 0
        %v688 = vsel %vm683, %v668, 0
        %v691 = vsel %vm683, %v669, 0
        %v694 = vsel %vm683, %v670, 0
        %v697 = vsel %vm683, %v671, 0
        %v700 = vsel %vm683, %v672, 0
        %v703 = vsel %vm683, %v673, 0
        %v706 = vsel %vm683, %v674, 0
        %v709 = vsel %vm683, %v675, 0
        %v712 = vsel %vm683, %v676, 0
        %v715 = vsel %vm683, %v677, 0
        %v718 = vsel %vm683, %v678, 0
        %v721 = vsel %vm683, %v679, 0
        %v724 = vsel %vm683, %v680, 0
        %v727 = vsel %vm683, %v681, 0
        %v730 = vsel %vm683, %v682, 0
        %vm732 = vcmask 1045504
        %v734 = vsel %vm732, %v442, 0
        %736 = vmatpush.bf16.msra.mxu0 0
        %737 = vmatpush.bf16.msra.mxu0 0
        %738 = vmatpush.bf16.msra.mxu0 0
        %739 = vmatpush.bf16.msra.mxu0 0
        %740 = vmatpush.bf16.msra.mxu0 0
        %741 = vmatpush.bf16.msra.mxu0 0
        %742 = vmatpush.bf16.msra.mxu0 0
        %743 = vmatpush.bf16.msra.mxu0 %v734
        %744 = vmatmul.bf16.gmra.mxu0 %v685
        %v745 = vpop.f32.mrf.mxu0
        %v746 = vadd.f32 %v446, %v745
        %v747 = vpop.f32.mrf.mxu0
        %v748 = vadd.f32 %v451, %v747
        %749 = vmatmul.bf16.gmra.mxu0 %v688
        %v750 = vpop.f32.mrf.mxu0
        %v751 = vadd.f32 %v456, %v750
        %v752 = vpop.f32.mrf.mxu0
        %v753 = vadd.f32 %v461, %v752
        %754 = vmatmul.bf16.gmra.mxu0 %v691
        %v755 = vpop.f32.mrf.mxu0
        %v756 = vadd.f32 %v466, %v755
        %v757 = vpop.f32.mrf.mxu0
        %v758 = vadd.f32 %v471, %v757
        %759 = vmatmul.bf16.gmra.mxu0 %v694
        %v760 = vpop.f32.mrf.mxu0
        %v761 = vadd.f32 %v476, %v760
        %v762 = vpop.f32.mrf.mxu0
        %v763 = vadd.f32 %v481, %v762
        %764 = vmatmul.bf16.gmra.mxu0 %v697
        %v765 = vpop.f32.mrf.mxu0
        %v766 = vpop.f32.mrf.mxu0
        %767 = vmatmul.bf16.gmra.mxu0 %v700
        %v768 = vpop.f32.mrf.mxu0
        %v769 = vpop.f32.mrf.mxu0
        %770 = vmatmul.bf16.gmra.mxu0 %v703
        %v771 = vpop.f32.mrf.mxu0
        %v772 = vpop.f32.mrf.mxu0
        %773 = vmatmul.bf16.gmra.mxu0 %v706
        %v774 = vpop.f32.mrf.mxu0
        %v775 = vpop.f32.mrf.mxu0
        %776 = vmatmul.bf16.gmra.mxu0 %v709
        %v777 = vpop.f32.mrf.mxu0
        %v778 = vadd.f32 %v526, %v777
        %v779 = vpop.f32.mrf.mxu0
        %v780 = vadd.f32 %v531, %v779
        %781 = vmatmul.bf16.gmra.mxu0 %v712
        %v782 = vpop.f32.mrf.mxu0
        %v783 = vadd.f32 %v536, %v782
        %v784 = vpop.f32.mrf.mxu0
        %v785 = vadd.f32 %v541, %v784
        %786 = vmatmul.bf16.gmra.mxu0 %v715
        %v787 = vpop.f32.mrf.mxu0
        %v788 = vadd.f32 %v546, %v787
        %v789 = vpop.f32.mrf.mxu0
        %v790 = vadd.f32 %v551, %v789
        %791 = vmatmul.bf16.gmra.mxu0 %v718
        %v792 = vpop.f32.mrf.mxu0
        %v793 = vadd.f32 %v556, %v792
        %v794 = vpop.f32.mrf.mxu0
        %v795 = vadd.f32 %v561, %v794
        %796 = vmatmul.bf16.gmra.mxu0 %v721
        %v797 = vpop.f32.mrf.mxu0
        %v798 = vadd.f32 %v566, %v797
        %v799 = vpop.f32.mrf.mxu0
        %v800 = vadd.f32 %v571, %v799
        %801 = vmatmul.bf16.gmra.mxu0 %v724
        %v802 = vpop.f32.mrf.mxu0
        %v803 = vadd.f32 %v576, %v802
        %v804 = vpop.f32.mrf.mxu0
        %v805 = vadd.f32 %v581, %v804
        %806 = vmatmul.bf16.gmra.mxu0 %v727
        %v807 = vpop.f32.mrf.mxu0
        %v808 = vadd.f32 %v586, %v807
        %v809 = vpop.f32.mrf.mxu0
        %v810 = vadd.f32 %v591, %v809
        %811 = vmatmul.bf16.gmra.mxu0 %v730
        %v812 = vpop.f32.mrf.mxu0
        %v813 = vadd.f32 %v596, %v812
        %v814 = vpop.f32.mrf.mxu0
        %v815 = vadd.f32 %v601, %v814
        %816 = vdwg.mxu0
        %v817 = vpack.c.bf16 %v746, %v746
        %v818 = vpack.c.bf16 %v748, %v748
        %v819 = vpack.c.bf16 %v751, %v751
        %v820 = vpack.c.bf16 %v753, %v753
        %v821 = vpack.c.bf16 %v756, %v756
        %v822 = vpack.c.bf16 %v758, %v758
        %v823 = vpack.c.bf16 %v761, %v761
        %v824 = vpack.c.bf16 %v763, %v763
        %v825 = vpack.c.bf16 %v778, %v778
        %v826 = vpack.c.bf16 %v780, %v780
        %v827 = vpack.c.bf16 %v783, %v783
        %v828 = vpack.c.bf16 %v785, %v785
        %v829 = vpack.c.bf16 %v788, %v788
        %v830 = vpack.c.bf16 %v790, %v790
        %v831 = vpack.c.bf16 %v793, %v793
        %v832 = vpack.c.bf16 %v795, %v795
        %v833 = vpack.c.bf16 %v798, %v798
        %v834 = vpack.c.bf16 %v800, %v800
        %v835 = vpack.c.bf16 %v803, %v803
        %v836 = vpack.c.bf16 %v805, %v805
        %v837 = vpack.c.bf16 %v808, %v808
        %v838 = vpack.c.bf16 %v810, %v810
        %v839 = vpack.c.bf16 %v813, %v813
        %v840 = vpack.c.bf16 %v815, %v815
        %v841 = vunpack.c.l.bf16 %v817
        %v842 = vunpack.c.l.bf16 %v818
        %v843 = vunpack.c.l.bf16 %v819
        %v844 = vunpack.c.l.bf16 %v820
        %v845 = vunpack.c.l.bf16 %v821
        %v846 = vunpack.c.l.bf16 %v822
        %v847 = vunpack.c.l.bf16 %v823
        %v848 = vunpack.c.l.bf16 %v824
        %v849 = vunpack.c.l.bf16 %v825
        %v850 = vunpack.c.l.bf16 %v826
        %v851 = vunpack.c.l.bf16 %v827
        %v852 = vunpack.c.l.bf16 %v828
        %v853 = vunpack.c.l.bf16 %v829
        %v854 = vunpack.c.l.bf16 %v830
        %v855 = vunpack.c.l.bf16 %v831
        %v856 = vunpack.c.l.bf16 %v832
        %v857 = vunpack.c.l.bf16 %v833
        %v858 = vunpack.c.l.bf16 %v834
        %v859 = vunpack.c.l.bf16 %v835
        %v860 = vunpack.c.l.bf16 %v836
        %v861 = vunpack.c.l.bf16 %v837
        %v862 = vunpack.c.l.bf16 %v838
        %v863 = vunpack.c.l.bf16 %v839
        %v864 = vunpack.c.l.bf16 %v840
        %v865 = vtanh.pop %v841
        %v866 = vtanh.pop %v842
        %v867 = vtanh.pop %v843
        %v868 = vtanh.pop %v844
        %v869 = vtanh.pop %v845
        %v870 = vtanh.pop %v846
        %v871 = vtanh.pop %v847
        %v872 = vtanh.pop %v848
        %v873 = vtanh.pop %v849
        %v874 = vtanh.pop %v850
        %v875 = vtanh.pop %v851
        %v876 = vtanh.pop %v852
        %v877 = vtanh.pop %v853
        %v878 = vtanh.pop %v854
        %v879 = vtanh.pop %v855
        %v880 = vtanh.pop %v856
        %v881 = vtanh.pop %v857
        %v882 = vtanh.pop %v858
        %v883 = vtanh.pop %v859
        %v884 = vtanh.pop %v860
        %v885 = vtanh.pop %v861
        %v886 = vtanh.pop %v862
        %v887 = vtanh.pop %v863
        %v888 = vtanh.pop %v864
        %v889 = vpack.c.bf16 %v865, %v865
        %v890 = vpack.c.bf16 %v866, %v866
        %v891 = vpack.c.bf16 %v867, %v867
        %v892 = vpack.c.bf16 %v868, %v868
        %v893 = vpack.c.bf16 %v869, %v869
        %v894 = vpack.c.bf16 %v870, %v870
        %v895 = vpack.c.bf16 %v871, %v871
        %v896 = vpack.c.bf16 %v872, %v872
        %v897 = vpack.c.bf16 %v873, %v873
        %v898 = vpack.c.bf16 %v874, %v874
        %v899 = vpack.c.bf16 %v875, %v875
        %v900 = vpack.c.bf16 %v876, %v876
        %v901 = vpack.c.bf16 %v877, %v877
        %v902 = vpack.c.bf16 %v878, %v878
        %v903 = vpack.c.bf16 %v879, %v879
        %v904 = vpack.c.bf16 %v880, %v880
        %v905 = vpack.c.bf16 %v881, %v881
        %v906 = vpack.c.bf16 %v882, %v882
        %v907 = vpack.c.bf16 %v883, %v883
        %v908 = vpack.c.bf16 %v884, %v884
        %v909 = vpack.c.bf16 %v885, %v885
        %v910 = vpack.c.bf16 %v886, %v886
        %v911 = vpack.c.bf16 %v887, %v887
        %v912 = vpack.c.bf16 %v888, %v888
        %v913 = vunpack.c.l.bf16 %v889
        %v914 = vunpack.c.l.bf16 %v890
        %v915 = vunpack.c.l.bf16 %v891
        %v916 = vunpack.c.l.bf16 %v892
        %v917 = vunpack.c.l.bf16 %v893
        %v918 = vunpack.c.l.bf16 %v894
        %v919 = vunpack.c.l.bf16 %v895
        %v920 = vunpack.c.l.bf16 %v896
        %v921 = vmul.f32 %v913, 0.5
        %v922 = vmul.f32 %v914, 0.5
        %v923 = vmul.f32 %v915, 0.5
        %v924 = vmul.f32 %v916, 0.5
        %v925 = vmul.f32 %v917, 0.5
        %v926 = vmul.f32 %v918, 0.5
        %v927 = vmul.f32 %v919, 0.5
        %v928 = vmul.f32 %v920, 0.5
        %v929 = vpack.c.bf16 %v921, %v921
        %v930 = vpack.c.bf16 %v922, %v922
        %v931 = vpack.c.bf16 %v923, %v923
        %v932 = vpack.c.bf16 %v924, %v924
        %v933 = vpack.c.bf16 %v925, %v925
        %v934 = vpack.c.bf16 %v926, %v926
        %v935 = vpack.c.bf16 %v927, %v927
        %v936 = vpack.c.bf16 %v928, %v928
        %v937 = vunpack.c.l.bf16 %v929
        %v938 = vunpack.c.l.bf16 %v930
        %v939 = vunpack.c.l.bf16 %v931
        %v940 = vunpack.c.l.bf16 %v932
        %v941 = vunpack.c.l.bf16 %v933
        %v942 = vunpack.c.l.bf16 %v934
        %v943 = vunpack.c.l.bf16 %v935
        %v944 = vunpack.c.l.bf16 %v936
        %v945 = vadd.f32 %v937, 0.5
        %v946 = vadd.f32 %v938, 0.5
        %v947 = vadd.f32 %v939, 0.5
        %v948 = vadd.f32 %v940, 0.5
        %v949 = vadd.f32 %v941, 0.5
        %v950 = vadd.f32 %v942, 0.5
        %v951 = vadd.f32 %v943, 0.5
        %v952 = vadd.f32 %v944, 0.5
        %v953 = vpack.c.bf16 %v945, %v945
        %v954 = vpack.c.bf16 %v946, %v946
        %v955 = vpack.c.bf16 %v947, %v947
        %v956 = vpack.c.bf16 %v948, %v948
        %v957 = vpack.c.bf16 %v949, %v949
        %v958 = vpack.c.bf16 %v950, %v950
        %v959 = vpack.c.bf16 %v951, %v951
        %v960 = vpack.c.bf16 %v952, %v952
        %v961 = vunpack.c.l.bf16 %v905
        %v962 = vunpack.c.l.bf16 %v906
        %v963 = vunpack.c.l.bf16 %v907
        %v964 = vunpack.c.l.bf16 %v908
        %v965 = vunpack.c.l.bf16 %v909
        %v966 = vunpack.c.l.bf16 %v910
        %v967 = vunpack.c.l.bf16 %v911
        %v968 = vunpack.c.l.bf16 %v912
        %v969 = vmul.f32 %v961, 0.5
        %v970 = vmul.f32 %v962, 0.5
        %v971 = vmul.f32 %v963, 0.5
        %v972 = vmul.f32 %v964, 0.5
        %v973 = vmul.f32 %v965, 0.5
        %v974 = vmul.f32 %v966, 0.5
        %v975 = vmul.f32 %v967, 0.5
        %v976 = vmul.f32 %v968, 0.5
        %v977 = vpack.c.bf16 %v969, %v969
        %v978 = vpack.c.bf16 %v970, %v970
        %v979 = vpack.c.bf16 %v971, %v971
        %v980 = vpack.c.bf16 %v972, %v972
        %v981 = vpack.c.bf16 %v973, %v973
        %v982 = vpack.c.bf16 %v974, %v974
        %v983 = vpack.c.bf16 %v975, %v975
        %v984 = vpack.c.bf16 %v976, %v976
        %v985 = vunpack.c.l.bf16 %v977
        %v986 = vunpack.c.l.bf16 %v978
        %v987 = vunpack.c.l.bf16 %v979
        %v988 = vunpack.c.l.bf16 %v980
        %v989 = vunpack.c.l.bf16 %v981
        %v990 = vunpack.c.l.bf16 %v982
        %v991 = vunpack.c.l.bf16 %v983
        %v992 = vunpack.c.l.bf16 %v984
        %v993 = vadd.f32 %v985, 0.5
        %v994 = vadd.f32 %v986, 0.5
        %v995 = vadd.f32 %v987, 0.5
        %v996 = vadd.f32 %v988, 0.5
        %v997 = vadd.f32 %v989, 0.5
        %v998 = vadd.f32 %v990, 0.5
        %v999 = vadd.f32 %v991, 0.5
        %v1000 = vadd.f32 %v992, 0.5
        %v1001 = vpack.c.bf16 %v993, %v993
        %v1002 = vpack.c.bf16 %v994, %v994
        %v1003 = vpack.c.bf16 %v995, %v995
        %v1004 = vpack.c.bf16 %v996, %v996
        %v1005 = vpack.c.bf16 %v997, %v997
        %v1006 = vpack.c.bf16 %v998, %v998
        %v1007 = vpack.c.bf16 %v999, %v999
        %v1008 = vpack.c.bf16 %v1000, %v1000
        %v1009 = vunpack.c.l.bf16 %v953
        %v1010 = vunpack.c.l.bf16 %v954
        %v1011 = vunpack.c.l.bf16 %v955
        %v1012 = vunpack.c.l.bf16 %v956
        %v1013 = vunpack.c.l.bf16 %v957
        %v1014 = vunpack.c.l.bf16 %v958
        %v1015 = vunpack.c.l.bf16 %v959
        %v1016 = vunpack.c.l.bf16 %v960
        %v1017 = vunpack.c.l.bf16 %v897
        %v1018 = vunpack.c.l.bf16 %v898
        %v1019 = vunpack.c.l.bf16 %v899
        %v1020 = vunpack.c.l.bf16 %v900
        %v1021 = vunpack.c.l.bf16 %v901
        %v1022 = vunpack.c.l.bf16 %v902
        %v1023 = vunpack.c.l.bf16 %v903
        %v1024 = vunpack.c.l.bf16 %v904
        %v1025 = vmul.f32 %v1009, %v1017
        %v1026 = vmul.f32 %v1010, %v1018
        %v1027 = vmul.f32 %v1011, %v1019
        %v1028 = vmul.f32 %v1012, %v1020
        %v1029 = vmul.f32 %v1013, %v1021
        %v1030 = vmul.f32 %v1014, %v1022
        %v1031 = vmul.f32 %v1015, %v1023
        %v1032 = vmul.f32 %v1016, %v1024
        %v1033 = vpack.c.bf16 %v1025, %v1025
        %v1034 = vpack.c.bf16 %v1026, %v1026
        %v1035 = vpack.c.bf16 %v1027, %v1027
        %v1036 = vpack.c.bf16 %v1028, %v1028
        %v1037 = vpack.c.bf16 %v1029, %v1029
        %v1038 = vpack.c.bf16 %v1030, %v1030
        %v1039 = vpack.c.bf16 %v1031, %v1031
        %v1040 = vpack.c.bf16 %v1032, %v1032
        %v1041 = vunpack.c.l.bf16 %v1033
        %v1042 = vunpack.c.l.bf16 %v1034
        %v1043 = vunpack.c.l.bf16 %v1035
        %v1044 = vunpack.c.l.bf16 %v1036
        %v1045 = vunpack.c.l.bf16 %v1037
        %v1046 = vunpack.c.l.bf16 %v1038
        %v1047 = vunpack.c.l.bf16 %v1039
        %v1048 = vunpack.c.l.bf16 %v1040
        %v1049 = vunpack.c.l.bf16 %v1001
        %v1050 = vunpack.c.l.bf16 %v1002
        %v1051 = vunpack.c.l.bf16 %v1003
        %v1052 = vunpack.c.l.bf16 %v1004
        %v1053 = vunpack.c.l.bf16 %v1005
        %v1054 = vunpack.c.l.bf16 %v1006
        %v1055 = vunpack.c.l.bf16 %v1007
        %v1056 = vunpack.c.l.bf16 %v1008
        %v1057 = vtanh.pop %v1041
        %v1058 = vtanh.pop %v1042
        %v1059 = vtanh.pop %v1043
        %v1060 = vtanh.pop %v1044
        %v1061 = vtanh.pop %v1045
        %v1062 = vtanh.pop %v1046
        %v1063 = vtanh.pop %v1047
        %v1064 = vtanh.pop %v1048
        %v1065 = vmul.f32 %v1049, %v1057
        %v1066 = vmul.f32 %v1050, %v1058
        %v1067 = vmul.f32 %v1051, %v1059
        %v1068 = vmul.f32 %v1052, %v1060
        %v1069 = vmul.f32 %v1053, %v1061
        %v1070 = vmul.f32 %v1054, %v1062
        %v1071 = vmul.f32 %v1055, %v1063
        %v1072 = vmul.f32 %v1056, %v1064
        %v1073 = vpack.c.bf16 %v1066, %v1065
        %v1074 = vpack.c.bf16 %v1068, %v1067
        %v1075 = vpack.c.bf16 %v1070, %v1069
        %v1076 = vpack.c.bf16 %v1072, %v1071
        %v1077 = vld [vmem:[%s305 + $0xc] sm:$0xff]
        %v1078 = vld [vmem:[%s305 + $0x14] sm:$0xf]
        %v1079 = vpack.c.bf16 %v1078, %v1077
        %v1112 = vunpack.c.l.b16 %v376
        %v1113 = vunpack.c.l.b16 %v377
        %v1114 = vunpack.c.l.b16 %v378
        %v1115 = vunpack.c.l.b16 %v379
        %v1116 = vunpack.c.l.b16 %v380
        %v1117 = vunpack.c.l.b16 %v381
        %v1118 = vunpack.c.l.b16 %v382
        %v1119 = vunpack.c.l.b16 %v383
        %v1120 = vunpack.c.l.b16 %v384
        %v1121 = vunpack.c.l.b16 %v385
        %v1122 = vunpack.c.l.b16 %v386
        %v1123 = vunpack.c.l.b16 %v387
        %v1124 = vunpack.c.l.b16 %v388
        %v1125 = vunpack.c.l.b16 %v389
        %v1126 = vunpack.c.l.b16 %v390
        %v1127 = vunpack.c.l.b16 %v391
        %v1128 = vunpack.c.l.b16 %v392
        %v1129 = vunpack.c.l.b16 %v393
        %v1130 = vunpack.c.l.b16 %v394
        %v1131 = vunpack.c.l.b16 %v395
        %v1132 = vunpack.c.l.b16 %v396
        %v1133 = vunpack.c.l.b16 %v397
        %v1134 = vunpack.c.l.b16 %v398
        %v1135 = vunpack.c.l.b16 %v399
        %v1136 = vunpack.c.l.b16 %v400
        %v1137 = vunpack.c.l.b16 %v401
        %v1138 = vunpack.c.l.b16 %v402
        %v1139 = vunpack.c.l.b16 %v403
        %v1140 = vunpack.c.l.b16 %v404
        %v1141 = vunpack.c.l.b16 %v405
        %v1142 = vunpack.c.l.b16 %v406
        %v1143 = vunpack.c.l.b16 %v407
        %v1144 = vpack.c.b16 %v1113, %v1112
        %v1145 = vpack.c.b16 %v1115, %v1114
        %v1146 = vpack.c.b16 %v1117, %v1116
        %v1147 = vpack.c.b16 %v1119, %v1118
        %v1148 = vpack.c.b16 %v1121, %v1120
        %v1149 = vpack.c.b16 %v1123, %v1122
        %v1150 = vpack.c.b16 %v1125, %v1124
        %v1151 = vpack.c.b16 %v1127, %v1126
        %v1152 = vpack.c.b16 %v1129, %v1128
        %v1153 = vpack.c.b16 %v1131, %v1130
        %v1154 = vpack.c.b16 %v1133, %v1132
        %v1155 = vpack.c.b16 %v1135, %v1134
        %v1156 = vpack.c.b16 %v1137, %v1136
        %v1157 = vpack.c.b16 %v1139, %v1138
        %v1158 = vpack.c.b16 %v1141, %v1140
        %v1159 = vpack.c.b16 %v1143, %v1142
        %vm1160 = vcmask 523264
        %v1162 = vsel %vm1160, %v1144, 0
        %v1165 = vsel %vm1160, %v1145, 0
        %v1168 = vsel %vm1160, %v1146, 0
        %v1171 = vsel %vm1160, %v1147, 0
        %v1174 = vsel %vm1160, %v1148, 0
        %v1177 = vsel %vm1160, %v1149, 0
        %v1180 = vsel %vm1160, %v1150, 0
        %v1183 = vsel %vm1160, %v1151, 0
        %v1186 = vsel %vm1160, %v1152, 0
        %v1189 = vsel %vm1160, %v1153, 0
        %v1192 = vsel %vm1160, %v1154, 0
        %v1195 = vsel %vm1160, %v1155, 0
        %v1198 = vsel %vm1160, %v1156, 0
        %v1201 = vsel %vm1160, %v1157, 0
        %v1204 = vsel %vm1160, %v1158, 0
        %v1207 = vsel %vm1160, %v1159, 0
        %1209 = vmatpush.bf16.msra.mxu0 0
        %1210 = vmatpush.bf16.msra.mxu0 0
        %1211 = vmatpush.bf16.msra.mxu0 0
        %1212 = vmatpush.bf16.msra.mxu0 0
        %1213 = vmatpush.bf16.msra.mxu0 %v1076
        %1214 = vmatpush.bf16.msra.mxu0 %v1075
        %1215 = vmatpush.bf16.msra.mxu0 %v1074
        %1216 = vmatpush.bf16.msra.mxu0 %v1073
        %1217 = vmatmul.bf16.gmra.mxu0 %v1162
        %v1218 = vpop.f32.mrf.mxu0
        %v1219 = vadd.f32 0.0, %v1218
        %v1220 = vpop.f32.mrf.mxu0
        %v1221 = vadd.f32 0.0, %v1220
        %1222 = vmatmul.bf16.gmra.mxu0 %v1165
        %v1223 = vpop.f32.mrf.mxu0
        %v1224 = vadd.f32 0.0, %v1223
        %v1225 = vpop.f32.mrf.mxu0
        %v1226 = vadd.f32 0.0, %v1225
        %1227 = vmatmul.bf16.gmra.mxu0 %v1168
        %v1228 = vpop.f32.mrf.mxu0
        %v1229 = vadd.f32 0.0, %v1228
        %v1230 = vpop.f32.mrf.mxu0
        %v1231 = vadd.f32 0.0, %v1230
        %1232 = vmatmul.bf16.gmra.mxu0 %v1171
        %v1233 = vpop.f32.mrf.mxu0
        %v1234 = vadd.f32 0.0, %v1233
        %v1235 = vpop.f32.mrf.mxu0
        %v1236 = vadd.f32 0.0, %v1235
        %1237 = vmatmul.bf16.gmra.mxu0 %v1174
        %v1238 = vpop.f32.mrf.mxu0
        %v1239 = vadd.f32 0.0, %v1238
        %v1240 = vpop.f32.mrf.mxu0
        %v1241 = vadd.f32 0.0, %v1240
        %1242 = vmatmul.bf16.gmra.mxu0 %v1177
        %v1243 = vpop.f32.mrf.mxu0
        %v1244 = vadd.f32 0.0, %v1243
        %v1245 = vpop.f32.mrf.mxu0
        %v1246 = vadd.f32 0.0, %v1245
        %1247 = vmatmul.bf16.gmra.mxu0 %v1180
        %v1248 = vpop.f32.mrf.mxu0
        %v1249 = vadd.f32 0.0, %v1248
        %v1250 = vpop.f32.mrf.mxu0
        %v1251 = vadd.f32 0.0, %v1250
        %1252 = vmatmul.bf16.gmra.mxu0 %v1183
        %v1253 = vpop.f32.mrf.mxu0
        %v1254 = vadd.f32 0.0, %v1253
        %v1255 = vpop.f32.mrf.mxu0
        %v1256 = vadd.f32 0.0, %v1255
        %1257 = vmatmul.bf16.gmra.mxu0 %v1186
        %v1258 = vpop.f32.mrf.mxu0
        %v1259 = vadd.f32 0.0, %v1258
        %v1260 = vpop.f32.mrf.mxu0
        %v1261 = vadd.f32 0.0, %v1260
        %1262 = vmatmul.bf16.gmra.mxu0 %v1189
        %v1263 = vpop.f32.mrf.mxu0
        %v1264 = vadd.f32 0.0, %v1263
        %v1265 = vpop.f32.mrf.mxu0
        %v1266 = vadd.f32 0.0, %v1265
        %1267 = vmatmul.bf16.gmra.mxu0 %v1192
        %v1268 = vpop.f32.mrf.mxu0
        %v1269 = vadd.f32 0.0, %v1268
        %v1270 = vpop.f32.mrf.mxu0
        %v1271 = vadd.f32 0.0, %v1270
        %1272 = vmatmul.bf16.gmra.mxu0 %v1195
        %v1273 = vpop.f32.mrf.mxu0
        %v1274 = vadd.f32 0.0, %v1273
        %v1275 = vpop.f32.mrf.mxu0
        %v1276 = vadd.f32 0.0, %v1275
        %1277 = vmatmul.bf16.gmra.mxu0 %v1198
        %v1278 = vpop.f32.mrf.mxu0
        %v1279 = vadd.f32 0.0, %v1278
        %v1280 = vpop.f32.mrf.mxu0
        %v1281 = vadd.f32 0.0, %v1280
        %1282 = vmatmul.bf16.gmra.mxu0 %v1201
        %v1283 = vpop.f32.mrf.mxu0
        %v1284 = vadd.f32 0.0, %v1283
        %v1285 = vpop.f32.mrf.mxu0
        %v1286 = vadd.f32 0.0, %v1285
        %1287 = vmatmul.bf16.gmra.mxu0 %v1204
        %v1288 = vpop.f32.mrf.mxu0
        %v1289 = vadd.f32 0.0, %v1288
        %v1290 = vpop.f32.mrf.mxu0
        %v1291 = vadd.f32 0.0, %v1290
        %1292 = vmatmul.bf16.gmra.mxu0 %v1207
        %v1293 = vpop.f32.mrf.mxu0
        %v1294 = vadd.f32 0.0, %v1293
        %v1295 = vpop.f32.mrf.mxu0
        %v1296 = vadd.f32 0.0, %v1295
        %1297 = vdwg.mxu0
        %v1299 = vsel %vm732, %v1079, 0
        %1301 = vmatpush.bf16.msra.mxu0 0
        %1302 = vmatpush.bf16.msra.mxu0 0
        %1303 = vmatpush.bf16.msra.mxu0 0
        %1304 = vmatpush.bf16.msra.mxu0 0
        %1305 = vmatpush.bf16.msra.mxu0 0
        %1306 = vmatpush.bf16.msra.mxu0 0
        %1307 = vmatpush.bf16.msra.mxu0 0
        %1308 = vmatpush.bf16.msra.mxu0 %v1299
        %1309 = vmatmul.bf16.gmra.mxu0 %v685
        %v1310 = vpop.f32.mrf.mxu0
        %v1311 = vadd.f32 %v1219, %v1310
        %v1312 = vpop.f32.mrf.mxu0
        %v1313 = vadd.f32 %v1221, %v1312
        %1314 = vmatmul.bf16.gmra.mxu0 %v688
        %v1315 = vpop.f32.mrf.mxu0
        %v1316 = vadd.f32 %v1224, %v1315
        %v1317 = vpop.f32.mrf.mxu0
        %v1318 = vadd.f32 %v1226, %v1317
        %1319 = vmatmul.bf16.gmra.mxu0 %v691
        %v1320 = vpop.f32.mrf.mxu0
        %v1321 = vadd.f32 %v1229, %v1320
        %v1322 = vpop.f32.mrf.mxu0
        %v1323 = vadd.f32 %v1231, %v1322
        %1324 = vmatmul.bf16.gmra.mxu0 %v694
        %v1325 = vpop.f32.mrf.mxu0
        %v1326 = vadd.f32 %v1234, %v1325
        %v1327 = vpop.f32.mrf.mxu0
        %v1328 = vadd.f32 %v1236, %v1327
        %1329 = vmatmul.bf16.gmra.mxu0 %v697
        %v1330 = vpop.f32.mrf.mxu0
        %v1331 = vadd.f32 %v1239, %v1330
        %v1332 = vpop.f32.mrf.mxu0
        %v1333 = vadd.f32 %v1241, %v1332
        %1334 = vmatmul.bf16.gmra.mxu0 %v700
        %v1335 = vpop.f32.mrf.mxu0
        %v1336 = vadd.f32 %v1244, %v1335
        %v1337 = vpop.f32.mrf.mxu0
        %v1338 = vadd.f32 %v1246, %v1337
        %1339 = vmatmul.bf16.gmra.mxu0 %v703
        %v1340 = vpop.f32.mrf.mxu0
        %v1341 = vadd.f32 %v1249, %v1340
        %v1342 = vpop.f32.mrf.mxu0
        %v1343 = vadd.f32 %v1251, %v1342
        %1344 = vmatmul.bf16.gmra.mxu0 %v706
        %v1345 = vpop.f32.mrf.mxu0
        %v1346 = vadd.f32 %v1254, %v1345
        %v1347 = vpop.f32.mrf.mxu0
        %v1348 = vadd.f32 %v1256, %v1347
        %1349 = vmatmul.bf16.gmra.mxu0 %v709
        %v1350 = vpop.f32.mrf.mxu0
        %v1351 = vadd.f32 %v1259, %v1350
        %v1352 = vpop.f32.mrf.mxu0
        %v1353 = vadd.f32 %v1261, %v1352
        %1354 = vmatmul.bf16.gmra.mxu0 %v712
        %v1355 = vpop.f32.mrf.mxu0
        %v1356 = vadd.f32 %v1264, %v1355
        %v1357 = vpop.f32.mrf.mxu0
        %v1358 = vadd.f32 %v1266, %v1357
        %1359 = vmatmul.bf16.gmra.mxu0 %v715
        %v1360 = vpop.f32.mrf.mxu0
        %v1361 = vadd.f32 %v1269, %v1360
        %v1362 = vpop.f32.mrf.mxu0
        %v1363 = vadd.f32 %v1271, %v1362
        %1364 = vmatmul.bf16.gmra.mxu0 %v718
        %v1365 = vpop.f32.mrf.mxu0
        %v1366 = vadd.f32 %v1274, %v1365
        %v1367 = vpop.f32.mrf.mxu0
        %v1368 = vadd.f32 %v1276, %v1367
        %1369 = vmatmul.bf16.gmra.mxu0 %v721
        %v1370 = vpop.f32.mrf.mxu0
        %v1371 = vadd.f32 %v1279, %v1370
        %v1372 = vpop.f32.mrf.mxu0
        %v1373 = vadd.f32 %v1281, %v1372
        %1374 = vmatmul.bf16.gmra.mxu0 %v724
        %v1375 = vpop.f32.mrf.mxu0
        %v1376 = vadd.f32 %v1284, %v1375
        %v1377 = vpop.f32.mrf.mxu0
        %v1378 = vadd.f32 %v1286, %v1377
        %1379 = vmatmul.bf16.gmra.mxu0 %v727
        %v1380 = vpop.f32.mrf.mxu0
        %v1381 = vadd.f32 %v1289, %v1380
        %v1382 = vpop.f32.mrf.mxu0
        %v1383 = vadd.f32 %v1291, %v1382
        %1384 = vmatmul.bf16.gmra.mxu0 %v730
        %v1385 = vpop.f32.mrf.mxu0
        %v1386 = vadd.f32 %v1294, %v1385
        %v1387 = vpop.f32.mrf.mxu0
        %v1388 = vadd.f32 %v1296, %v1387
        %1389 = vdwg.mxu0
        %v1390 = vadd.f32 %v1311, %v446
        %v1391 = vadd.f32 %v1313, %v451
        %v1392 = vadd.f32 %v1316, %v456
        %v1393 = vadd.f32 %v1318, %v461
        %v1394 = vadd.f32 %v1321, %v466
        %v1395 = vadd.f32 %v1323, %v471
        %v1396 = vadd.f32 %v1326, %v476
        %v1397 = vadd.f32 %v1328, %v481
        %v1398 = vadd.f32 %v1331, %v486
        %v1399 = vadd.f32 %v1333, %v491
        %v1400 = vadd.f32 %v1336, %v496
        %v1401 = vadd.f32 %v1338, %v501
        %v1402 = vadd.f32 %v1341, %v506
        %v1403 = vadd.f32 %v1343, %v511
        %v1404 = vadd.f32 %v1346, %v516
        %v1405 = vadd.f32 %v1348, %v521
        %v1406 = vadd.f32 %v1351, %v526
        %v1407 = vadd.f32 %v1353, %v531
        %v1408 = vadd.f32 %v1356, %v536
        %v1409 = vadd.f32 %v1358, %v541
        %v1410 = vadd.f32 %v1361, %v546
        %v1411 = vadd.f32 %v1363, %v551
        %v1412 = vadd.f32 %v1366, %v556
        %v1413 = vadd.f32 %v1368, %v561
        %v1414 = vadd.f32 %v1371, %v566
        %v1415 = vadd.f32 %v1373, %v571
        %v1416 = vadd.f32 %v1376, %v576
        %v1417 = vadd.f32 %v1378, %v581
        %v1418 = vadd.f32 %v1381, %v586
        %v1419 = vadd.f32 %v1383, %v591
        %v1420 = vadd.f32 %v1386, %v596
        %v1421 = vadd.f32 %v1388, %v601
        %v1422 = vpack.c.bf16 %v1390, %v1390
        %v1423 = vpack.c.bf16 %v1391, %v1391
        %v1424 = vpack.c.bf16 %v1392, %v1392
        %v1425 = vpack.c.bf16 %v1393, %v1393
        %v1426 = vpack.c.bf16 %v1394, %v1394
        %v1427 = vpack.c.bf16 %v1395, %v1395
        %v1428 = vpack.c.bf16 %v1396, %v1396
        %v1429 = vpack.c.bf16 %v1397, %v1397
        %v1430 = vpack.c.bf16 %v1398, %v1398
        %v1431 = vpack.c.bf16 %v1399, %v1399
        %v1432 = vpack.c.bf16 %v1400, %v1400
        %v1433 = vpack.c.bf16 %v1401, %v1401
        %v1434 = vpack.c.bf16 %v1402, %v1402
        %v1435 = vpack.c.bf16 %v1403, %v1403
        %v1436 = vpack.c.bf16 %v1404, %v1404
        %v1437 = vpack.c.bf16 %v1405, %v1405
        %v1438 = vpack.c.bf16 %v1406, %v1406
        %v1439 = vpack.c.bf16 %v1407, %v1407
        %v1440 = vpack.c.bf16 %v1408, %v1408
        %v1441 = vpack.c.bf16 %v1409, %v1409
        %v1442 = vpack.c.bf16 %v1410, %v1410
        %v1443 = vpack.c.bf16 %v1411, %v1411
        %v1444 = vpack.c.bf16 %v1412, %v1412
        %v1445 = vpack.c.bf16 %v1413, %v1413
        %v1446 = vpack.c.bf16 %v1414, %v1414
        %v1447 = vpack.c.bf16 %v1415, %v1415
        %v1448 = vpack.c.bf16 %v1416, %v1416
        %v1449 = vpack.c.bf16 %v1417, %v1417
        %v1450 = vpack.c.bf16 %v1418, %v1418
        %v1451 = vpack.c.bf16 %v1419, %v1419
        %v1452 = vpack.c.bf16 %v1420, %v1420
        %v1453 = vpack.c.bf16 %v1421, %v1421
        %v1454 = vunpack.c.l.bf16 %v1422
        %v1455 = vunpack.c.l.bf16 %v1423
        %v1456 = vunpack.c.l.bf16 %v1424
        %v1457 = vunpack.c.l.bf16 %v1425
        %v1458 = vunpack.c.l.bf16 %v1426
        %v1459 = vunpack.c.l.bf16 %v1427
        %v1460 = vunpack.c.l.bf16 %v1428
        %v1461 = vunpack.c.l.bf16 %v1429
        %v1462 = vunpack.c.l.bf16 %v1430
        %v1463 = vunpack.c.l.bf16 %v1431
        %v1464 = vunpack.c.l.bf16 %v1432
        %v1465 = vunpack.c.l.bf16 %v1433
        %v1466 = vunpack.c.l.bf16 %v1434
        %v1467 = vunpack.c.l.bf16 %v1435
        %v1468 = vunpack.c.l.bf16 %v1436
        %v1469 = vunpack.c.l.bf16 %v1437
        %v1470 = vunpack.c.l.bf16 %v1438
        %v1471 = vunpack.c.l.bf16 %v1439
        %v1472 = vunpack.c.l.bf16 %v1440
        %v1473 = vunpack.c.l.bf16 %v1441
        %v1474 = vunpack.c.l.bf16 %v1442
        %v1475 = vunpack.c.l.bf16 %v1443
        %v1476 = vunpack.c.l.bf16 %v1444
        %v1477 = vunpack.c.l.bf16 %v1445
        %v1478 = vunpack.c.l.bf16 %v1446
        %v1479 = vunpack.c.l.bf16 %v1447
        %v1480 = vunpack.c.l.bf16 %v1448
        %v1481 = vunpack.c.l.bf16 %v1449
        %v1482 = vunpack.c.l.bf16 %v1450
        %v1483 = vunpack.c.l.bf16 %v1451
        %v1484 = vunpack.c.l.bf16 %v1452
        %v1485 = vunpack.c.l.bf16 %v1453
        %v1486 = vtanh.pop %v1454
        %v1487 = vtanh.pop %v1455
        %v1488 = vtanh.pop %v1456
        %v1489 = vtanh.pop %v1457
        %v1490 = vtanh.pop %v1458
        %v1491 = vtanh.pop %v1459
        %v1492 = vtanh.pop %v1460
        %v1493 = vtanh.pop %v1461
        %v1494 = vtanh.pop %v1462
        %v1495 = vtanh.pop %v1463
        %v1496 = vtanh.pop %v1464
        %v1497 = vtanh.pop %v1465
        %v1498 = vtanh.pop %v1466
        %v1499 = vtanh.pop %v1467
        %v1500 = vtanh.pop %v1468
        %v1501 = vtanh.pop %v1469
        %v1502 = vtanh.pop %v1470
        %v1503 = vtanh.pop %v1471
        %v1504 = vtanh.pop %v1472
        %v1505 = vtanh.pop %v1473
        %v1506 = vtanh.pop %v1474
        %v1507 = vtanh.pop %v1475
        %v1508 = vtanh.pop %v1476
        %v1509 = vtanh.pop %v1477
        %v1510 = vtanh.pop %v1478
        %v1511 = vtanh.pop %v1479
        %v1512 = vtanh.pop %v1480
        %v1513 = vtanh.pop %v1481
        %v1514 = vtanh.pop %v1482
        %v1515 = vtanh.pop %v1483
        %v1516 = vtanh.pop %v1484
        %v1517 = vtanh.pop %v1485
        %v1518 = vpack.c.bf16 %v1486, %v1486
        %v1519 = vpack.c.bf16 %v1487, %v1487
        %v1520 = vpack.c.bf16 %v1488, %v1488
        %v1521 = vpack.c.bf16 %v1489, %v1489
        %v1522 = vpack.c.bf16 %v1490, %v1490
        %v1523 = vpack.c.bf16 %v1491, %v1491
        %v1524 = vpack.c.bf16 %v1492, %v1492
        %v1525 = vpack.c.bf16 %v1493, %v1493
        %v1526 = vpack.c.bf16 %v1494, %v1494
        %v1527 = vpack.c.bf16 %v1495, %v1495
        %v1528 = vpack.c.bf16 %v1496, %v1496
        %v1529 = vpack.c.bf16 %v1497, %v1497
        %v1530 = vpack.c.bf16 %v1498, %v1498
        %v1531 = vpack.c.bf16 %v1499, %v1499
        %v1532 = vpack.c.bf16 %v1500, %v1500
        %v1533 = vpack.c.bf16 %v1501, %v1501
        %v1534 = vpack.c.bf16 %v1502, %v1502
        %v1535 = vpack.c.bf16 %v1503, %v1503
        %v1536 = vpack.c.bf16 %v1504, %v1504
        %v1537 = vpack.c.bf16 %v1505, %v1505
        %v1538 = vpack.c.bf16 %v1506, %v1506
        %v1539 = vpack.c.bf16 %v1507, %v1507
        %v1540 = vpack.c.bf16 %v1508, %v1508
        %v1541 = vpack.c.bf16 %v1509, %v1509
        %v1542 = vpack.c.bf16 %v1510, %v1510
        %v1543 = vpack.c.bf16 %v1511, %v1511
        %v1544 = vpack.c.bf16 %v1512, %v1512
        %v1545 = vpack.c.bf16 %v1513, %v1513
        %v1546 = vpack.c.bf16 %v1514, %v1514
        %v1547 = vpack.c.bf16 %v1515, %v1515
        %v1548 = vpack.c.bf16 %v1516, %v1516
        %v1549 = vpack.c.bf16 %v1517, %v1517
        %v1550 = vunpack.c.l.bf16 %v1518
        %v1551 = vunpack.c.l.bf16 %v1519
        %v1552 = vunpack.c.l.bf16 %v1520
        %v1553 = vunpack.c.l.bf16 %v1521
        %v1554 = vunpack.c.l.bf16 %v1522
        %v1555 = vunpack.c.l.bf16 %v1523
        %v1556 = vunpack.c.l.bf16 %v1524
        %v1557 = vunpack.c.l.bf16 %v1525
        %v1558 = vmul.f32 %v1550, 0.5
        %v1559 = vmul.f32 %v1551, 0.5
        %v1560 = vmul.f32 %v1552, 0.5
        %v1561 = vmul.f32 %v1553, 0.5
        %v1562 = vmul.f32 %v1554, 0.5
        %v1563 = vmul.f32 %v1555, 0.5
        %v1564 = vmul.f32 %v1556, 0.5
        %v1565 = vmul.f32 %v1557, 0.5
        %v1566 = vpack.c.bf16 %v1558, %v1558
        %v1567 = vpack.c.bf16 %v1559, %v1559
        %v1568 = vpack.c.bf16 %v1560, %v1560
        %v1569 = vpack.c.bf16 %v1561, %v1561
        %v1570 = vpack.c.bf16 %v1562, %v1562
        %v1571 = vpack.c.bf16 %v1563, %v1563
        %v1572 = vpack.c.bf16 %v1564, %v1564
        %v1573 = vpack.c.bf16 %v1565, %v1565
        %v1574 = vunpack.c.l.bf16 %v1566
        %v1575 = vunpack.c.l.bf16 %v1567
        %v1576 = vunpack.c.l.bf16 %v1568
        %v1577 = vunpack.c.l.bf16 %v1569
        %v1578 = vunpack.c.l.bf16 %v1570
        %v1579 = vunpack.c.l.bf16 %v1571
        %v1580 = vunpack.c.l.bf16 %v1572
        %v1581 = vunpack.c.l.bf16 %v1573
        %v1582 = vadd.f32 %v1574, 0.5
        %v1583 = vadd.f32 %v1575, 0.5
        %v1584 = vadd.f32 %v1576, 0.5
        %v1585 = vadd.f32 %v1577, 0.5
        %v1586 = vadd.f32 %v1578, 0.5
        %v1587 = vadd.f32 %v1579, 0.5
        %v1588 = vadd.f32 %v1580, 0.5
        %v1589 = vadd.f32 %v1581, 0.5
        %v1590 = vpack.c.bf16 %v1582, %v1582
        %v1591 = vpack.c.bf16 %v1583, %v1583
        %v1592 = vpack.c.bf16 %v1584, %v1584
        %v1593 = vpack.c.bf16 %v1585, %v1585
        %v1594 = vpack.c.bf16 %v1586, %v1586
        %v1595 = vpack.c.bf16 %v1587, %v1587
        %v1596 = vpack.c.bf16 %v1588, %v1588
        %v1597 = vpack.c.bf16 %v1589, %v1589
        %v1598 = vunpack.c.l.bf16 %v1526
        %v1599 = vunpack.c.l.bf16 %v1527
        %v1600 = vunpack.c.l.bf16 %v1528
        %v1601 = vunpack.c.l.bf16 %v1529
        %v1602 = vunpack.c.l.bf16 %v1530
        %v1603 = vunpack.c.l.bf16 %v1531
        %v1604 = vunpack.c.l.bf16 %v1532
        %v1605 = vunpack.c.l.bf16 %v1533
        %v1606 = vmul.f32 %v1598, 0.5
        %v1607 = vmul.f32 %v1599, 0.5
        %v1608 = vmul.f32 %v1600, 0.5
        %v1609 = vmul.f32 %v1601, 0.5
        %v1610 = vmul.f32 %v1602, 0.5
        %v1611 = vmul.f32 %v1603, 0.5
        %v1612 = vmul.f32 %v1604, 0.5
        %v1613 = vmul.f32 %v1605, 0.5
        %v1614 = vpack.c.bf16 %v1606, %v1606
        %v1615 = vpack.c.bf16 %v1607, %v1607
        %v1616 = vpack.c.bf16 %v1608, %v1608
        %v1617 = vpack.c.bf16 %v1609, %v1609
        %v1618 = vpack.c.bf16 %v1610, %v1610
        %v1619 = vpack.c.bf16 %v1611, %v1611
        %v1620 = vpack.c.bf16 %v1612, %v1612
        %v1621 = vpack.c.bf16 %v1613, %v1613
        %v1622 = vunpack.c.l.bf16 %v1614
        %v1623 = vunpack.c.l.bf16 %v1615
        %v1624 = vunpack.c.l.bf16 %v1616
        %v1625 = vunpack.c.l.bf16 %v1617
        %v1626 = vunpack.c.l.bf16 %v1618
        %v1627 = vunpack.c.l.bf16 %v1619
        %v1628 = vunpack.c.l.bf16 %v1620
        %v1629 = vunpack.c.l.bf16 %v1621
        %v1630 = vadd.f32 %v1622, 0.5
        %v1631 = vadd.f32 %v1623, 0.5
        %v1632 = vadd.f32 %v1624, 0.5
        %v1633 = vadd.f32 %v1625, 0.5
        %v1634 = vadd.f32 %v1626, 0.5
        %v1635 = vadd.f32 %v1627, 0.5
        %v1636 = vadd.f32 %v1628, 0.5
        %v1637 = vadd.f32 %v1629, 0.5
        %v1638 = vpack.c.bf16 %v1630, %v1630
        %v1639 = vpack.c.bf16 %v1631, %v1631
        %v1640 = vpack.c.bf16 %v1632, %v1632
        %v1641 = vpack.c.bf16 %v1633, %v1633
        %v1642 = vpack.c.bf16 %v1634, %v1634
        %v1643 = vpack.c.bf16 %v1635, %v1635
        %v1644 = vpack.c.bf16 %v1636, %v1636
        %v1645 = vpack.c.bf16 %v1637, %v1637
        %v1646 = vunpack.c.l.bf16 %v1542
        %v1647 = vunpack.c.l.bf16 %v1543
        %v1648 = vunpack.c.l.bf16 %v1544
        %v1649 = vunpack.c.l.bf16 %v1545
        %v1650 = vunpack.c.l.bf16 %v1546
        %v1651 = vunpack.c.l.bf16 %v1547
        %v1652 = vunpack.c.l.bf16 %v1548
        %v1653 = vunpack.c.l.bf16 %v1549
        %v1654 = vmul.f32 %v1646, 0.5
        %v1655 = vmul.f32 %v1647, 0.5
        %v1656 = vmul.f32 %v1648, 0.5
        %v1657 = vmul.f32 %v1649, 0.5
        %v1658 = vmul.f32 %v1650, 0.5
        %v1659 = vmul.f32 %v1651, 0.5
        %v1660 = vmul.f32 %v1652, 0.5
        %v1661 = vmul.f32 %v1653, 0.5
        %v1662 = vpack.c.bf16 %v1654, %v1654
        %v1663 = vpack.c.bf16 %v1655, %v1655
        %v1664 = vpack.c.bf16 %v1656, %v1656
        %v1665 = vpack.c.bf16 %v1657, %v1657
        %v1666 = vpack.c.bf16 %v1658, %v1658
        %v1667 = vpack.c.bf16 %v1659, %v1659
        %v1668 = vpack.c.bf16 %v1660, %v1660
        %v1669 = vpack.c.bf16 %v1661, %v1661
        %v1670 = vunpack.c.l.bf16 %v1662
        %v1671 = vunpack.c.l.bf16 %v1663
        %v1672 = vunpack.c.l.bf16 %v1664
        %v1673 = vunpack.c.l.bf16 %v1665
        %v1674 = vunpack.c.l.bf16 %v1666
        %v1675 = vunpack.c.l.bf16 %v1667
        %v1676 = vunpack.c.l.bf16 %v1668
        %v1677 = vunpack.c.l.bf16 %v1669
        %v1678 = vadd.f32 %v1670, 0.5
        %v1679 = vadd.f32 %v1671, 0.5
        %v1680 = vadd.f32 %v1672, 0.5
        %v1681 = vadd.f32 %v1673, 0.5
        %v1682 = vadd.f32 %v1674, 0.5
        %v1683 = vadd.f32 %v1675, 0.5
        %v1684 = vadd.f32 %v1676, 0.5
        %v1685 = vadd.f32 %v1677, 0.5
        %v1686 = vpack.c.bf16 %v1678, %v1678
        %v1687 = vpack.c.bf16 %v1679, %v1679
        %v1688 = vpack.c.bf16 %v1680, %v1680
        %v1689 = vpack.c.bf16 %v1681, %v1681
        %v1690 = vpack.c.bf16 %v1682, %v1682
        %v1691 = vpack.c.bf16 %v1683, %v1683
        %v1692 = vpack.c.bf16 %v1684, %v1684
        %v1693 = vpack.c.bf16 %v1685, %v1685
        %v1694 = vunpack.c.l.bf16 %v1590
        %v1695 = vunpack.c.l.bf16 %v1591
        %v1696 = vunpack.c.l.bf16 %v1592
        %v1697 = vunpack.c.l.bf16 %v1593
        %v1698 = vunpack.c.l.bf16 %v1594
        %v1699 = vunpack.c.l.bf16 %v1595
        %v1700 = vunpack.c.l.bf16 %v1596
        %v1701 = vunpack.c.l.bf16 %v1597
        %v1702 = vunpack.c.l.bf16 %v1534
        %v1703 = vunpack.c.l.bf16 %v1535
        %v1704 = vunpack.c.l.bf16 %v1536
        %v1705 = vunpack.c.l.bf16 %v1537
        %v1706 = vunpack.c.l.bf16 %v1538
        %v1707 = vunpack.c.l.bf16 %v1539
        %v1708 = vunpack.c.l.bf16 %v1540
        %v1709 = vunpack.c.l.bf16 %v1541
        %v1710 = vmul.f32 %v1694, %v1702
        %v1711 = vmul.f32 %v1695, %v1703
        %v1712 = vmul.f32 %v1696, %v1704
        %v1713 = vmul.f32 %v1697, %v1705
        %v1714 = vmul.f32 %v1698, %v1706
        %v1715 = vmul.f32 %v1699, %v1707
        %v1716 = vmul.f32 %v1700, %v1708
        %v1717 = vmul.f32 %v1701, %v1709
        %v1718 = vpack.c.bf16 %v1710, %v1710
        %v1719 = vpack.c.bf16 %v1711, %v1711
        %v1720 = vpack.c.bf16 %v1712, %v1712
        %v1721 = vpack.c.bf16 %v1713, %v1713
        %v1722 = vpack.c.bf16 %v1714, %v1714
        %v1723 = vpack.c.bf16 %v1715, %v1715
        %v1724 = vpack.c.bf16 %v1716, %v1716
        %v1725 = vpack.c.bf16 %v1717, %v1717
        %v1726 = vunpack.c.l.bf16 %v1718
        %v1727 = vunpack.c.l.bf16 %v1719
        %v1728 = vunpack.c.l.bf16 %v1720
        %v1729 = vunpack.c.l.bf16 %v1721
        %v1730 = vunpack.c.l.bf16 %v1722
        %v1731 = vunpack.c.l.bf16 %v1723
        %v1732 = vunpack.c.l.bf16 %v1724
        %v1733 = vunpack.c.l.bf16 %v1725
        %v1734 = vunpack.c.l.bf16 %v1638
        %v1735 = vunpack.c.l.bf16 %v1639
        %v1736 = vunpack.c.l.bf16 %v1640
        %v1737 = vunpack.c.l.bf16 %v1641
        %v1738 = vunpack.c.l.bf16 %v1642
        %v1739 = vunpack.c.l.bf16 %v1643
        %v1740 = vunpack.c.l.bf16 %v1644
        %v1741 = vunpack.c.l.bf16 %v1645
        %v1742 = vmul.f32 %v1734, %v1041
        %v1743 = vmul.f32 %v1735, %v1042
        %v1744 = vmul.f32 %v1736, %v1043
        %v1745 = vmul.f32 %v1737, %v1044
        %v1746 = vmul.f32 %v1738, %v1045
        %v1747 = vmul.f32 %v1739, %v1046
        %v1748 = vmul.f32 %v1740, %v1047
        %v1749 = vmul.f32 %v1741, %v1048
        %v1750 = vadd.f32 %v1742, %v1726
        %v1751 = vadd.f32 %v1743, %v1727
        %v1752 = vadd.f32 %v1744, %v1728
        %v1753 = vadd.f32 %v1745, %v1729
        %v1754 = vadd.f32 %v1746, %v1730
        %v1755 = vadd.f32 %v1747, %v1731
        %v1756 = vadd.f32 %v1748, %v1732
        %v1757 = vadd.f32 %v1749, %v1733
        %v1758 = vunpack.c.l.bf16 %v1686
        %v1759 = vunpack.c.l.bf16 %v1687
        %v1760 = vunpack.c.l.bf16 %v1688
        %v1761 = vunpack.c.l.bf16 %v1689
        %v1762 = vunpack.c.l.bf16 %v1690
        %v1763 = vunpack.c.l.bf16 %v1691
        %v1764 = vunpack.c.l.bf16 %v1692
        %v1765 = vunpack.c.l.bf16 %v1693
        %v1766 = vtanh.pop %v1750
        %v1767 = vtanh.pop %v1751
        %v1768 = vtanh.pop %v1752
        %v1769 = vtanh.pop %v1753
        %v1770 = vtanh.pop %v1754
        %v1771 = vtanh.pop %v1755
        %v1772 = vtanh.pop %v1756
        %v1773 = vtanh.pop %v1757
        %v1774 = vmul.f32 %v1758, %v1766
        %v1775 = vmul.f32 %v1759, %v1767
        %v1776 = vmul.f32 %v1760, %v1768
        %v1777 = vmul.f32 %v1761, %v1769
        %v1778 = vmul.f32 %v1762, %v1770
        %v1779 = vmul.f32 %v1763, %v1771
        %v1780 = vmul.f32 %v1764, %v1772
        %v1781 = vmul.f32 %v1765, %v1773
        %v1782 = vpack.c.bf16 %v1775, %v1774
        %v1783 = vpack.c.bf16 %v1777, %v1776
        %v1784 = vpack.c.bf16 %v1779, %v1778
        %v1785 = vpack.c.bf16 %v1781, %v1780
        %v1786 = vld [vmem:[%s305 + $0x18] sm:$0xff]
        %v1787 = vld [vmem:[%s305 + $0x20] sm:$0xf]
        %v1788 = vpack.c.bf16 %v1787, %v1786
        %1789 = vmatpush.bf16.msra.mxu0 0
        %1790 = vmatpush.bf16.msra.mxu0 0
        %1791 = vmatpush.bf16.msra.mxu0 0
        %1792 = vmatpush.bf16.msra.mxu0 0
        %1793 = vmatpush.bf16.msra.mxu0 %v1785
        %1794 = vmatpush.bf16.msra.mxu0 %v1784
        %1795 = vmatpush.bf16.msra.mxu0 %v1783
        %1796 = vmatpush.bf16.msra.mxu0 %v1782
        %1797 = vmatmul.bf16.gmra.mxu0 %v1162
        %v1798 = vpop.f32.mrf.mxu0
        %v1799 = vadd.f32 0.0, %v1798
        %v1800 = vpop.f32.mrf.mxu0
        %v1801 = vadd.f32 0.0, %v1800
        %1802 = vmatmul.bf16.gmra.mxu0 %v1165
        %v1803 = vpop.f32.mrf.mxu0
        %v1804 = vadd.f32 0.0, %v1803
        %v1805 = vpop.f32.mrf.mxu0
        %v1806 = vadd.f32 0.0, %v1805
        %1807 = vmatmul.bf16.gmra.mxu0 %v1168
        %v1808 = vpop.f32.mrf.mxu0
        %v1809 = vadd.f32 0.0, %v1808
        %v1810 = vpop.f32.mrf.mxu0
        %v1811 = vadd.f32 0.0, %v1810
        %1812 = vmatmul.bf16.gmra.mxu0 %v1171
        %v1813 = vpop.f32.mrf.mxu0
        %v1814 = vadd.f32 0.0, %v1813
        %v1815 = vpop.f32.mrf.mxu0
        %v1816 = vadd.f32 0.0, %v1815
        %1817 = vmatmul.bf16.gmra.mxu0 %v1174
        %v1818 = vpop.f32.mrf.mxu0
        %v1819 = vadd.f32 0.0, %v1818
        %v1820 = vpop.f32.mrf.mxu0
        %v1821 = vadd.f32 0.0, %v1820
        %1822 = vmatmul.bf16.gmra.mxu0 %v1177
        %v1823 = vpop.f32.mrf.mxu0
        %v1824 = vadd.f32 0.0, %v1823
        %v1825 = vpop.f32.mrf.mxu0
        %v1826 = vadd.f32 0.0, %v1825
        %1827 = vmatmul.bf16.gmra.mxu0 %v1180
        %v1828 = vpop.f32.mrf.mxu0
        %v1829 = vadd.f32 0.0, %v1828
        %v1830 = vpop.f32.mrf.mxu0
        %v1831 = vadd.f32 0.0, %v1830
        %1832 = vmatmul.bf16.gmra.mxu0 %v1183
        %v1833 = vpop.f32.mrf.mxu0
        %v1834 = vadd.f32 0.0, %v1833
        %v1835 = vpop.f32.mrf.mxu0
        %v1836 = vadd.f32 0.0, %v1835
        %1837 = vmatmul.bf16.gmra.mxu0 %v1186
        %v1838 = vpop.f32.mrf.mxu0
        %v1839 = vadd.f32 0.0, %v1838
        %v1840 = vpop.f32.mrf.mxu0
        %v1841 = vadd.f32 0.0, %v1840
        %1842 = vmatmul.bf16.gmra.mxu0 %v1189
        %v1843 = vpop.f32.mrf.mxu0
        %v1844 = vadd.f32 0.0, %v1843
        %v1845 = vpop.f32.mrf.mxu0
        %v1846 = vadd.f32 0.0, %v1845
        %1847 = vmatmul.bf16.gmra.mxu0 %v1192
        %v1848 = vpop.f32.mrf.mxu0
        %v1849 = vadd.f32 0.0, %v1848
        %v1850 = vpop.f32.mrf.mxu0
        %v1851 = vadd.f32 0.0, %v1850
        %1852 = vmatmul.bf16.gmra.mxu0 %v1195
        %v1853 = vpop.f32.mrf.mxu0
        %v1854 = vadd.f32 0.0, %v1853
        %v1855 = vpop.f32.mrf.mxu0
        %v1856 = vadd.f32 0.0, %v1855
        %1857 = vmatmul.bf16.gmra.mxu0 %v1198
        %v1858 = vpop.f32.mrf.mxu0
        %v1859 = vadd.f32 0.0, %v1858
        %v1860 = vpop.f32.mrf.mxu0
        %v1861 = vadd.f32 0.0, %v1860
        %1862 = vmatmul.bf16.gmra.mxu0 %v1201
        %v1863 = vpop.f32.mrf.mxu0
        %v1864 = vadd.f32 0.0, %v1863
        %v1865 = vpop.f32.mrf.mxu0
        %v1866 = vadd.f32 0.0, %v1865
        %1867 = vmatmul.bf16.gmra.mxu0 %v1204
        %v1868 = vpop.f32.mrf.mxu0
        %v1869 = vadd.f32 0.0, %v1868
        %v1870 = vpop.f32.mrf.mxu0
        %v1871 = vadd.f32 0.0, %v1870
        %1872 = vmatmul.bf16.gmra.mxu0 %v1207
        %v1873 = vpop.f32.mrf.mxu0
        %v1874 = vadd.f32 0.0, %v1873
        %v1875 = vpop.f32.mrf.mxu0
        %v1876 = vadd.f32 0.0, %v1875
        %1877 = vdwg.mxu0
        %v1879 = vsel %vm732, %v1788, 0
        %1881 = vmatpush.bf16.msra.mxu0 0
        %1882 = vmatpush.bf16.msra.mxu0 0
        %1883 = vmatpush.bf16.msra.mxu0 0
        %1884 = vmatpush.bf16.msra.mxu0 0
        %1885 = vmatpush.bf16.msra.mxu0 0
        %1886 = vmatpush.bf16.msra.mxu0 0
        %1887 = vmatpush.bf16.msra.mxu0 0
        %1888 = vmatpush.bf16.msra.mxu0 %v1879
        %1889 = vmatmul.bf16.gmra.mxu0 %v685
        %v1890 = vpop.f32.mrf.mxu0
        %v1891 = vadd.f32 %v1799, %v1890
        %v1892 = vpop.f32.mrf.mxu0
        %v1893 = vadd.f32 %v1801, %v1892
        %1894 = vmatmul.bf16.gmra.mxu0 %v688
        %v1895 = vpop.f32.mrf.mxu0
        %v1896 = vadd.f32 %v1804, %v1895
        %v1897 = vpop.f32.mrf.mxu0
        %v1898 = vadd.f32 %v1806, %v1897
        %1899 = vmatmul.bf16.gmra.mxu0 %v691
        %v1900 = vpop.f32.mrf.mxu0
        %v1901 = vadd.f32 %v1809, %v1900
        %v1902 = vpop.f32.mrf.mxu0
        %v1903 = vadd.f32 %v1811, %v1902
        %1904 = vmatmul.bf16.gmra.mxu0 %v694
        %v1905 = vpop.f32.mrf.mxu0
        %v1906 = vadd.f32 %v1814, %v1905
        %v1907 = vpop.f32.mrf.mxu0
        %v1908 = vadd.f32 %v1816, %v1907
        %1909 = vmatmul.bf16.gmra.mxu0 %v697
        %v1910 = vpop.f32.mrf.mxu0
        %v1911 = vadd.f32 %v1819, %v1910
        %v1912 = vpop.f32.mrf.mxu0
        %v1913 = vadd.f32 %v1821, %v1912
        %1914 = vmatmul.bf16.gmra.mxu0 %v700
        %v1915 = vpop.f32.mrf.mxu0
        %v1916 = vadd.f32 %v1824, %v1915
        %v1917 = vpop.f32.mrf.mxu0
        %v1918 = vadd.f32 %v1826, %v1917
        %1919 = vmatmul.bf16.gmra.mxu0 %v703
        %v1920 = vpop.f32.mrf.mxu0
        %v1921 = vadd.f32 %v1829, %v1920
        %v1922 = vpop.f32.mrf.mxu0
        %v1923 = vadd.f32 %v1831, %v1922
        %1924 = vmatmul.bf16.gmra.mxu0 %v706
        %v1925 = vpop.f32.mrf.mxu0
        %v1926 = vadd.f32 %v1834, %v1925
        %v1927 = vpop.f32.mrf.mxu0
        %v1928 = vadd.f32 %v1836, %v1927
        %1929 = vmatmul.bf16.gmra.mxu0 %v709
        %v1930 = vpop.f32.mrf.mxu0
        %v1931 = vadd.f32 %v1839, %v1930
        %v1932 = vpop.f32.mrf.mxu0
        %v1933 = vadd.f32 %v1841, %v1932
        %1934 = vmatmul.bf16.gmra.mxu0 %v712
        %v1935 = vpop.f32.mrf.mxu0
        %v1936 = vadd.f32 %v1844, %v1935
        %v1937 = vpop.f32.mrf.mxu0
        %v1938 = vadd.f32 %v1846, %v1937
        %1939 = vmatmul.bf16.gmra.mxu0 %v715
        %v1940 = vpop.f32.mrf.mxu0
        %v1941 = vadd.f32 %v1849, %v1940
        %v1942 = vpop.f32.mrf.mxu0
        %v1943 = vadd.f32 %v1851, %v1942
        %1944 = vmatmul.bf16.gmra.mxu0 %v718
        %v1945 = vpop.f32.mrf.mxu0
        %v1946 = vadd.f32 %v1854, %v1945
        %v1947 = vpop.f32.mrf.mxu0
        %v1948 = vadd.f32 %v1856, %v1947
        %1949 = vmatmul.bf16.gmra.mxu0 %v721
        %v1950 = vpop.f32.mrf.mxu0
        %v1951 = vadd.f32 %v1859, %v1950
        %v1952 = vpop.f32.mrf.mxu0
        %v1953 = vadd.f32 %v1861, %v1952
        %1954 = vmatmul.bf16.gmra.mxu0 %v724
        %v1955 = vpop.f32.mrf.mxu0
        %v1956 = vadd.f32 %v1864, %v1955
        %v1957 = vpop.f32.mrf.mxu0
        %v1958 = vadd.f32 %v1866, %v1957
        %1959 = vmatmul.bf16.gmra.mxu0 %v727
        %v1960 = vpop.f32.mrf.mxu0
        %v1961 = vadd.f32 %v1869, %v1960
        %v1962 = vpop.f32.mrf.mxu0
        %v1963 = vadd.f32 %v1871, %v1962
        %1964 = vmatmul.bf16.gmra.mxu0 %v730
        %v1965 = vpop.f32.mrf.mxu0
        %v1966 = vadd.f32 %v1874, %v1965
        %v1967 = vpop.f32.mrf.mxu0
        %v1968 = vadd.f32 %v1876, %v1967
        %1969 = vdwg.mxu0
        %v1970 = vadd.f32 %v1891, %v446
        %v1971 = vadd.f32 %v1893, %v451
        %v1972 = vadd.f32 %v1896, %v456
        %v1973 = vadd.f32 %v1898, %v461
        %v1974 = vadd.f32 %v1901, %v466
        %v1975 = vadd.f32 %v1903, %v471
        %v1976 = vadd.f32 %v1906, %v476
        %v1977 = vadd.f32 %v1908, %v481
        %v1978 = vadd.f32 %v1911, %v486
        %v1979 = vadd.f32 %v1913, %v491
        %v1980 = vadd.f32 %v1916, %v496
        %v1981 = vadd.f32 %v1918, %v501
        %v1982 = vadd.f32 %v1921, %v506
        %v1983 = vadd.f32 %v1923, %v511
        %v1984 = vadd.f32 %v1926, %v516
        %v1985 = vadd.f32 %v1928, %v521
        %v1986 = vadd.f32 %v1931, %v526
        %v1987 = vadd.f32 %v1933, %v531
        %v1988 = vadd.f32 %v1936, %v536
        %v1989 = vadd.f32 %v1938, %v541
        %v1990 = vadd.f32 %v1941, %v546
        %v1991 = vadd.f32 %v1943, %v551
        %v1992 = vadd.f32 %v1946, %v556
        %v1993 = vadd.f32 %v1948, %v561
        %v1994 = vadd.f32 %v1951, %v566
        %v1995 = vadd.f32 %v1953, %v571
        %v1996 = vadd.f32 %v1956, %v576
        %v1997 = vadd.f32 %v1958, %v581
        %v1998 = vadd.f32 %v1961, %v586
        %v1999 = vadd.f32 %v1963, %v591
        %v2000 = vadd.f32 %v1966, %v596
        %v2001 = vadd.f32 %v1968, %v601
        %v2002 = vpack.c.bf16 %v1970, %v1970
        %v2003 = vpack.c.bf16 %v1971, %v1971
        %v2004 = vpack.c.bf16 %v1972, %v1972
        %v2005 = vpack.c.bf16 %v1973, %v1973
        %v2006 = vpack.c.bf16 %v1974, %v1974
        %v2007 = vpack.c.bf16 %v1975, %v1975
        %v2008 = vpack.c.bf16 %v1976, %v1976
        %v2009 = vpack.c.bf16 %v1977, %v1977
        %v2010 = vpack.c.bf16 %v1978, %v1978
        %v2011 = vpack.c.bf16 %v1979, %v1979
        %v2012 = vpack.c.bf16 %v1980, %v1980
        %v2013 = vpack.c.bf16 %v1981, %v1981
        %v2014 = vpack.c.bf16 %v1982, %v1982
        %v2015 = vpack.c.bf16 %v1983, %v1983
        %v2016 = vpack.c.bf16 %v1984, %v1984
        %v2017 = vpack.c.bf16 %v1985, %v1985
        %v2018 = vpack.c.bf16 %v1986, %v1986
        %v2019 = vpack.c.bf16 %v1987, %v1987
        %v2020 = vpack.c.bf16 %v1988, %v1988
        %v2021 = vpack.c.bf16 %v1989, %v1989
        %v2022 = vpack.c.bf16 %v1990, %v1990
        %v2023 = vpack.c.bf16 %v1991, %v1991
        %v2024 = vpack.c.bf16 %v1992, %v1992
        %v2025 = vpack.c.bf16 %v1993, %v1993
        %v2026 = vpack.c.bf16 %v1994, %v1994
        %v2027 = vpack.c.bf16 %v1995, %v1995
        %v2028 = vpack.c.bf16 %v1996, %v1996
        %v2029 = vpack.c.bf16 %v1997, %v1997
        %v2030 = vpack.c.bf16 %v1998, %v1998
        %v2031 = vpack.c.bf16 %v1999, %v1999
        %v2032 = vpack.c.bf16 %v2000, %v2000
        %v2033 = vpack.c.bf16 %v2001, %v2001
        %v2034 = vunpack.c.l.bf16 %v2002
        %v2035 = vunpack.c.l.bf16 %v2003
        %v2036 = vunpack.c.l.bf16 %v2004
        %v2037 = vunpack.c.l.bf16 %v2005
        %v2038 = vunpack.c.l.bf16 %v2006
        %v2039 = vunpack.c.l.bf16 %v2007
        %v2040 = vunpack.c.l.bf16 %v2008
        %v2041 = vunpack.c.l.bf16 %v2009
        %v2042 = vunpack.c.l.bf16 %v2010
        %v2043 = vunpack.c.l.bf16 %v2011
        %v2044 = vunpack.c.l.bf16 %v2012
        %v2045 = vunpack.c.l.bf16 %v2013
        %v2046 = vunpack.c.l.bf16 %v2014
        %v2047 = vunpack.c.l.bf16 %v2015
        %v2048 = vunpack.c.l.bf16 %v2016
        %v2049 = vunpack.c.l.bf16 %v2017
        %v2050 = vunpack.c.l.bf16 %v2018
        %v2051 = vunpack.c.l.bf16 %v2019
        %v2052 = vunpack.c.l.bf16 %v2020
        %v2053 = vunpack.c.l.bf16 %v2021
        %v2054 = vunpack.c.l.bf16 %v2022
        %v2055 = vunpack.c.l.bf16 %v2023
        %v2056 = vunpack.c.l.bf16 %v2024
        %v2057 = vunpack.c.l.bf16 %v2025
        %v2058 = vunpack.c.l.bf16 %v2026
        %v2059 = vunpack.c.l.bf16 %v2027
        %v2060 = vunpack.c.l.bf16 %v2028
        %v2061 = vunpack.c.l.bf16 %v2029
        %v2062 = vunpack.c.l.bf16 %v2030
        %v2063 = vunpack.c.l.bf16 %v2031
        %v2064 = vunpack.c.l.bf16 %v2032
        %v2065 = vunpack.c.l.bf16 %v2033
        %v2066 = vtanh.pop %v2034
        %v2067 = vtanh.pop %v2035
        %v2068 = vtanh.pop %v2036
        %v2069 = vtanh.pop %v2037
        %v2070 = vtanh.pop %v2038
        %v2071 = vtanh.pop %v2039
        %v2072 = vtanh.pop %v2040
        %v2073 = vtanh.pop %v2041
        %v2074 = vtanh.pop %v2042
        %v2075 = vtanh.pop %v2043
        %v2076 = vtanh.pop %v2044
        %v2077 = vtanh.pop %v2045
        %v2078 = vtanh.pop %v2046
        %v2079 = vtanh.pop %v2047
        %v2080 = vtanh.pop %v2048
        %v2081 = vtanh.pop %v2049
        %v2082 = vtanh.pop %v2050
        %v2083 = vtanh.pop %v2051
        %v2084 = vtanh.pop %v2052
        %v2085 = vtanh.pop %v2053
        %v2086 = vtanh.pop %v2054
        %v2087 = vtanh.pop %v2055
        %v2088 = vtanh.pop %v2056
        %v2089 = vtanh.pop %v2057
        %v2090 = vtanh.pop %v2058
        %v2091 = vtanh.pop %v2059
        %v2092 = vtanh.pop %v2060
        %v2093 = vtanh.pop %v2061
        %v2094 = vtanh.pop %v2062
        %v2095 = vtanh.pop %v2063
        %v2096 = vtanh.pop %v2064
        %v2097 = vtanh.pop %v2065
        %v2098 = vpack.c.bf16 %v2066, %v2066
        %v2099 = vpack.c.bf16 %v2067, %v2067
        %v2100 = vpack.c.bf16 %v2068, %v2068
        %v2101 = vpack.c.bf16 %v2069, %v2069
        %v2102 = vpack.c.bf16 %v2070, %v2070
        %v2103 = vpack.c.bf16 %v2071, %v2071
        %v2104 = vpack.c.bf16 %v2072, %v2072
        %v2105 = vpack.c.bf16 %v2073, %v2073
        %v2106 = vpack.c.bf16 %v2074, %v2074
        %v2107 = vpack.c.bf16 %v2075, %v2075
        %v2108 = vpack.c.bf16 %v2076, %v2076
        %v2109 = vpack.c.bf16 %v2077, %v2077
        %v2110 = vpack.c.bf16 %v2078, %v2078
        %v2111 = vpack.c.bf16 %v2079, %v2079
        %v2112 = vpack.c.bf16 %v2080, %v2080
        %v2113 = vpack.c.bf16 %v2081, %v2081
        %v2114 = vpack.c.bf16 %v2082, %v2082
        %v2115 = vpack.c.bf16 %v2083, %v2083
        %v2116 = vpack.c.bf16 %v2084, %v2084
        %v2117 = vpack.c.bf16 %v2085, %v2085
        %v2118 = vpack.c.bf16 %v2086, %v2086
        %v2119 = vpack.c.bf16 %v2087, %v2087
        %v2120 = vpack.c.bf16 %v2088, %v2088
        %v2121 = vpack.c.bf16 %v2089, %v2089
        %v2122 = vpack.c.bf16 %v2090, %v2090
        %v2123 = vpack.c.bf16 %v2091, %v2091
        %v2124 = vpack.c.bf16 %v2092, %v2092
        %v2125 = vpack.c.bf16 %v2093, %v2093
        %v2126 = vpack.c.bf16 %v2094, %v2094
        %v2127 = vpack.c.bf16 %v2095, %v2095
        %v2128 = vpack.c.bf16 %v2096, %v2096
        %v2129 = vpack.c.bf16 %v2097, %v2097
        %v2130 = vunpack.c.l.bf16 %v2098
        %v2131 = vunpack.c.l.bf16 %v2099
        %v2132 = vunpack.c.l.bf16 %v2100
        %v2133 = vunpack.c.l.bf16 %v2101
        %v2134 = vunpack.c.l.bf16 %v2102
        %v2135 = vunpack.c.l.bf16 %v2103
        %v2136 = vunpack.c.l.bf16 %v2104
        %v2137 = vunpack.c.l.bf16 %v2105
        %v2138 = vmul.f32 %v2130, 0.5
        %v2139 = vmul.f32 %v2131, 0.5
        %v2140 = vmul.f32 %v2132, 0.5
        %v2141 = vmul.f32 %v2133, 0.5
        %v2142 = vmul.f32 %v2134, 0.5
        %v2143 = vmul.f32 %v2135, 0.5
        %v2144 = vmul.f32 %v2136, 0.5
        %v2145 = vmul.f32 %v2137, 0.5
        %v2146 = vpack.c.bf16 %v2138, %v2138
        %v2147 = vpack.c.bf16 %v2139, %v2139
        %v2148 = vpack.c.bf16 %v2140, %v2140
        %v2149 = vpack.c.bf16 %v2141, %v2141
        %v2150 = vpack.c.bf16 %v2142, %v2142
        %v2151 = vpack.c.bf16 %v2143, %v2143
        %v2152 = vpack.c.bf16 %v2144, %v2144
        %v2153 = vpack.c.bf16 %v2145, %v2145
        %v2154 = vunpack.c.l.bf16 %v2146
        %v2155 = vunpack.c.l.bf16 %v2147
        %v2156 = vunpack.c.l.bf16 %v2148
        %v2157 = vunpack.c.l.bf16 %v2149
        %v2158 = vunpack.c.l.bf16 %v2150
        %v2159 = vunpack.c.l.bf16 %v2151
        %v2160 = vunpack.c.l.bf16 %v2152
        %v2161 = vunpack.c.l.bf16 %v2153
        %v2162 = vadd.f32 %v2154, 0.5
        %v2163 = vadd.f32 %v2155, 0.5
        %v2164 = vadd.f32 %v2156, 0.5
        %v2165 = vadd.f32 %v2157, 0.5
        %v2166 = vadd.f32 %v2158, 0.5
        %v2167 = vadd.f32 %v2159, 0.5
        %v2168 = vadd.f32 %v2160, 0.5
        %v2169 = vadd.f32 %v2161, 0.5
        %v2170 = vpack.c.bf16 %v2162, %v2162
        %v2171 = vpack.c.bf16 %v2163, %v2163
        %v2172 = vpack.c.bf16 %v2164, %v2164
        %v2173 = vpack.c.bf16 %v2165, %v2165
        %v2174 = vpack.c.bf16 %v2166, %v2166
        %v2175 = vpack.c.bf16 %v2167, %v2167
        %v2176 = vpack.c.bf16 %v2168, %v2168
        %v2177 = vpack.c.bf16 %v2169, %v2169
        %v2178 = vunpack.c.l.bf16 %v2106
        %v2179 = vunpack.c.l.bf16 %v2107
        %v2180 = vunpack.c.l.bf16 %v2108
        %v2181 = vunpack.c.l.bf16 %v2109
        %v2182 = vunpack.c.l.bf16 %v2110
        %v2183 = vunpack.c.l.bf16 %v2111
        %v2184 = vunpack.c.l.bf16 %v2112
        %v2185 = vunpack.c.l.bf16 %v2113
        %v2186 = vmul.f32 %v2178, 0.5
        %v2187 = vmul.f32 %v2179, 0.5
        %v2188 = vmul.f32 %v2180, 0.5
        %v2189 = vmul.f32 %v2181, 0.5
        %v2190 = vmul.f32 %v2182, 0.5
        %v2191 = vmul.f32 %v2183, 0.5
        %v2192 = vmul.f32 %v2184, 0.5
        %v2193 = vmul.f32 %v2185, 0.5
        %v2194 = vpack.c.bf16 %v2186, %v2186
        %v2195 = vpack.c.bf16 %v2187, %v2187
        %v2196 = vpack.c.bf16 %v2188, %v2188
        %v2197 = vpack.c.bf16 %v2189, %v2189
        %v2198 = vpack.c.bf16 %v2190, %v2190
        %v2199 = vpack.c.bf16 %v2191, %v2191
        %v2200 = vpack.c.bf16 %v2192, %v2192
        %v2201 = vpack.c.bf16 %v2193, %v2193
        %v2202 = vunpack.c.l.bf16 %v2194
        %v2203 = vunpack.c.l.bf16 %v2195
        %v2204 = vunpack.c.l.bf16 %v2196
        %v2205 = vunpack.c.l.bf16 %v2197
        %v2206 = vunpack.c.l.bf16 %v2198
        %v2207 = vunpack.c.l.bf16 %v2199
        %v2208 = vunpack.c.l.bf16 %v2200
        %v2209 = vunpack.c.l.bf16 %v2201
        %v2210 = vadd.f32 %v2202, 0.5
        %v2211 = vadd.f32 %v2203, 0.5
        %v2212 = vadd.f32 %v2204, 0.5
        %v2213 = vadd.f32 %v2205, 0.5
        %v2214 = vadd.f32 %v2206, 0.5
        %v2215 = vadd.f32 %v2207, 0.5
        %v2216 = vadd.f32 %v2208, 0.5
        %v2217 = vadd.f32 %v2209, 0.5
        %v2218 = vpack.c.bf16 %v2210, %v2210
        %v2219 = vpack.c.bf16 %v2211, %v2211
        %v2220 = vpack.c.bf16 %v2212, %v2212
        %v2221 = vpack.c.bf16 %v2213, %v2213
        %v2222 = vpack.c.bf16 %v2214, %v2214
        %v2223 = vpack.c.bf16 %v2215, %v2215
        %v2224 = vpack.c.bf16 %v2216, %v2216
        %v2225 = vpack.c.bf16 %v2217, %v2217
        %v2226 = vunpack.c.l.bf16 %v2122
        %v2227 = vunpack.c.l.bf16 %v2123
        %v2228 = vunpack.c.l.bf16 %v2124
        %v2229 = vunpack.c.l.bf16 %v2125
        %v2230 = vunpack.c.l.bf16 %v2126
        %v2231 = vunpack.c.l.bf16 %v2127
        %v2232 = vunpack.c.l.bf16 %v2128
        %v2233 = vunpack.c.l.bf16 %v2129
        %v2234 = vmul.f32 %v2226, 0.5
        %v2235 = vmul.f32 %v2227, 0.5
        %v2236 = vmul.f32 %v2228, 0.5
        %v2237 = vmul.f32 %v2229, 0.5
        %v2238 = vmul.f32 %v2230, 0.5
        %v2239 = vmul.f32 %v2231, 0.5
        %v2240 = vmul.f32 %v2232, 0.5
        %v2241 = vmul.f32 %v2233, 0.5
        %v2242 = vpack.c.bf16 %v2234, %v2234
        %v2243 = vpack.c.bf16 %v2235, %v2235
        %v2244 = vpack.c.bf16 %v2236, %v2236
        %v2245 = vpack.c.bf16 %v2237, %v2237
        %v2246 = vpack.c.bf16 %v2238, %v2238
        %v2247 = vpack.c.bf16 %v2239, %v2239
        %v2248 = vpack.c.bf16 %v2240, %v2240
        %v2249 = vpack.c.bf16 %v2241, %v2241
        %v2250 = vunpack.c.l.bf16 %v2242
        %v2251 = vunpack.c.l.bf16 %v2243
        %v2252 = vunpack.c.l.bf16 %v2244
        %v2253 = vunpack.c.l.bf16 %v2245
        %v2254 = vunpack.c.l.bf16 %v2246
        %v2255 = vunpack.c.l.bf16 %v2247
        %v2256 = vunpack.c.l.bf16 %v2248
        %v2257 = vunpack.c.l.bf16 %v2249
        %v2258 = vadd.f32 %v2250, 0.5
        %v2259 = vadd.f32 %v2251, 0.5
        %v2260 = vadd.f32 %v2252, 0.5
        %v2261 = vadd.f32 %v2253, 0.5
        %v2262 = vadd.f32 %v2254, 0.5
        %v2263 = vadd.f32 %v2255, 0.5
        %v2264 = vadd.f32 %v2256, 0.5
        %v2265 = vadd.f32 %v2257, 0.5
        %v2266 = vpack.c.bf16 %v2258, %v2258
        %v2267 = vpack.c.bf16 %v2259, %v2259
        %v2268 = vpack.c.bf16 %v2260, %v2260
        %v2269 = vpack.c.bf16 %v2261, %v2261
        %v2270 = vpack.c.bf16 %v2262, %v2262
        %v2271 = vpack.c.bf16 %v2263, %v2263
        %v2272 = vpack.c.bf16 %v2264, %v2264
        %v2273 = vpack.c.bf16 %v2265, %v2265
        %v2274 = vunpack.c.l.bf16 %v2170
        %v2275 = vunpack.c.l.bf16 %v2171
        %v2276 = vunpack.c.l.bf16 %v2172
        %v2277 = vunpack.c.l.bf16 %v2173
        %v2278 = vunpack.c.l.bf16 %v2174
        %v2279 = vunpack.c.l.bf16 %v2175
        %v2280 = vunpack.c.l.bf16 %v2176
        %v2281 = vunpack.c.l.bf16 %v2177
        %v2282 = vunpack.c.l.bf16 %v2114
        %v2283 = vunpack.c.l.bf16 %v2115
        %v2284 = vunpack.c.l.bf16 %v2116
        %v2285 = vunpack.c.l.bf16 %v2117
        %v2286 = vunpack.c.l.bf16 %v2118
        %v2287 = vunpack.c.l.bf16 %v2119
        %v2288 = vunpack.c.l.bf16 %v2120
        %v2289 = vunpack.c.l.bf16 %v2121
        %v2290 = vmul.f32 %v2274, %v2282
        %v2291 = vmul.f32 %v2275, %v2283
        %v2292 = vmul.f32 %v2276, %v2284
        %v2293 = vmul.f32 %v2277, %v2285
        %v2294 = vmul.f32 %v2278, %v2286
        %v2295 = vmul.f32 %v2279, %v2287
        %v2296 = vmul.f32 %v2280, %v2288
        %v2297 = vmul.f32 %v2281, %v2289
        %v2298 = vpack.c.bf16 %v2290, %v2290
        %v2299 = vpack.c.bf16 %v2291, %v2291
        %v2300 = vpack.c.bf16 %v2292, %v2292
        %v2301 = vpack.c.bf16 %v2293, %v2293
        %v2302 = vpack.c.bf16 %v2294, %v2294
        %v2303 = vpack.c.bf16 %v2295, %v2295
        %v2304 = vpack.c.bf16 %v2296, %v2296
        %v2305 = vpack.c.bf16 %v2297, %v2297
        %v2306 = vunpack.c.l.bf16 %v2298
        %v2307 = vunpack.c.l.bf16 %v2299
        %v2308 = vunpack.c.l.bf16 %v2300
        %v2309 = vunpack.c.l.bf16 %v2301
        %v2310 = vunpack.c.l.bf16 %v2302
        %v2311 = vunpack.c.l.bf16 %v2303
        %v2312 = vunpack.c.l.bf16 %v2304
        %v2313 = vunpack.c.l.bf16 %v2305
        %v2314 = vunpack.c.l.bf16 %v2218
        %v2315 = vunpack.c.l.bf16 %v2219
        %v2316 = vunpack.c.l.bf16 %v2220
        %v2317 = vunpack.c.l.bf16 %v2221
        %v2318 = vunpack.c.l.bf16 %v2222
        %v2319 = vunpack.c.l.bf16 %v2223
        %v2320 = vunpack.c.l.bf16 %v2224
        %v2321 = vunpack.c.l.bf16 %v2225
        %v2322 = vmul.f32 %v2314, %v1750
        %v2323 = vmul.f32 %v2315, %v1751
        %v2324 = vmul.f32 %v2316, %v1752
        %v2325 = vmul.f32 %v2317, %v1753
        %v2326 = vmul.f32 %v2318, %v1754
        %v2327 = vmul.f32 %v2319, %v1755
        %v2328 = vmul.f32 %v2320, %v1756
        %v2329 = vmul.f32 %v2321, %v1757
        %v2330 = vadd.f32 %v2322, %v2306
        %v2331 = vadd.f32 %v2323, %v2307
        %v2332 = vadd.f32 %v2324, %v2308
        %v2333 = vadd.f32 %v2325, %v2309
        %v2334 = vadd.f32 %v2326, %v2310
        %v2335 = vadd.f32 %v2327, %v2311
        %v2336 = vadd.f32 %v2328, %v2312
        %v2337 = vadd.f32 %v2329, %v2313
        %v2338 = vunpack.c.l.bf16 %v2266
        %v2339 = vunpack.c.l.bf16 %v2267
        %v2340 = vunpack.c.l.bf16 %v2268
        %v2341 = vunpack.c.l.bf16 %v2269
        %v2342 = vunpack.c.l.bf16 %v2270
        %v2343 = vunpack.c.l.bf16 %v2271
        %v2344 = vunpack.c.l.bf16 %v2272
        %v2345 = vunpack.c.l.bf16 %v2273
        %v2346 = vtanh.pop %v2330
        %v2347 = vtanh.pop %v2331
        %v2348 = vtanh.pop %v2332
        %v2349 = vtanh.pop %v2333
        %v2350 = vtanh.pop %v2334
        %v2351 = vtanh.pop %v2335
        %v2352 = vtanh.pop %v2336
        %v2353 = vtanh.pop %v2337
        %v2354 = vmul.f32 %v2338, %v2346
        %v2355 = vmul.f32 %v2339, %v2347
        %v2356 = vmul.f32 %v2340, %v2348
        %v2357 = vmul.f32 %v2341, %v2349
        %v2358 = vmul.f32 %v2342, %v2350
        %v2359 = vmul.f32 %v2343, %v2351
        %v2360 = vmul.f32 %v2344, %v2352
        %v2361 = vmul.f32 %v2345, %v2353
        %v2362 = vpack.c.bf16 %v2355, %v2354
        %v2363 = vpack.c.bf16 %v2357, %v2356
        %v2364 = vpack.c.bf16 %v2359, %v2358
        %v2365 = vpack.c.bf16 %v2361, %v2360
        %v2366 = vld [vmem:[%s305 + $0x24] sm:$0xff]
        %v2367 = vld [vmem:[%s305 + $0x2c] sm:$0xf]
        %v2368 = vpack.c.bf16 %v2367, %v2366
        %2369 = vmatpush.bf16.msra.mxu0 0
        %2370 = vmatpush.bf16.msra.mxu0 0
        %2371 = vmatpush.bf16.msra.mxu0 0
        %2372 = vmatpush.bf16.msra.mxu0 0
        %2373 = vmatpush.bf16.msra.mxu0 %v2365
        %2374 = vmatpush.bf16.msra.mxu0 %v2364
        %2375 = vmatpush.bf16.msra.mxu0 %v2363
        %2376 = vmatpush.bf16.msra.mxu0 %v2362
        %2377 = vmatmul.bf16.gmra.mxu0 %v1162
        %v2378 = vpop.f32.mrf.mxu0
        %v2379 = vadd.f32 0.0, %v2378
        %v2380 = vpop.f32.mrf.mxu0
        %v2381 = vadd.f32 0.0, %v2380
        %2382 = vmatmul.bf16.gmra.mxu0 %v1165
        %v2383 = vpop.f32.mrf.mxu0
        %v2384 = vadd.f32 0.0, %v2383
        %v2385 = vpop.f32.mrf.mxu0
        %v2386 = vadd.f32 0.0, %v2385
        %2387 = vmatmul.bf16.gmra.mxu0 %v1168
        %v2388 = vpop.f32.mrf.mxu0
        %v2389 = vadd.f32 0.0, %v2388
        %v2390 = vpop.f32.mrf.mxu0
        %v2391 = vadd.f32 0.0, %v2390
        %2392 = vmatmul.bf16.gmra.mxu0 %v1171
        %v2393 = vpop.f32.mrf.mxu0
        %v2394 = vadd.f32 0.0, %v2393
        %v2395 = vpop.f32.mrf.mxu0
        %v2396 = vadd.f32 0.0, %v2395
        %2397 = vmatmul.bf16.gmra.mxu0 %v1174
        %v2398 = vpop.f32.mrf.mxu0
        %v2399 = vadd.f32 0.0, %v2398
        %v2400 = vpop.f32.mrf.mxu0
        %v2401 = vadd.f32 0.0, %v2400
        %2402 = vmatmul.bf16.gmra.mxu0 %v1177
        %v2403 = vpop.f32.mrf.mxu0
        %v2404 = vadd.f32 0.0, %v2403
        %v2405 = vpop.f32.mrf.mxu0
        %v2406 = vadd.f32 0.0, %v2405
        %2407 = vmatmul.bf16.gmra.mxu0 %v1180
        %v2408 = vpop.f32.mrf.mxu0
        %v2409 = vadd.f32 0.0, %v2408
        %v2410 = vpop.f32.mrf.mxu0
        %v2411 = vadd.f32 0.0, %v2410
        %2412 = vmatmul.bf16.gmra.mxu0 %v1183
        %v2413 = vpop.f32.mrf.mxu0
        %v2414 = vadd.f32 0.0, %v2413
        %v2415 = vpop.f32.mrf.mxu0
        %v2416 = vadd.f32 0.0, %v2415
        %2417 = vmatmul.bf16.gmra.mxu0 %v1186
        %v2418 = vpop.f32.mrf.mxu0
        %v2419 = vadd.f32 0.0, %v2418
        %v2420 = vpop.f32.mrf.mxu0
        %v2421 = vadd.f32 0.0, %v2420
        %2422 = vmatmul.bf16.gmra.mxu0 %v1189
        %v2423 = vpop.f32.mrf.mxu0
        %v2424 = vadd.f32 0.0, %v2423
        %v2425 = vpop.f32.mrf.mxu0
        %v2426 = vadd.f32 0.0, %v2425
        %2427 = vmatmul.bf16.gmra.mxu0 %v1192
        %v2428 = vpop.f32.mrf.mxu0
        %v2429 = vadd.f32 0.0, %v2428
        %v2430 = vpop.f32.mrf.mxu0
        %v2431 = vadd.f32 0.0, %v2430
        %2432 = vmatmul.bf16.gmra.mxu0 %v1195
        %v2433 = vpop.f32.mrf.mxu0
        %v2434 = vadd.f32 0.0, %v2433
        %v2435 = vpop.f32.mrf.mxu0
        %v2436 = vadd.f32 0.0, %v2435
        %2437 = vmatmul.bf16.gmra.mxu0 %v1198
        %v2438 = vpop.f32.mrf.mxu0
        %v2439 = vadd.f32 0.0, %v2438
        %v2440 = vpop.f32.mrf.mxu0
        %v2441 = vadd.f32 0.0, %v2440
        %2442 = vmatmul.bf16.gmra.mxu0 %v1201
        %v2443 = vpop.f32.mrf.mxu0
        %v2444 = vadd.f32 0.0, %v2443
        %v2445 = vpop.f32.mrf.mxu0
        %v2446 = vadd.f32 0.0, %v2445
        %2447 = vmatmul.bf16.gmra.mxu0 %v1204
        %v2448 = vpop.f32.mrf.mxu0
        %v2449 = vadd.f32 0.0, %v2448
        %v2450 = vpop.f32.mrf.mxu0
        %v2451 = vadd.f32 0.0, %v2450
        %2452 = vmatmul.bf16.gmra.mxu0 %v1207
        %v2453 = vpop.f32.mrf.mxu0
        %v2454 = vadd.f32 0.0, %v2453
        %v2455 = vpop.f32.mrf.mxu0
        %v2456 = vadd.f32 0.0, %v2455
        %2457 = vdwg.mxu0
        %v2459 = vsel %vm732, %v2368, 0
        %2461 = vmatpush.bf16.msra.mxu0 0
        %2462 = vmatpush.bf16.msra.mxu0 0
        %2463 = vmatpush.bf16.msra.mxu0 0
        %2464 = vmatpush.bf16.msra.mxu0 0
        %2465 = vmatpush.bf16.msra.mxu0 0
        %2466 = vmatpush.bf16.msra.mxu0 0
        %2467 = vmatpush.bf16.msra.mxu0 0
        %2468 = vmatpush.bf16.msra.mxu0 %v2459
        %2469 = vmatmul.bf16.gmra.mxu0 %v685
        %v2470 = vpop.f32.mrf.mxu0
        %v2471 = vadd.f32 %v2379, %v2470
        %v2472 = vpop.f32.mrf.mxu0
        %v2473 = vadd.f32 %v2381, %v2472
        %2474 = vmatmul.bf16.gmra.mxu0 %v688
        %v2475 = vpop.f32.mrf.mxu0
        %v2476 = vadd.f32 %v2384, %v2475
        %v2477 = vpop.f32.mrf.mxu0
        %v2478 = vadd.f32 %v2386, %v2477
        %2479 = vmatmul.bf16.gmra.mxu0 %v691
        %v2480 = vpop.f32.mrf.mxu0
        %v2481 = vadd.f32 %v2389, %v2480
        %v2482 = vpop.f32.mrf.mxu0
        %v2483 = vadd.f32 %v2391, %v2482
        %2484 = vmatmul.bf16.gmra.mxu0 %v694
        %v2485 = vpop.f32.mrf.mxu0
        %v2486 = vadd.f32 %v2394, %v2485
        %v2487 = vpop.f32.mrf.mxu0
        %v2488 = vadd.f32 %v2396, %v2487
        %2489 = vmatmul.bf16.gmra.mxu0 %v697
        %v2490 = vpop.f32.mrf.mxu0
        %v2491 = vadd.f32 %v2399, %v2490
        %v2492 = vpop.f32.mrf.mxu0
        %v2493 = vadd.f32 %v2401, %v2492
        %2494 = vmatmul.bf16.gmra.mxu0 %v700
        %v2495 = vpop.f32.mrf.mxu0
        %v2496 = vadd.f32 %v2404, %v2495
        %v2497 = vpop.f32.mrf.mxu0
        %v2498 = vadd.f32 %v2406, %v2497
        %2499 = vmatmul.bf16.gmra.mxu0 %v703
        %v2500 = vpop.f32.mrf.mxu0
        %v2501 = vadd.f32 %v2409, %v2500
        %v2502 = vpop.f32.mrf.mxu0
        %v2503 = vadd.f32 %v2411, %v2502
        %2504 = vmatmul.bf16.gmra.mxu0 %v706
        %v2505 = vpop.f32.mrf.mxu0
        %v2506 = vadd.f32 %v2414, %v2505
        %v2507 = vpop.f32.mrf.mxu0
        %v2508 = vadd.f32 %v2416, %v2507
        %2509 = vmatmul.bf16.gmra.mxu0 %v709
        %v2510 = vpop.f32.mrf.mxu0
        %v2511 = vadd.f32 %v2419, %v2510
        %v2512 = vpop.f32.mrf.mxu0
        %v2513 = vadd.f32 %v2421, %v2512
        %2514 = vmatmul.bf16.gmra.mxu0 %v712
        %v2515 = vpop.f32.mrf.mxu0
        %v2516 = vadd.f32 %v2424, %v2515
        %v2517 = vpop.f32.mrf.mxu0
        %v2518 = vadd.f32 %v2426, %v2517
        %2519 = vmatmul.bf16.gmra.mxu0 %v715
        %v2520 = vpop.f32.mrf.mxu0
        %v2521 = vadd.f32 %v2429, %v2520
        %v2522 = vpop.f32.mrf.mxu0
        %v2523 = vadd.f32 %v2431, %v2522
        %2524 = vmatmul.bf16.gmra.mxu0 %v718
        %v2525 = vpop.f32.mrf.mxu0
        %v2526 = vadd.f32 %v2434, %v2525
        %v2527 = vpop.f32.mrf.mxu0
        %v2528 = vadd.f32 %v2436, %v2527
        %2529 = vmatmul.bf16.gmra.mxu0 %v721
        %v2530 = vpop.f32.mrf.mxu0
        %v2531 = vadd.f32 %v2439, %v2530
        %v2532 = vpop.f32.mrf.mxu0
        %v2533 = vadd.f32 %v2441, %v2532
        %2534 = vmatmul.bf16.gmra.mxu0 %v724
        %v2535 = vpop.f32.mrf.mxu0
        %v2536 = vadd.f32 %v2444, %v2535
        %v2537 = vpop.f32.mrf.mxu0
        %v2538 = vadd.f32 %v2446, %v2537
        %2539 = vmatmul.bf16.gmra.mxu0 %v727
        %v2540 = vpop.f32.mrf.mxu0
        %v2541 = vadd.f32 %v2449, %v2540
        %v2542 = vpop.f32.mrf.mxu0
        %v2543 = vadd.f32 %v2451, %v2542
        %2544 = vmatmul.bf16.gmra.mxu0 %v730
        %v2545 = vpop.f32.mrf.mxu0
        %v2546 = vadd.f32 %v2454, %v2545
        %v2547 = vpop.f32.mrf.mxu0
        %v2548 = vadd.f32 %v2456, %v2547
        %2549 = vdwg.mxu0
        %v2550 = vadd.f32 %v2471, %v446
        %v2551 = vadd.f32 %v2473, %v451
        %v2552 = vadd.f32 %v2476, %v456
        %v2553 = vadd.f32 %v2478, %v461
        %v2554 = vadd.f32 %v2481, %v466
        %v2555 = vadd.f32 %v2483, %v471
        %v2556 = vadd.f32 %v2486, %v476
        %v2557 = vadd.f32 %v2488, %v481
        %v2558 = vadd.f32 %v2491, %v486
        %v2559 = vadd.f32 %v2493, %v491
        %v2560 = vadd.f32 %v2496, %v496
        %v2561 = vadd.f32 %v2498, %v501
        %v2562 = vadd.f32 %v2501, %v506
        %v2563 = vadd.f32 %v2503, %v511
        %v2564 = vadd.f32 %v2506, %v516
        %v2565 = vadd.f32 %v2508, %v521
        %v2566 = vadd.f32 %v2511, %v526
        %v2567 = vadd.f32 %v2513, %v531
        %v2568 = vadd.f32 %v2516, %v536
        %v2569 = vadd.f32 %v2518, %v541
        %v2570 = vadd.f32 %v2521, %v546
        %v2571 = vadd.f32 %v2523, %v551
        %v2572 = vadd.f32 %v2526, %v556
        %v2573 = vadd.f32 %v2528, %v561
        %v2574 = vadd.f32 %v2531, %v566
        %v2575 = vadd.f32 %v2533, %v571
        %v2576 = vadd.f32 %v2536, %v576
        %v2577 = vadd.f32 %v2538, %v581
        %v2578 = vadd.f32 %v2541, %v586
        %v2579 = vadd.f32 %v2543, %v591
        %v2580 = vadd.f32 %v2546, %v596
        %v2581 = vadd.f32 %v2548, %v601
        %v2582 = vpack.c.bf16 %v2550, %v2550
        %v2583 = vpack.c.bf16 %v2551, %v2551
        %v2584 = vpack.c.bf16 %v2552, %v2552
        %v2585 = vpack.c.bf16 %v2553, %v2553
        %v2586 = vpack.c.bf16 %v2554, %v2554
        %v2587 = vpack.c.bf16 %v2555, %v2555
        %v2588 = vpack.c.bf16 %v2556, %v2556
        %v2589 = vpack.c.bf16 %v2557, %v2557
        %v2590 = vpack.c.bf16 %v2558, %v2558
        %v2591 = vpack.c.bf16 %v2559, %v2559
        %v2592 = vpack.c.bf16 %v2560, %v2560
        %v2593 = vpack.c.bf16 %v2561, %v2561
        %v2594 = vpack.c.bf16 %v2562, %v2562
        %v2595 = vpack.c.bf16 %v2563, %v2563
        %v2596 = vpack.c.bf16 %v2564, %v2564
        %v2597 = vpack.c.bf16 %v2565, %v2565
        %v2598 = vpack.c.bf16 %v2566, %v2566
        %v2599 = vpack.c.bf16 %v2567, %v2567
        %v2600 = vpack.c.bf16 %v2568, %v2568
        %v2601 = vpack.c.bf16 %v2569, %v2569
        %v2602 = vpack.c.bf16 %v2570, %v2570
        %v2603 = vpack.c.bf16 %v2571, %v2571
        %v2604 = vpack.c.bf16 %v2572, %v2572
        %v2605 = vpack.c.bf16 %v2573, %v2573
        %v2606 = vpack.c.bf16 %v2574, %v2574
        %v2607 = vpack.c.bf16 %v2575, %v2575
        %v2608 = vpack.c.bf16 %v2576, %v2576
        %v2609 = vpack.c.bf16 %v2577, %v2577
        %v2610 = vpack.c.bf16 %v2578, %v2578
        %v2611 = vpack.c.bf16 %v2579, %v2579
        %v2612 = vpack.c.bf16 %v2580, %v2580
        %v2613 = vpack.c.bf16 %v2581, %v2581
        %v2614 = vunpack.c.l.bf16 %v2582
        %v2615 = vunpack.c.l.bf16 %v2583
        %v2616 = vunpack.c.l.bf16 %v2584
        %v2617 = vunpack.c.l.bf16 %v2585
        %v2618 = vunpack.c.l.bf16 %v2586
        %v2619 = vunpack.c.l.bf16 %v2587
        %v2620 = vunpack.c.l.bf16 %v2588
        %v2621 = vunpack.c.l.bf16 %v2589
        %v2622 = vunpack.c.l.bf16 %v2590
        %v2623 = vunpack.c.l.bf16 %v2591
        %v2624 = vunpack.c.l.bf16 %v2592
        %v2625 = vunpack.c.l.bf16 %v2593
        %v2626 = vunpack.c.l.bf16 %v2594
        %v2627 = vunpack.c.l.bf16 %v2595
        %v2628 = vunpack.c.l.bf16 %v2596
        %v2629 = vunpack.c.l.bf16 %v2597
        %v2630 = vunpack.c.l.bf16 %v2598
        %v2631 = vunpack.c.l.bf16 %v2599
        %v2632 = vunpack.c.l.bf16 %v2600
        %v2633 = vunpack.c.l.bf16 %v2601
        %v2634 = vunpack.c.l.bf16 %v2602
        %v2635 = vunpack.c.l.bf16 %v2603
        %v2636 = vunpack.c.l.bf16 %v2604
        %v2637 = vunpack.c.l.bf16 %v2605
        %v2638 = vunpack.c.l.bf16 %v2606
        %v2639 = vunpack.c.l.bf16 %v2607
        %v2640 = vunpack.c.l.bf16 %v2608
        %v2641 = vunpack.c.l.bf16 %v2609
        %v2642 = vunpack.c.l.bf16 %v2610
        %v2643 = vunpack.c.l.bf16 %v2611
        %v2644 = vunpack.c.l.bf16 %v2612
        %v2645 = vunpack.c.l.bf16 %v2613
        %v2646 = vtanh.pop %v2614
        %v2647 = vtanh.pop %v2615
        %v2648 = vtanh.pop %v2616
        %v2649 = vtanh.pop %v2617
        %v2650 = vtanh.pop %v2618
        %v2651 = vtanh.pop %v2619
        %v2652 = vtanh.pop %v2620
        %v2653 = vtanh.pop %v2621
        %v2654 = vtanh.pop %v2622
        %v2655 = vtanh.pop %v2623
        %v2656 = vtanh.pop %v2624
        %v2657 = vtanh.pop %v2625
        %v2658 = vtanh.pop %v2626
        %v2659 = vtanh.pop %v2627
        %v2660 = vtanh.pop %v2628
        %v2661 = vtanh.pop %v2629
        %v2662 = vtanh.pop %v2630
        %v2663 = vtanh.pop %v2631
        %v2664 = vtanh.pop %v2632
        %v2665 = vtanh.pop %v2633
        %v2666 = vtanh.pop %v2634
        %v2667 = vtanh.pop %v2635
        %v2668 = vtanh.pop %v2636
        %v2669 = vtanh.pop %v2637
        %v2670 = vtanh.pop %v2638
        %v2671 = vtanh.pop %v2639
        %v2672 = vtanh.pop %v2640
        %v2673 = vtanh.pop %v2641
        %v2674 = vtanh.pop %v2642
        %v2675 = vtanh.pop %v2643
        %v2676 = vtanh.pop %v2644
        %v2677 = vtanh.pop %v2645
        %v2678 = vpack.c.bf16 %v2646, %v2646
        %v2679 = vpack.c.bf16 %v2647, %v2647
        %v2680 = vpack.c.bf16 %v2648, %v2648
        %v2681 = vpack.c.bf16 %v2649, %v2649
        %v2682 = vpack.c.bf16 %v2650, %v2650
        %v2683 = vpack.c.bf16 %v2651, %v2651
        %v2684 = vpack.c.bf16 %v2652, %v2652
        %v2685 = vpack.c.bf16 %v2653, %v2653
        %v2686 = vpack.c.bf16 %v2654, %v2654
        %v2687 = vpack.c.bf16 %v2655, %v2655
        %v2688 = vpack.c.bf16 %v2656, %v2656
        %v2689 = vpack.c.bf16 %v2657, %v2657
        %v2690 = vpack.c.bf16 %v2658, %v2658
        %v2691 = vpack.c.bf16 %v2659, %v2659
        %v2692 = vpack.c.bf16 %v2660, %v2660
        %v2693 = vpack.c.bf16 %v2661, %v2661
        %v2694 = vpack.c.bf16 %v2662, %v2662
        %v2695 = vpack.c.bf16 %v2663, %v2663
        %v2696 = vpack.c.bf16 %v2664, %v2664
        %v2697 = vpack.c.bf16 %v2665, %v2665
        %v2698 = vpack.c.bf16 %v2666, %v2666
        %v2699 = vpack.c.bf16 %v2667, %v2667
        %v2700 = vpack.c.bf16 %v2668, %v2668
        %v2701 = vpack.c.bf16 %v2669, %v2669
        %v2702 = vpack.c.bf16 %v2670, %v2670
        %v2703 = vpack.c.bf16 %v2671, %v2671
        %v2704 = vpack.c.bf16 %v2672, %v2672
        %v2705 = vpack.c.bf16 %v2673, %v2673
        %v2706 = vpack.c.bf16 %v2674, %v2674
        %v2707 = vpack.c.bf16 %v2675, %v2675
        %v2708 = vpack.c.bf16 %v2676, %v2676
        %v2709 = vpack.c.bf16 %v2677, %v2677
        %v2710 = vunpack.c.l.bf16 %v2678
        %v2711 = vunpack.c.l.bf16 %v2679
        %v2712 = vunpack.c.l.bf16 %v2680
        %v2713 = vunpack.c.l.bf16 %v2681
        %v2714 = vunpack.c.l.bf16 %v2682
        %v2715 = vunpack.c.l.bf16 %v2683
        %v2716 = vunpack.c.l.bf16 %v2684
        %v2717 = vunpack.c.l.bf16 %v2685
        %v2718 = vmul.f32 %v2710, 0.5
        %v2719 = vmul.f32 %v2711, 0.5
        %v2720 = vmul.f32 %v2712, 0.5
        %v2721 = vmul.f32 %v2713, 0.5
        %v2722 = vmul.f32 %v2714, 0.5
        %v2723 = vmul.f32 %v2715, 0.5
        %v2724 = vmul.f32 %v2716, 0.5
        %v2725 = vmul.f32 %v2717, 0.5
        %v2726 = vpack.c.bf16 %v2718, %v2718
        %v2727 = vpack.c.bf16 %v2719, %v2719
        %v2728 = vpack.c.bf16 %v2720, %v2720
        %v2729 = vpack.c.bf16 %v2721, %v2721
        %v2730 = vpack.c.bf16 %v2722, %v2722
        %v2731 = vpack.c.bf16 %v2723, %v2723
        %v2732 = vpack.c.bf16 %v2724, %v2724
        %v2733 = vpack.c.bf16 %v2725, %v2725
        %v2734 = vunpack.c.l.bf16 %v2726
        %v2735 = vunpack.c.l.bf16 %v2727
        %v2736 = vunpack.c.l.bf16 %v2728
        %v2737 = vunpack.c.l.bf16 %v2729
        %v2738 = vunpack.c.l.bf16 %v2730
        %v2739 = vunpack.c.l.bf16 %v2731
        %v2740 = vunpack.c.l.bf16 %v2732
        %v2741 = vunpack.c.l.bf16 %v2733
        %v2742 = vadd.f32 %v2734, 0.5
        %v2743 = vadd.f32 %v2735, 0.5
        %v2744 = vadd.f32 %v2736, 0.5
        %v2745 = vadd.f32 %v2737, 0.5
        %v2746 = vadd.f32 %v2738, 0.5
        %v2747 = vadd.f32 %v2739, 0.5
        %v2748 = vadd.f32 %v2740, 0.5
        %v2749 = vadd.f32 %v2741, 0.5
        %v2750 = vpack.c.bf16 %v2742, %v2742
        %v2751 = vpack.c.bf16 %v2743, %v2743
        %v2752 = vpack.c.bf16 %v2744, %v2744
        %v2753 = vpack.c.bf16 %v2745, %v2745
        %v2754 = vpack.c.bf16 %v2746, %v2746
        %v2755 = vpack.c.bf16 %v2747, %v2747
        %v2756 = vpack.c.bf16 %v2748, %v2748
        %v2757 = vpack.c.bf16 %v2749, %v2749
        %v2758 = vunpack.c.l.bf16 %v2686
        %v2759 = vunpack.c.l.bf16 %v2687
        %v2760 = vunpack.c.l.bf16 %v2688
        %v2761 = vunpack.c.l.bf16 %v2689
        %v2762 = vunpack.c.l.bf16 %v2690
        %v2763 = vunpack.c.l.bf16 %v2691
        %v2764 = vunpack.c.l.bf16 %v2692
        %v2765 = vunpack.c.l.bf16 %v2693
        %v2766 = vmul.f32 %v2758, 0.5
        %v2767 = vmul.f32 %v2759, 0.5
        %v2768 = vmul.f32 %v2760, 0.5
        %v2769 = vmul.f32 %v2761, 0.5
        %v2770 = vmul.f32 %v2762, 0.5
        %v2771 = vmul.f32 %v2763, 0.5
        %v2772 = vmul.f32 %v2764, 0.5
        %v2773 = vmul.f32 %v2765, 0.5
        %v2774 = vpack.c.bf16 %v2766, %v2766
        %v2775 = vpack.c.bf16 %v2767, %v2767
        %v2776 = vpack.c.bf16 %v2768, %v2768
        %v2777 = vpack.c.bf16 %v2769, %v2769
        %v2778 = vpack.c.bf16 %v2770, %v2770
        %v2779 = vpack.c.bf16 %v2771, %v2771
        %v2780 = vpack.c.bf16 %v2772, %v2772
        %v2781 = vpack.c.bf16 %v2773, %v2773
        %v2782 = vunpack.c.l.bf16 %v2774
        %v2783 = vunpack.c.l.bf16 %v2775
        %v2784 = vunpack.c.l.bf16 %v2776
        %v2785 = vunpack.c.l.bf16 %v2777
        %v2786 = vunpack.c.l.bf16 %v2778
        %v2787 = vunpack.c.l.bf16 %v2779
        %v2788 = vunpack.c.l.bf16 %v2780
        %v2789 = vunpack.c.l.bf16 %v2781
        %v2790 = vadd.f32 %v2782, 0.5
        %v2791 = vadd.f32 %v2783, 0.5
        %v2792 = vadd.f32 %v2784, 0.5
        %v2793 = vadd.f32 %v2785, 0.5
        %v2794 = vadd.f32 %v2786, 0.5
        %v2795 = vadd.f32 %v2787, 0.5
        %v2796 = vadd.f32 %v2788, 0.5
        %v2797 = vadd.f32 %v2789, 0.5
        %v2798 = vpack.c.bf16 %v2790, %v2790
        %v2799 = vpack.c.bf16 %v2791, %v2791
        %v2800 = vpack.c.bf16 %v2792, %v2792
        %v2801 = vpack.c.bf16 %v2793, %v2793
        %v2802 = vpack.c.bf16 %v2794, %v2794
        %v2803 = vpack.c.bf16 %v2795, %v2795
        %v2804 = vpack.c.bf16 %v2796, %v2796
        %v2805 = vpack.c.bf16 %v2797, %v2797
        %v2806 = vunpack.c.l.bf16 %v2702
        %v2807 = vunpack.c.l.bf16 %v2703
        %v2808 = vunpack.c.l.bf16 %v2704
        %v2809 = vunpack.c.l.bf16 %v2705
        %v2810 = vunpack.c.l.bf16 %v2706
        %v2811 = vunpack.c.l.bf16 %v2707
        %v2812 = vunpack.c.l.bf16 %v2708
        %v2813 = vunpack.c.l.bf16 %v2709
        %v2814 = vmul.f32 %v2806, 0.5
        %v2815 = vmul.f32 %v2807, 0.5
        %v2816 = vmul.f32 %v2808, 0.5
        %v2817 = vmul.f32 %v2809, 0.5
        %v2818 = vmul.f32 %v2810, 0.5
        %v2819 = vmul.f32 %v2811, 0.5
        %v2820 = vmul.f32 %v2812, 0.5
        %v2821 = vmul.f32 %v2813, 0.5
        %v2822 = vpack.c.bf16 %v2814, %v2814
        %v2823 = vpack.c.bf16 %v2815, %v2815
        %v2824 = vpack.c.bf16 %v2816, %v2816
        %v2825 = vpack.c.bf16 %v2817, %v2817
        %v2826 = vpack.c.bf16 %v2818, %v2818
        %v2827 = vpack.c.bf16 %v2819, %v2819
        %v2828 = vpack.c.bf16 %v2820, %v2820
        %v2829 = vpack.c.bf16 %v2821, %v2821
        %v2830 = vunpack.c.l.bf16 %v2822
        %v2831 = vunpack.c.l.bf16 %v2823
        %v2832 = vunpack.c.l.bf16 %v2824
        %v2833 = vunpack.c.l.bf16 %v2825
        %v2834 = vunpack.c.l.bf16 %v2826
        %v2835 = vunpack.c.l.bf16 %v2827
        %v2836 = vunpack.c.l.bf16 %v2828
        %v2837 = vunpack.c.l.bf16 %v2829
        %v2838 = vadd.f32 %v2830, 0.5
        %v2839 = vadd.f32 %v2831, 0.5
        %v2840 = vadd.f32 %v2832, 0.5
        %v2841 = vadd.f32 %v2833, 0.5
        %v2842 = vadd.f32 %v2834, 0.5
        %v2843 = vadd.f32 %v2835, 0.5
        %v2844 = vadd.f32 %v2836, 0.5
        %v2845 = vadd.f32 %v2837, 0.5
        %v2846 = vpack.c.bf16 %v2838, %v2838
        %v2847 = vpack.c.bf16 %v2839, %v2839
        %v2848 = vpack.c.bf16 %v2840, %v2840
        %v2849 = vpack.c.bf16 %v2841, %v2841
        %v2850 = vpack.c.bf16 %v2842, %v2842
        %v2851 = vpack.c.bf16 %v2843, %v2843
        %v2852 = vpack.c.bf16 %v2844, %v2844
        %v2853 = vpack.c.bf16 %v2845, %v2845
        %v2854 = vunpack.c.l.bf16 %v2750
        %v2855 = vunpack.c.l.bf16 %v2751
        %v2856 = vunpack.c.l.bf16 %v2752
        %v2857 = vunpack.c.l.bf16 %v2753
        %v2858 = vunpack.c.l.bf16 %v2754
        %v2859 = vunpack.c.l.bf16 %v2755
        %v2860 = vunpack.c.l.bf16 %v2756
        %v2861 = vunpack.c.l.bf16 %v2757
        %v2862 = vunpack.c.l.bf16 %v2694
        %v2863 = vunpack.c.l.bf16 %v2695
        %v2864 = vunpack.c.l.bf16 %v2696
        %v2865 = vunpack.c.l.bf16 %v2697
        %v2866 = vunpack.c.l.bf16 %v2698
        %v2867 = vunpack.c.l.bf16 %v2699
        %v2868 = vunpack.c.l.bf16 %v2700
        %v2869 = vunpack.c.l.bf16 %v2701
        %v2870 = vmul.f32 %v2854, %v2862
        %v2871 = vmul.f32 %v2855, %v2863
        %v2872 = vmul.f32 %v2856, %v2864
        %v2873 = vmul.f32 %v2857, %v2865
        %v2874 = vmul.f32 %v2858, %v2866
        %v2875 = vmul.f32 %v2859, %v2867
        %v2876 = vmul.f32 %v2860, %v2868
        %v2877 = vmul.f32 %v2861, %v2869
        %v2878 = vpack.c.bf16 %v2870, %v2870
        %v2879 = vpack.c.bf16 %v2871, %v2871
        %v2880 = vpack.c.bf16 %v2872, %v2872
        %v2881 = vpack.c.bf16 %v2873, %v2873
        %v2882 = vpack.c.bf16 %v2874, %v2874
        %v2883 = vpack.c.bf16 %v2875, %v2875
        %v2884 = vpack.c.bf16 %v2876, %v2876
        %v2885 = vpack.c.bf16 %v2877, %v2877
        %v2886 = vunpack.c.l.bf16 %v2878
        %v2887 = vunpack.c.l.bf16 %v2879
        %v2888 = vunpack.c.l.bf16 %v2880
        %v2889 = vunpack.c.l.bf16 %v2881
        %v2890 = vunpack.c.l.bf16 %v2882
        %v2891 = vunpack.c.l.bf16 %v2883
        %v2892 = vunpack.c.l.bf16 %v2884
        %v2893 = vunpack.c.l.bf16 %v2885
        %v2894 = vunpack.c.l.bf16 %v2798
        %v2895 = vunpack.c.l.bf16 %v2799
        %v2896 = vunpack.c.l.bf16 %v2800
        %v2897 = vunpack.c.l.bf16 %v2801
        %v2898 = vunpack.c.l.bf16 %v2802
        %v2899 = vunpack.c.l.bf16 %v2803
        %v2900 = vunpack.c.l.bf16 %v2804
        %v2901 = vunpack.c.l.bf16 %v2805
        %v2902 = vmul.f32 %v2894, %v2330
        %v2903 = vmul.f32 %v2895, %v2331
        %v2904 = vmul.f32 %v2896, %v2332
        %v2905 = vmul.f32 %v2897, %v2333
        %v2906 = vmul.f32 %v2898, %v2334
        %v2907 = vmul.f32 %v2899, %v2335
        %v2908 = vmul.f32 %v2900, %v2336
        %v2909 = vmul.f32 %v2901, %v2337
        %v2910 = vadd.f32 %v2902, %v2886
        %v2911 = vadd.f32 %v2903, %v2887
        %v2912 = vadd.f32 %v2904, %v2888
        %v2913 = vadd.f32 %v2905, %v2889
        %v2914 = vadd.f32 %v2906, %v2890
        %v2915 = vadd.f32 %v2907, %v2891
        %v2916 = vadd.f32 %v2908, %v2892
        %v2917 = vadd.f32 %v2909, %v2893
        %v2918 = vunpack.c.l.bf16 %v2846
        %v2919 = vunpack.c.l.bf16 %v2847
        %v2920 = vunpack.c.l.bf16 %v2848
        %v2921 = vunpack.c.l.bf16 %v2849
        %v2922 = vunpack.c.l.bf16 %v2850
        %v2923 = vunpack.c.l.bf16 %v2851
        %v2924 = vunpack.c.l.bf16 %v2852
        %v2925 = vunpack.c.l.bf16 %v2853
        %v2926 = vtanh.pop %v2910
        %v2927 = vtanh.pop %v2911
        %v2928 = vtanh.pop %v2912
        %v2929 = vtanh.pop %v2913
        %v2930 = vtanh.pop %v2914
        %v2931 = vtanh.pop %v2915
        %v2932 = vtanh.pop %v2916
        %v2933 = vtanh.pop %v2917
        %v2934 = vmul.f32 %v2918, %v2926
        %v2935 = vmul.f32 %v2919, %v2927
        %v2936 = vmul.f32 %v2920, %v2928
        %v2937 = vmul.f32 %v2921, %v2929
        %v2938 = vmul.f32 %v2922, %v2930
        %v2939 = vmul.f32 %v2923, %v2931
        %v2940 = vmul.f32 %v2924, %v2932
        %v2941 = vmul.f32 %v2925, %v2933
        %v2942 = vpack.c.bf16 %v2935, %v2934
        %v2943 = vpack.c.bf16 %v2937, %v2936
        %v2944 = vpack.c.bf16 %v2939, %v2938
        %v2945 = vpack.c.bf16 %v2941, %v2940
        %v2946 = vld [vmem:[%s305 + $0x30] sm:$0xff]
        %v2947 = vld [vmem:[%s305 + $0x38] sm:$0xf]
        %v2948 = vpack.c.bf16 %v2947, %v2946
        %2949 = vmatpush.bf16.msra.mxu0 0
        %2950 = vmatpush.bf16.msra.mxu0 0
        %2951 = vmatpush.bf16.msra.mxu0 0
        %2952 = vmatpush.bf16.msra.mxu0 0
        %2953 = vmatpush.bf16.msra.mxu0 %v2945
        %2954 = vmatpush.bf16.msra.mxu0 %v2944
        %2955 = vmatpush.bf16.msra.mxu0 %v2943
        %2956 = vmatpush.bf16.msra.mxu0 %v2942
        %2957 = vmatmul.bf16.gmra.mxu0 %v1162
        %v2958 = vpop.f32.mrf.mxu0
        %v2959 = vadd.f32 0.0, %v2958
        %v2960 = vpop.f32.mrf.mxu0
        %v2961 = vadd.f32 0.0, %v2960
        %2962 = vmatmul.bf16.gmra.mxu0 %v1165
        %v2963 = vpop.f32.mrf.mxu0
        %v2964 = vadd.f32 0.0, %v2963
        %v2965 = vpop.f32.mrf.mxu0
        %v2966 = vadd.f32 0.0, %v2965
        %2967 = vmatmul.bf16.gmra.mxu0 %v1168
        %v2968 = vpop.f32.mrf.mxu0
        %v2969 = vadd.f32 0.0, %v2968
        %v2970 = vpop.f32.mrf.mxu0
        %v2971 = vadd.f32 0.0, %v2970
        %2972 = vmatmul.bf16.gmra.mxu0 %v1171
        %v2973 = vpop.f32.mrf.mxu0
        %v2974 = vadd.f32 0.0, %v2973
        %v2975 = vpop.f32.mrf.mxu0
        %v2976 = vadd.f32 0.0, %v2975
        %2977 = vmatmul.bf16.gmra.mxu0 %v1174
        %v2978 = vpop.f32.mrf.mxu0
        %v2979 = vadd.f32 0.0, %v2978
        %v2980 = vpop.f32.mrf.mxu0
        %v2981 = vadd.f32 0.0, %v2980
        %2982 = vmatmul.bf16.gmra.mxu0 %v1177
        %v2983 = vpop.f32.mrf.mxu0
        %v2984 = vadd.f32 0.0, %v2983
        %v2985 = vpop.f32.mrf.mxu0
        %v2986 = vadd.f32 0.0, %v2985
        %2987 = vmatmul.bf16.gmra.mxu0 %v1180
        %v2988 = vpop.f32.mrf.mxu0
        %v2989 = vadd.f32 0.0, %v2988
        %v2990 = vpop.f32.mrf.mxu0
        %v2991 = vadd.f32 0.0, %v2990
        %2992 = vmatmul.bf16.gmra.mxu0 %v1183
        %v2993 = vpop.f32.mrf.mxu0
        %v2994 = vadd.f32 0.0, %v2993
        %v2995 = vpop.f32.mrf.mxu0
        %v2996 = vadd.f32 0.0, %v2995
        %2997 = vmatmul.bf16.gmra.mxu0 %v1186
        %v2998 = vpop.f32.mrf.mxu0
        %v2999 = vadd.f32 0.0, %v2998
        %v3000 = vpop.f32.mrf.mxu0
        %v3001 = vadd.f32 0.0, %v3000
        %3002 = vmatmul.bf16.gmra.mxu0 %v1189
        %v3003 = vpop.f32.mrf.mxu0
        %v3004 = vadd.f32 0.0, %v3003
        %v3005 = vpop.f32.mrf.mxu0
        %v3006 = vadd.f32 0.0, %v3005
        %3007 = vmatmul.bf16.gmra.mxu0 %v1192
        %v3008 = vpop.f32.mrf.mxu0
        %v3009 = vadd.f32 0.0, %v3008
        %v3010 = vpop.f32.mrf.mxu0
        %v3011 = vadd.f32 0.0, %v3010
        %3012 = vmatmul.bf16.gmra.mxu0 %v1195
        %v3013 = vpop.f32.mrf.mxu0
        %v3014 = vadd.f32 0.0, %v3013
        %v3015 = vpop.f32.mrf.mxu0
        %v3016 = vadd.f32 0.0, %v3015
        %3017 = vmatmul.bf16.gmra.mxu0 %v1198
        %v3018 = vpop.f32.mrf.mxu0
        %v3019 = vadd.f32 0.0, %v3018
        %v3020 = vpop.f32.mrf.mxu0
        %v3021 = vadd.f32 0.0, %v3020
        %3022 = vmatmul.bf16.gmra.mxu0 %v1201
        %v3023 = vpop.f32.mrf.mxu0
        %v3024 = vadd.f32 0.0, %v3023
        %v3025 = vpop.f32.mrf.mxu0
        %v3026 = vadd.f32 0.0, %v3025
        %3027 = vmatmul.bf16.gmra.mxu0 %v1204
        %v3028 = vpop.f32.mrf.mxu0
        %v3029 = vadd.f32 0.0, %v3028
        %v3030 = vpop.f32.mrf.mxu0
        %v3031 = vadd.f32 0.0, %v3030
        %3032 = vmatmul.bf16.gmra.mxu0 %v1207
        %v3033 = vpop.f32.mrf.mxu0
        %v3034 = vadd.f32 0.0, %v3033
        %v3035 = vpop.f32.mrf.mxu0
        %v3036 = vadd.f32 0.0, %v3035
        %3037 = vdwg.mxu0
        %v3039 = vsel %vm732, %v2948, 0
        %3041 = vmatpush.bf16.msra.mxu0 0
        %3042 = vmatpush.bf16.msra.mxu0 0
        %3043 = vmatpush.bf16.msra.mxu0 0
        %3044 = vmatpush.bf16.msra.mxu0 0
        %3045 = vmatpush.bf16.msra.mxu0 0
        %3046 = vmatpush.bf16.msra.mxu0 0
        %3047 = vmatpush.bf16.msra.mxu0 0
        %3048 = vmatpush.bf16.msra.mxu0 %v3039
        %3049 = vmatmul.bf16.gmra.mxu0 %v685
        %v3050 = vpop.f32.mrf.mxu0
        %v3051 = vadd.f32 %v2959, %v3050
        %v3052 = vpop.f32.mrf.mxu0
        %v3053 = vadd.f32 %v2961, %v3052
        %3054 = vmatmul.bf16.gmra.mxu0 %v688
        %v3055 = vpop.f32.mrf.mxu0
        %v3056 = vadd.f32 %v2964, %v3055
        %v3057 = vpop.f32.mrf.mxu0
        %v3058 = vadd.f32 %v2966, %v3057
        %3059 = vmatmul.bf16.gmra.mxu0 %v691
        %v3060 = vpop.f32.mrf.mxu0
        %v3061 = vadd.f32 %v2969, %v3060
        %v3062 = vpop.f32.mrf.mxu0
        %v3063 = vadd.f32 %v2971, %v3062
        %3064 = vmatmul.bf16.gmra.mxu0 %v694
        %v3065 = vpop.f32.mrf.mxu0
        %v3066 = vadd.f32 %v2974, %v3065
        %v3067 = vpop.f32.mrf.mxu0
        %v3068 = vadd.f32 %v2976, %v3067
        %3069 = vmatmul.bf16.gmra.mxu0 %v697
        %v3070 = vpop.f32.mrf.mxu0
        %v3071 = vadd.f32 %v2979, %v3070
        %v3072 = vpop.f32.mrf.mxu0
        %v3073 = vadd.f32 %v2981, %v3072
        %3074 = vmatmul.bf16.gmra.mxu0 %v700
        %v3075 = vpop.f32.mrf.mxu0
        %v3076 = vadd.f32 %v2984, %v3075
        %v3077 = vpop.f32.mrf.mxu0
        %v3078 = vadd.f32 %v2986, %v3077
        %3079 = vmatmul.bf16.gmra.mxu0 %v703
        %v3080 = vpop.f32.mrf.mxu0
        %v3081 = vadd.f32 %v2989, %v3080
        %v3082 = vpop.f32.mrf.mxu0
        %v3083 = vadd.f32 %v2991, %v3082
        %3084 = vmatmul.bf16.gmra.mxu0 %v706
        %v3085 = vpop.f32.mrf.mxu0
        %v3086 = vadd.f32 %v2994, %v3085
        %v3087 = vpop.f32.mrf.mxu0
        %v3088 = vadd.f32 %v2996, %v3087
        %3089 = vmatmul.bf16.gmra.mxu0 %v709
        %v3090 = vpop.f32.mrf.mxu0
        %v3091 = vadd.f32 %v2999, %v3090
        %v3092 = vpop.f32.mrf.mxu0
        %v3093 = vadd.f32 %v3001, %v3092
        %3094 = vmatmul.bf16.gmra.mxu0 %v712
        %v3095 = vpop.f32.mrf.mxu0
        %v3096 = vadd.f32 %v3004, %v3095
        %v3097 = vpop.f32.mrf.mxu0
        %v3098 = vadd.f32 %v3006, %v3097
        %3099 = vmatmul.bf16.gmra.mxu0 %v715
        %v3100 = vpop.f32.mrf.mxu0
        %v3101 = vadd.f32 %v3009, %v3100
        %v3102 = vpop.f32.mrf.mxu0
        %v3103 = vadd.f32 %v3011, %v3102
        %3104 = vmatmul.bf16.gmra.mxu0 %v718
        %v3105 = vpop.f32.mrf.mxu0
        %v3106 = vadd.f32 %v3014, %v3105
        %v3107 = vpop.f32.mrf.mxu0
        %v3108 = vadd.f32 %v3016, %v3107
        %3109 = vmatmul.bf16.gmra.mxu0 %v721
        %v3110 = vpop.f32.mrf.mxu0
        %v3111 = vadd.f32 %v3019, %v3110
        %v3112 = vpop.f32.mrf.mxu0
        %v3113 = vadd.f32 %v3021, %v3112
        %3114 = vmatmul.bf16.gmra.mxu0 %v724
        %v3115 = vpop.f32.mrf.mxu0
        %v3116 = vadd.f32 %v3024, %v3115
        %v3117 = vpop.f32.mrf.mxu0
        %v3118 = vadd.f32 %v3026, %v3117
        %3119 = vmatmul.bf16.gmra.mxu0 %v727
        %v3120 = vpop.f32.mrf.mxu0
        %v3121 = vadd.f32 %v3029, %v3120
        %v3122 = vpop.f32.mrf.mxu0
        %v3123 = vadd.f32 %v3031, %v3122
        %3124 = vmatmul.bf16.gmra.mxu0 %v730
        %v3125 = vpop.f32.mrf.mxu0
        %v3126 = vadd.f32 %v3034, %v3125
        %v3127 = vpop.f32.mrf.mxu0
        %v3128 = vadd.f32 %v3036, %v3127
        %3129 = vdwg.mxu0
        %v3130 = vadd.f32 %v3051, %v446
        %v3131 = vadd.f32 %v3053, %v451
        %v3132 = vadd.f32 %v3056, %v456
        %v3133 = vadd.f32 %v3058, %v461
        %v3134 = vadd.f32 %v3061, %v466
        %v3135 = vadd.f32 %v3063, %v471
        %v3136 = vadd.f32 %v3066, %v476
        %v3137 = vadd.f32 %v3068, %v481
        %v3138 = vadd.f32 %v3071, %v486
        %v3139 = vadd.f32 %v3073, %v491
        %v3140 = vadd.f32 %v3076, %v496
        %v3141 = vadd.f32 %v3078, %v501
        %v3142 = vadd.f32 %v3081, %v506
        %v3143 = vadd.f32 %v3083, %v511
        %v3144 = vadd.f32 %v3086, %v516
        %v3145 = vadd.f32 %v3088, %v521
        %v3146 = vadd.f32 %v3091, %v526
        %v3147 = vadd.f32 %v3093, %v531
        %v3148 = vadd.f32 %v3096, %v536
        %v3149 = vadd.f32 %v3098, %v541
        %v3150 = vadd.f32 %v3101, %v546
        %v3151 = vadd.f32 %v3103, %v551
        %v3152 = vadd.f32 %v3106, %v556
        %v3153 = vadd.f32 %v3108, %v561
        %v3154 = vadd.f32 %v3111, %v566
        %v3155 = vadd.f32 %v3113, %v571
        %v3156 = vadd.f32 %v3116, %v576
        %v3157 = vadd.f32 %v3118, %v581
        %v3158 = vadd.f32 %v3121, %v586
        %v3159 = vadd.f32 %v3123, %v591
        %v3160 = vadd.f32 %v3126, %v596
        %v3161 = vadd.f32 %v3128, %v601
        %v3162 = vpack.c.bf16 %v3130, %v3130
        %v3163 = vpack.c.bf16 %v3131, %v3131
        %v3164 = vpack.c.bf16 %v3132, %v3132
        %v3165 = vpack.c.bf16 %v3133, %v3133
        %v3166 = vpack.c.bf16 %v3134, %v3134
        %v3167 = vpack.c.bf16 %v3135, %v3135
        %v3168 = vpack.c.bf16 %v3136, %v3136
        %v3169 = vpack.c.bf16 %v3137, %v3137
        %v3170 = vpack.c.bf16 %v3138, %v3138
        %v3171 = vpack.c.bf16 %v3139, %v3139
        %v3172 = vpack.c.bf16 %v3140, %v3140
        %v3173 = vpack.c.bf16 %v3141, %v3141
        %v3174 = vpack.c.bf16 %v3142, %v3142
        %v3175 = vpack.c.bf16 %v3143, %v3143
        %v3176 = vpack.c.bf16 %v3144, %v3144
        %v3177 = vpack.c.bf16 %v3145, %v3145
        %v3178 = vpack.c.bf16 %v3146, %v3146
        %v3179 = vpack.c.bf16 %v3147, %v3147
        %v3180 = vpack.c.bf16 %v3148, %v3148
        %v3181 = vpack.c.bf16 %v3149, %v3149
        %v3182 = vpack.c.bf16 %v3150, %v3150
        %v3183 = vpack.c.bf16 %v3151, %v3151
        %v3184 = vpack.c.bf16 %v3152, %v3152
        %v3185 = vpack.c.bf16 %v3153, %v3153
        %v3186 = vpack.c.bf16 %v3154, %v3154
        %v3187 = vpack.c.bf16 %v3155, %v3155
        %v3188 = vpack.c.bf16 %v3156, %v3156
        %v3189 = vpack.c.bf16 %v3157, %v3157
        %v3190 = vpack.c.bf16 %v3158, %v3158
        %v3191 = vpack.c.bf16 %v3159, %v3159
        %v3192 = vpack.c.bf16 %v3160, %v3160
        %v3193 = vpack.c.bf16 %v3161, %v3161
        %v3194 = vunpack.c.l.bf16 %v3162
        %v3195 = vunpack.c.l.bf16 %v3163
        %v3196 = vunpack.c.l.bf16 %v3164
        %v3197 = vunpack.c.l.bf16 %v3165
        %v3198 = vunpack.c.l.bf16 %v3166
        %v3199 = vunpack.c.l.bf16 %v3167
        %v3200 = vunpack.c.l.bf16 %v3168
        %v3201 = vunpack.c.l.bf16 %v3169
        %v3202 = vunpack.c.l.bf16 %v3170
        %v3203 = vunpack.c.l.bf16 %v3171
        %v3204 = vunpack.c.l.bf16 %v3172
        %v3205 = vunpack.c.l.bf16 %v3173
        %v3206 = vunpack.c.l.bf16 %v3174
        %v3207 = vunpack.c.l.bf16 %v3175
        %v3208 = vunpack.c.l.bf16 %v3176
        %v3209 = vunpack.c.l.bf16 %v3177
        %v3210 = vunpack.c.l.bf16 %v3178
        %v3211 = vunpack.c.l.bf16 %v3179
        %v3212 = vunpack.c.l.bf16 %v3180
        %v3213 = vunpack.c.l.bf16 %v3181
        %v3214 = vunpack.c.l.bf16 %v3182
        %v3215 = vunpack.c.l.bf16 %v3183
        %v3216 = vunpack.c.l.bf16 %v3184
        %v3217 = vunpack.c.l.bf16 %v3185
        %v3218 = vunpack.c.l.bf16 %v3186
        %v3219 = vunpack.c.l.bf16 %v3187
        %v3220 = vunpack.c.l.bf16 %v3188
        %v3221 = vunpack.c.l.bf16 %v3189
        %v3222 = vunpack.c.l.bf16 %v3190
        %v3223 = vunpack.c.l.bf16 %v3191
        %v3224 = vunpack.c.l.bf16 %v3192
        %v3225 = vunpack.c.l.bf16 %v3193
        %v3226 = vtanh.pop %v3194
        %v3227 = vtanh.pop %v3195
        %v3228 = vtanh.pop %v3196
        %v3229 = vtanh.pop %v3197
        %v3230 = vtanh.pop %v3198
        %v3231 = vtanh.pop %v3199
        %v3232 = vtanh.pop %v3200
        %v3233 = vtanh.pop %v3201
        %v3234 = vtanh.pop %v3202
        %v3235 = vtanh.pop %v3203
        %v3236 = vtanh.pop %v3204
        %v3237 = vtanh.pop %v3205
        %v3238 = vtanh.pop %v3206
        %v3239 = vtanh.pop %v3207
        %v3240 = vtanh.pop %v3208
        %v3241 = vtanh.pop %v3209
        %v3242 = vtanh.pop %v3210
        %v3243 = vtanh.pop %v3211
        %v3244 = vtanh.pop %v3212
        %v3245 = vtanh.pop %v3213
        %v3246 = vtanh.pop %v3214
        %v3247 = vtanh.pop %v3215
        %v3248 = vtanh.pop %v3216
        %v3249 = vtanh.pop %v3217
        %v3250 = vtanh.pop %v3218
        %v3251 = vtanh.pop %v3219
        %v3252 = vtanh.pop %v3220
        %v3253 = vtanh.pop %v3221
        %v3254 = vtanh.pop %v3222
        %v3255 = vtanh.pop %v3223
        %v3256 = vtanh.pop %v3224
        %v3257 = vtanh.pop %v3225
        %v3258 = vpack.c.bf16 %v3226, %v3226
        %v3259 = vpack.c.bf16 %v3227, %v3227
        %v3260 = vpack.c.bf16 %v3228, %v3228
        %v3261 = vpack.c.bf16 %v3229, %v3229
        %v3262 = vpack.c.bf16 %v3230, %v3230
        %v3263 = vpack.c.bf16 %v3231, %v3231
        %v3264 = vpack.c.bf16 %v3232, %v3232
        %v3265 = vpack.c.bf16 %v3233, %v3233
        %v3266 = vpack.c.bf16 %v3234, %v3234
        %v3267 = vpack.c.bf16 %v3235, %v3235
        %v3268 = vpack.c.bf16 %v3236, %v3236
        %v3269 = vpack.c.bf16 %v3237, %v3237
        %v3270 = vpack.c.bf16 %v3238, %v3238
        %v3271 = vpack.c.bf16 %v3239, %v3239
        %v3272 = vpack.c.bf16 %v3240, %v3240
        %v3273 = vpack.c.bf16 %v3241, %v3241
        %v3274 = vpack.c.bf16 %v3242, %v3242
        %v3275 = vpack.c.bf16 %v3243, %v3243
        %v3276 = vpack.c.bf16 %v3244, %v3244
        %v3277 = vpack.c.bf16 %v3245, %v3245
        %v3278 = vpack.c.bf16 %v3246, %v3246
        %v3279 = vpack.c.bf16 %v3247, %v3247
        %v3280 = vpack.c.bf16 %v3248, %v3248
        %v3281 = vpack.c.bf16 %v3249, %v3249
        %v3282 = vpack.c.bf16 %v3250, %v3250
        %v3283 = vpack.c.bf16 %v3251, %v3251
        %v3284 = vpack.c.bf16 %v3252, %v3252
        %v3285 = vpack.c.bf16 %v3253, %v3253
        %v3286 = vpack.c.bf16 %v3254, %v3254
        %v3287 = vpack.c.bf16 %v3255, %v3255
        %v3288 = vpack.c.bf16 %v3256, %v3256
        %v3289 = vpack.c.bf16 %v3257, %v3257
        %v3290 = vunpack.c.l.bf16 %v3258
        %v3291 = vunpack.c.l.bf16 %v3259
        %v3292 = vunpack.c.l.bf16 %v3260
        %v3293 = vunpack.c.l.bf16 %v3261
        %v3294 = vunpack.c.l.bf16 %v3262
        %v3295 = vunpack.c.l.bf16 %v3263
        %v3296 = vunpack.c.l.bf16 %v3264
        %v3297 = vunpack.c.l.bf16 %v3265
        %v3298 = vmul.f32 %v3290, 0.5
        %v3299 = vmul.f32 %v3291, 0.5
        %v3300 = vmul.f32 %v3292, 0.5
        %v3301 = vmul.f32 %v3293, 0.5
        %v3302 = vmul.f32 %v3294, 0.5
        %v3303 = vmul.f32 %v3295, 0.5
        %v3304 = vmul.f32 %v3296, 0.5
        %v3305 = vmul.f32 %v3297, 0.5
        %v3306 = vpack.c.bf16 %v3298, %v3298
        %v3307 = vpack.c.bf16 %v3299, %v3299
        %v3308 = vpack.c.bf16 %v3300, %v3300
        %v3309 = vpack.c.bf16 %v3301, %v3301
        %v3310 = vpack.c.bf16 %v3302, %v3302
        %v3311 = vpack.c.bf16 %v3303, %v3303
        %v3312 = vpack.c.bf16 %v3304, %v3304
        %v3313 = vpack.c.bf16 %v3305, %v3305
        %v3314 = vunpack.c.l.bf16 %v3306
        %v3315 = vunpack.c.l.bf16 %v3307
        %v3316 = vunpack.c.l.bf16 %v3308
        %v3317 = vunpack.c.l.bf16 %v3309
        %v3318 = vunpack.c.l.bf16 %v3310
        %v3319 = vunpack.c.l.bf16 %v3311
        %v3320 = vunpack.c.l.bf16 %v3312
        %v3321 = vunpack.c.l.bf16 %v3313
        %v3322 = vadd.f32 %v3314, 0.5
        %v3323 = vadd.f32 %v3315, 0.5
        %v3324 = vadd.f32 %v3316, 0.5
        %v3325 = vadd.f32 %v3317, 0.5
        %v3326 = vadd.f32 %v3318, 0.5
        %v3327 = vadd.f32 %v3319, 0.5
        %v3328 = vadd.f32 %v3320, 0.5
        %v3329 = vadd.f32 %v3321, 0.5
        %v3330 = vpack.c.bf16 %v3322, %v3322
        %v3331 = vpack.c.bf16 %v3323, %v3323
        %v3332 = vpack.c.bf16 %v3324, %v3324
        %v3333 = vpack.c.bf16 %v3325, %v3325
        %v3334 = vpack.c.bf16 %v3326, %v3326
        %v3335 = vpack.c.bf16 %v3327, %v3327
        %v3336 = vpack.c.bf16 %v3328, %v3328
        %v3337 = vpack.c.bf16 %v3329, %v3329
        %v3338 = vunpack.c.l.bf16 %v3266
        %v3339 = vunpack.c.l.bf16 %v3267
        %v3340 = vunpack.c.l.bf16 %v3268
        %v3341 = vunpack.c.l.bf16 %v3269
        %v3342 = vunpack.c.l.bf16 %v3270
        %v3343 = vunpack.c.l.bf16 %v3271
        %v3344 = vunpack.c.l.bf16 %v3272
        %v3345 = vunpack.c.l.bf16 %v3273
        %v3346 = vmul.f32 %v3338, 0.5
        %v3347 = vmul.f32 %v3339, 0.5
        %v3348 = vmul.f32 %v3340, 0.5
        %v3349 = vmul.f32 %v3341, 0.5
        %v3350 = vmul.f32 %v3342, 0.5
        %v3351 = vmul.f32 %v3343, 0.5
        %v3352 = vmul.f32 %v3344, 0.5
        %v3353 = vmul.f32 %v3345, 0.5
        %v3354 = vpack.c.bf16 %v3346, %v3346
        %v3355 = vpack.c.bf16 %v3347, %v3347
        %v3356 = vpack.c.bf16 %v3348, %v3348
        %v3357 = vpack.c.bf16 %v3349, %v3349
        %v3358 = vpack.c.bf16 %v3350, %v3350
        %v3359 = vpack.c.bf16 %v3351, %v3351
        %v3360 = vpack.c.bf16 %v3352, %v3352
        %v3361 = vpack.c.bf16 %v3353, %v3353
        %v3362 = vunpack.c.l.bf16 %v3354
        %v3363 = vunpack.c.l.bf16 %v3355
        %v3364 = vunpack.c.l.bf16 %v3356
        %v3365 = vunpack.c.l.bf16 %v3357
        %v3366 = vunpack.c.l.bf16 %v3358
        %v3367 = vunpack.c.l.bf16 %v3359
        %v3368 = vunpack.c.l.bf16 %v3360
        %v3369 = vunpack.c.l.bf16 %v3361
        %v3370 = vadd.f32 %v3362, 0.5
        %v3371 = vadd.f32 %v3363, 0.5
        %v3372 = vadd.f32 %v3364, 0.5
        %v3373 = vadd.f32 %v3365, 0.5
        %v3374 = vadd.f32 %v3366, 0.5
        %v3375 = vadd.f32 %v3367, 0.5
        %v3376 = vadd.f32 %v3368, 0.5
        %v3377 = vadd.f32 %v3369, 0.5
        %v3378 = vpack.c.bf16 %v3370, %v3370
        %v3379 = vpack.c.bf16 %v3371, %v3371
        %v3380 = vpack.c.bf16 %v3372, %v3372
        %v3381 = vpack.c.bf16 %v3373, %v3373
        %v3382 = vpack.c.bf16 %v3374, %v3374
        %v3383 = vpack.c.bf16 %v3375, %v3375
        %v3384 = vpack.c.bf16 %v3376, %v3376
        %v3385 = vpack.c.bf16 %v3377, %v3377
        %v3386 = vunpack.c.l.bf16 %v3282
        %v3387 = vunpack.c.l.bf16 %v3283
        %v3388 = vunpack.c.l.bf16 %v3284
        %v3389 = vunpack.c.l.bf16 %v3285
        %v3390 = vunpack.c.l.bf16 %v3286
        %v3391 = vunpack.c.l.bf16 %v3287
        %v3392 = vunpack.c.l.bf16 %v3288
        %v3393 = vunpack.c.l.bf16 %v3289
        %v3394 = vmul.f32 %v3386, 0.5
        %v3395 = vmul.f32 %v3387, 0.5
        %v3396 = vmul.f32 %v3388, 0.5
        %v3397 = vmul.f32 %v3389, 0.5
        %v3398 = vmul.f32 %v3390, 0.5
        %v3399 = vmul.f32 %v3391, 0.5
        %v3400 = vmul.f32 %v3392, 0.5
        %v3401 = vmul.f32 %v3393, 0.5
        %v3402 = vpack.c.bf16 %v3394, %v3394
        %v3403 = vpack.c.bf16 %v3395, %v3395
        %v3404 = vpack.c.bf16 %v3396, %v3396
        %v3405 = vpack.c.bf16 %v3397, %v3397
        %v3406 = vpack.c.bf16 %v3398, %v3398
        %v3407 = vpack.c.bf16 %v3399, %v3399
        %v3408 = vpack.c.bf16 %v3400, %v3400
        %v3409 = vpack.c.bf16 %v3401, %v3401
        %v3410 = vunpack.c.l.bf16 %v3402
        %v3411 = vunpack.c.l.bf16 %v3403
        %v3412 = vunpack.c.l.bf16 %v3404
        %v3413 = vunpack.c.l.bf16 %v3405
        %v3414 = vunpack.c.l.bf16 %v3406
        %v3415 = vunpack.c.l.bf16 %v3407
        %v3416 = vunpack.c.l.bf16 %v3408
        %v3417 = vunpack.c.l.bf16 %v3409
        %v3418 = vadd.f32 %v3410, 0.5
        %v3419 = vadd.f32 %v3411, 0.5
        %v3420 = vadd.f32 %v3412, 0.5
        %v3421 = vadd.f32 %v3413, 0.5
        %v3422 = vadd.f32 %v3414, 0.5
        %v3423 = vadd.f32 %v3415, 0.5
        %v3424 = vadd.f32 %v3416, 0.5
        %v3425 = vadd.f32 %v3417, 0.5
        %v3426 = vpack.c.bf16 %v3418, %v3418
        %v3427 = vpack.c.bf16 %v3419, %v3419
        %v3428 = vpack.c.bf16 %v3420, %v3420
        %v3429 = vpack.c.bf16 %v3421, %v3421
        %v3430 = vpack.c.bf16 %v3422, %v3422
        %v3431 = vpack.c.bf16 %v3423, %v3423
        %v3432 = vpack.c.bf16 %v3424, %v3424
        %v3433 = vpack.c.bf16 %v3425, %v3425
        %v3434 = vunpack.c.l.bf16 %v3330
        %v3435 = vunpack.c.l.bf16 %v3331
        %v3436 = vunpack.c.l.bf16 %v3332
        %v3437 = vunpack.c.l.bf16 %v3333
        %v3438 = vunpack.c.l.bf16 %v3334
        %v3439 = vunpack.c.l.bf16 %v3335
        %v3440 = vunpack.c.l.bf16 %v3336
        %v3441 = vunpack.c.l.bf16 %v3337
        %v3442 = vunpack.c.l.bf16 %v3274
        %v3443 = vunpack.c.l.bf16 %v3275
        %v3444 = vunpack.c.l.bf16 %v3276
        %v3445 = vunpack.c.l.bf16 %v3277
        %v3446 = vunpack.c.l.bf16 %v3278
        %v3447 = vunpack.c.l.bf16 %v3279
        %v3448 = vunpack.c.l.bf16 %v3280
        %v3449 = vunpack.c.l.bf16 %v3281
        %v3450 = vmul.f32 %v3434, %v3442
        %v3451 = vmul.f32 %v3435, %v3443
        %v3452 = vmul.f32 %v3436, %v3444
        %v3453 = vmul.f32 %v3437, %v3445
        %v3454 = vmul.f32 %v3438, %v3446
        %v3455 = vmul.f32 %v3439, %v3447
        %v3456 = vmul.f32 %v3440, %v3448
        %v3457 = vmul.f32 %v3441, %v3449
        %v3458 = vpack.c.bf16 %v3450, %v3450
        %v3459 = vpack.c.bf16 %v3451, %v3451
        %v3460 = vpack.c.bf16 %v3452, %v3452
        %v3461 = vpack.c.bf16 %v3453, %v3453
        %v3462 = vpack.c.bf16 %v3454, %v3454
        %v3463 = vpack.c.bf16 %v3455, %v3455
        %v3464 = vpack.c.bf16 %v3456, %v3456
        %v3465 = vpack.c.bf16 %v3457, %v3457
        %v3466 = vunpack.c.l.bf16 %v3458
        %v3467 = vunpack.c.l.bf16 %v3459
        %v3468 = vunpack.c.l.bf16 %v3460
        %v3469 = vunpack.c.l.bf16 %v3461
        %v3470 = vunpack.c.l.bf16 %v3462
        %v3471 = vunpack.c.l.bf16 %v3463
        %v3472 = vunpack.c.l.bf16 %v3464
        %v3473 = vunpack.c.l.bf16 %v3465
        %v3474 = vunpack.c.l.bf16 %v3378
        %v3475 = vunpack.c.l.bf16 %v3379
        %v3476 = vunpack.c.l.bf16 %v3380
        %v3477 = vunpack.c.l.bf16 %v3381
        %v3478 = vunpack.c.l.bf16 %v3382
        %v3479 = vunpack.c.l.bf16 %v3383
        %v3480 = vunpack.c.l.bf16 %v3384
        %v3481 = vunpack.c.l.bf16 %v3385
        %v3482 = vmul.f32 %v3474, %v2910
        %v3483 = vmul.f32 %v3475, %v2911
        %v3484 = vmul.f32 %v3476, %v2912
        %v3485 = vmul.f32 %v3477, %v2913
        %v3486 = vmul.f32 %v3478, %v2914
        %v3487 = vmul.f32 %v3479, %v2915
        %v3488 = vmul.f32 %v3480, %v2916
        %v3489 = vmul.f32 %v3481, %v2917
        %v3490 = vadd.f32 %v3482, %v3466
        %v3491 = vadd.f32 %v3483, %v3467
        %v3492 = vadd.f32 %v3484, %v3468
        %v3493 = vadd.f32 %v3485, %v3469
        %v3494 = vadd.f32 %v3486, %v3470
        %v3495 = vadd.f32 %v3487, %v3471
        %v3496 = vadd.f32 %v3488, %v3472
        %v3497 = vadd.f32 %v3489, %v3473
        %v3498 = vunpack.c.l.bf16 %v3426
        %v3499 = vunpack.c.l.bf16 %v3427
        %v3500 = vunpack.c.l.bf16 %v3428
        %v3501 = vunpack.c.l.bf16 %v3429
        %v3502 = vunpack.c.l.bf16 %v3430
        %v3503 = vunpack.c.l.bf16 %v3431
        %v3504 = vunpack.c.l.bf16 %v3432
        %v3505 = vunpack.c.l.bf16 %v3433
        %v3506 = vtanh.pop %v3490
        %v3507 = vtanh.pop %v3491
        %v3508 = vtanh.pop %v3492
        %v3509 = vtanh.pop %v3493
        %v3510 = vtanh.pop %v3494
        %v3511 = vtanh.pop %v3495
        %v3512 = vtanh.pop %v3496
        %v3513 = vtanh.pop %v3497
        %v3514 = vmul.f32 %v3498, %v3506
        %v3515 = vmul.f32 %v3499, %v3507
        %v3516 = vmul.f32 %v3500, %v3508
        %v3517 = vmul.f32 %v3501, %v3509
        %v3518 = vmul.f32 %v3502, %v3510
        %v3519 = vmul.f32 %v3503, %v3511
        %v3520 = vmul.f32 %v3504, %v3512
        %v3521 = vmul.f32 %v3505, %v3513
        %v3522 = vpack.c.bf16 %v3515, %v3514
        %v3523 = vpack.c.bf16 %v3517, %v3516
        %v3524 = vpack.c.bf16 %v3519, %v3518
        %v3525 = vpack.c.bf16 %v3521, %v3520
        %v3526 = vld [vmem:[%s305 + $0x3c] sm:$0xff]
        %v3527 = vld [vmem:[%s305 + $0x44] sm:$0xf]
        %v3528 = vpack.c.bf16 %v3527, %v3526
        %3529 = vmatpush.bf16.msra.mxu0 0
        %3530 = vmatpush.bf16.msra.mxu0 0
        %3531 = vmatpush.bf16.msra.mxu0 0
        %3532 = vmatpush.bf16.msra.mxu0 0
        %3533 = vmatpush.bf16.msra.mxu0 %v3525
        %3534 = vmatpush.bf16.msra.mxu0 %v3524
        %3535 = vmatpush.bf16.msra.mxu0 %v3523
        %3536 = vmatpush.bf16.msra.mxu0 %v3522
        %3537 = vmatmul.bf16.gmra.mxu0 %v1162
        %v3538 = vpop.f32.mrf.mxu0
        %v3539 = vadd.f32 0.0, %v3538
        %v3540 = vpop.f32.mrf.mxu0
        %v3541 = vadd.f32 0.0, %v3540
        %3542 = vmatmul.bf16.gmra.mxu0 %v1165
        %v3543 = vpop.f32.mrf.mxu0
        %v3544 = vadd.f32 0.0, %v3543
        %v3545 = vpop.f32.mrf.mxu0
        %v3546 = vadd.f32 0.0, %v3545
        %3547 = vmatmul.bf16.gmra.mxu0 %v1168
        %v3548 = vpop.f32.mrf.mxu0
        %v3549 = vadd.f32 0.0, %v3548
        %v3550 = vpop.f32.mrf.mxu0
        %v3551 = vadd.f32 0.0, %v3550
        %3552 = vmatmul.bf16.gmra.mxu0 %v1171
        %v3553 = vpop.f32.mrf.mxu0
        %v3554 = vadd.f32 0.0, %v3553
        %v3555 = vpop.f32.mrf.mxu0
        %v3556 = vadd.f32 0.0, %v3555
        %3557 = vmatmul.bf16.gmra.mxu0 %v1174
        %v3558 = vpop.f32.mrf.mxu0
        %v3559 = vadd.f32 0.0, %v3558
        %v3560 = vpop.f32.mrf.mxu0
        %v3561 = vadd.f32 0.0, %v3560
        %3562 = vmatmul.bf16.gmra.mxu0 %v1177
        %v3563 = vpop.f32.mrf.mxu0
        %v3564 = vadd.f32 0.0, %v3563
        %v3565 = vpop.f32.mrf.mxu0
        %v3566 = vadd.f32 0.0, %v3565
        %3567 = vmatmul.bf16.gmra.mxu0 %v1180
        %v3568 = vpop.f32.mrf.mxu0
        %v3569 = vadd.f32 0.0, %v3568
        %v3570 = vpop.f32.mrf.mxu0
        %v3571 = vadd.f32 0.0, %v3570
        %3572 = vmatmul.bf16.gmra.mxu0 %v1183
        %v3573 = vpop.f32.mrf.mxu0
        %v3574 = vadd.f32 0.0, %v3573
        %v3575 = vpop.f32.mrf.mxu0
        %v3576 = vadd.f32 0.0, %v3575
        %3577 = vmatmul.bf16.gmra.mxu0 %v1186
        %v3578 = vpop.f32.mrf.mxu0
        %v3579 = vadd.f32 0.0, %v3578
        %v3580 = vpop.f32.mrf.mxu0
        %v3581 = vadd.f32 0.0, %v3580
        %3582 = vmatmul.bf16.gmra.mxu0 %v1189
        %v3583 = vpop.f32.mrf.mxu0
        %v3584 = vadd.f32 0.0, %v3583
        %v3585 = vpop.f32.mrf.mxu0
        %v3586 = vadd.f32 0.0, %v3585
        %3587 = vmatmul.bf16.gmra.mxu0 %v1192
        %v3588 = vpop.f32.mrf.mxu0
        %v3589 = vadd.f32 0.0, %v3588
        %v3590 = vpop.f32.mrf.mxu0
        %v3591 = vadd.f32 0.0, %v3590
        %3592 = vmatmul.bf16.gmra.mxu0 %v1195
        %v3593 = vpop.f32.mrf.mxu0
        %v3594 = vadd.f32 0.0, %v3593
        %v3595 = vpop.f32.mrf.mxu0
        %v3596 = vadd.f32 0.0, %v3595
        %3597 = vmatmul.bf16.gmra.mxu0 %v1198
        %v3598 = vpop.f32.mrf.mxu0
        %v3599 = vadd.f32 0.0, %v3598
        %v3600 = vpop.f32.mrf.mxu0
        %v3601 = vadd.f32 0.0, %v3600
        %3602 = vmatmul.bf16.gmra.mxu0 %v1201
        %v3603 = vpop.f32.mrf.mxu0
        %v3604 = vadd.f32 0.0, %v3603
        %v3605 = vpop.f32.mrf.mxu0
        %v3606 = vadd.f32 0.0, %v3605
        %3607 = vmatmul.bf16.gmra.mxu0 %v1204
        %v3608 = vpop.f32.mrf.mxu0
        %v3609 = vadd.f32 0.0, %v3608
        %v3610 = vpop.f32.mrf.mxu0
        %v3611 = vadd.f32 0.0, %v3610
        %3612 = vmatmul.bf16.gmra.mxu0 %v1207
        %v3613 = vpop.f32.mrf.mxu0
        %v3614 = vadd.f32 0.0, %v3613
        %v3615 = vpop.f32.mrf.mxu0
        %v3616 = vadd.f32 0.0, %v3615
        %3617 = vdwg.mxu0
        %v3619 = vsel %vm732, %v3528, 0
        %3621 = vmatpush.bf16.msra.mxu0 0
        %3622 = vmatpush.bf16.msra.mxu0 0
        %3623 = vmatpush.bf16.msra.mxu0 0
        %3624 = vmatpush.bf16.msra.mxu0 0
        %3625 = vmatpush.bf16.msra.mxu0 0
        %3626 = vmatpush.bf16.msra.mxu0 0
        %3627 = vmatpush.bf16.msra.mxu0 0
        %3628 = vmatpush.bf16.msra.mxu0 %v3619
        %3629 = vmatmul.bf16.gmra.mxu0 %v685
        %v3630 = vpop.f32.mrf.mxu0
        %v3631 = vadd.f32 %v3539, %v3630
        %v3632 = vpop.f32.mrf.mxu0
        %v3633 = vadd.f32 %v3541, %v3632
        %3634 = vmatmul.bf16.gmra.mxu0 %v688
        %v3635 = vpop.f32.mrf.mxu0
        %v3636 = vadd.f32 %v3544, %v3635
        %v3637 = vpop.f32.mrf.mxu0
        %v3638 = vadd.f32 %v3546, %v3637
        %3639 = vmatmul.bf16.gmra.mxu0 %v691
        %v3640 = vpop.f32.mrf.mxu0
        %v3641 = vadd.f32 %v3549, %v3640
        %v3642 = vpop.f32.mrf.mxu0
        %v3643 = vadd.f32 %v3551, %v3642
        %3644 = vmatmul.bf16.gmra.mxu0 %v694
        %v3645 = vpop.f32.mrf.mxu0
        %v3646 = vadd.f32 %v3554, %v3645
        %v3647 = vpop.f32.mrf.mxu0
        %v3648 = vadd.f32 %v3556, %v3647
        %3649 = vmatmul.bf16.gmra.mxu0 %v697
        %v3650 = vpop.f32.mrf.mxu0
        %v3651 = vadd.f32 %v3559, %v3650
        %v3652 = vpop.f32.mrf.mxu0
        %v3653 = vadd.f32 %v3561, %v3652
        %3654 = vmatmul.bf16.gmra.mxu0 %v700
        %v3655 = vpop.f32.mrf.mxu0
        %v3656 = vadd.f32 %v3564, %v3655
        %v3657 = vpop.f32.mrf.mxu0
        %v3658 = vadd.f32 %v3566, %v3657
        %3659 = vmatmul.bf16.gmra.mxu0 %v703
        %v3660 = vpop.f32.mrf.mxu0
        %v3661 = vadd.f32 %v3569, %v3660
        %v3662 = vpop.f32.mrf.mxu0
        %v3663 = vadd.f32 %v3571, %v3662
        %3664 = vmatmul.bf16.gmra.mxu0 %v706
        %v3665 = vpop.f32.mrf.mxu0
        %v3666 = vadd.f32 %v3574, %v3665
        %v3667 = vpop.f32.mrf.mxu0
        %v3668 = vadd.f32 %v3576, %v3667
        %3669 = vmatmul.bf16.gmra.mxu0 %v709
        %v3670 = vpop.f32.mrf.mxu0
        %v3671 = vadd.f32 %v3579, %v3670
        %v3672 = vpop.f32.mrf.mxu0
        %v3673 = vadd.f32 %v3581, %v3672
        %3674 = vmatmul.bf16.gmra.mxu0 %v712
        %v3675 = vpop.f32.mrf.mxu0
        %v3676 = vadd.f32 %v3584, %v3675
        %v3677 = vpop.f32.mrf.mxu0
        %v3678 = vadd.f32 %v3586, %v3677
        %3679 = vmatmul.bf16.gmra.mxu0 %v715
        %v3680 = vpop.f32.mrf.mxu0
        %v3681 = vadd.f32 %v3589, %v3680
        %v3682 = vpop.f32.mrf.mxu0
        %v3683 = vadd.f32 %v3591, %v3682
        %3684 = vmatmul.bf16.gmra.mxu0 %v718
        %v3685 = vpop.f32.mrf.mxu0
        %v3686 = vadd.f32 %v3594, %v3685
        %v3687 = vpop.f32.mrf.mxu0
        %v3688 = vadd.f32 %v3596, %v3687
        %3689 = vmatmul.bf16.gmra.mxu0 %v721
        %v3690 = vpop.f32.mrf.mxu0
        %v3691 = vadd.f32 %v3599, %v3690
        %v3692 = vpop.f32.mrf.mxu0
        %v3693 = vadd.f32 %v3601, %v3692
        %3694 = vmatmul.bf16.gmra.mxu0 %v724
        %v3695 = vpop.f32.mrf.mxu0
        %v3696 = vadd.f32 %v3604, %v3695
        %v3697 = vpop.f32.mrf.mxu0
        %v3698 = vadd.f32 %v3606, %v3697
        %3699 = vmatmul.bf16.gmra.mxu0 %v727
        %v3700 = vpop.f32.mrf.mxu0
        %v3701 = vadd.f32 %v3609, %v3700
        %v3702 = vpop.f32.mrf.mxu0
        %v3703 = vadd.f32 %v3611, %v3702
        %3704 = vmatmul.bf16.gmra.mxu0 %v730
        %v3705 = vpop.f32.mrf.mxu0
        %v3706 = vadd.f32 %v3614, %v3705
        %v3707 = vpop.f32.mrf.mxu0
        %v3708 = vadd.f32 %v3616, %v3707
        %3709 = vdwg.mxu0
        %v3710 = vadd.f32 %v3631, %v446
        %v3711 = vadd.f32 %v3633, %v451
        %v3712 = vadd.f32 %v3636, %v456
        %v3713 = vadd.f32 %v3638, %v461
        %v3714 = vadd.f32 %v3641, %v466
        %v3715 = vadd.f32 %v3643, %v471
        %v3716 = vadd.f32 %v3646, %v476
        %v3717 = vadd.f32 %v3648, %v481
        %v3718 = vadd.f32 %v3651, %v486
        %v3719 = vadd.f32 %v3653, %v491
        %v3720 = vadd.f32 %v3656, %v496
        %v3721 = vadd.f32 %v3658, %v501
        %v3722 = vadd.f32 %v3661, %v506
        %v3723 = vadd.f32 %v3663, %v511
        %v3724 = vadd.f32 %v3666, %v516
        %v3725 = vadd.f32 %v3668, %v521
        %v3726 = vadd.f32 %v3671, %v526
        %v3727 = vadd.f32 %v3673, %v531
        %v3728 = vadd.f32 %v3676, %v536
        %v3729 = vadd.f32 %v3678, %v541
        %v3730 = vadd.f32 %v3681, %v546
        %v3731 = vadd.f32 %v3683, %v551
        %v3732 = vadd.f32 %v3686, %v556
        %v3733 = vadd.f32 %v3688, %v561
        %v3734 = vadd.f32 %v3691, %v566
        %v3735 = vadd.f32 %v3693, %v571
        %v3736 = vadd.f32 %v3696, %v576
        %v3737 = vadd.f32 %v3698, %v581
        %v3738 = vadd.f32 %v3701, %v586
        %v3739 = vadd.f32 %v3703, %v591
        %v3740 = vadd.f32 %v3706, %v596
        %v3741 = vadd.f32 %v3708, %v601
        %v3742 = vpack.c.bf16 %v3710, %v3710
        %v3743 = vpack.c.bf16 %v3711, %v3711
        %v3744 = vpack.c.bf16 %v3712, %v3712
        %v3745 = vpack.c.bf16 %v3713, %v3713
        %v3746 = vpack.c.bf16 %v3714, %v3714
        %v3747 = vpack.c.bf16 %v3715, %v3715
        %v3748 = vpack.c.bf16 %v3716, %v3716
        %v3749 = vpack.c.bf16 %v3717, %v3717
        %v3750 = vpack.c.bf16 %v3718, %v3718
        %v3751 = vpack.c.bf16 %v3719, %v3719
        %v3752 = vpack.c.bf16 %v3720, %v3720
        %v3753 = vpack.c.bf16 %v3721, %v3721
        %v3754 = vpack.c.bf16 %v3722, %v3722
        %v3755 = vpack.c.bf16 %v3723, %v3723
        %v3756 = vpack.c.bf16 %v3724, %v3724
        %v3757 = vpack.c.bf16 %v3725, %v3725
        %v3758 = vpack.c.bf16 %v3726, %v3726
        %v3759 = vpack.c.bf16 %v3727, %v3727
        %v3760 = vpack.c.bf16 %v3728, %v3728
        %v3761 = vpack.c.bf16 %v3729, %v3729
        %v3762 = vpack.c.bf16 %v3730, %v3730
        %v3763 = vpack.c.bf16 %v3731, %v3731
        %v3764 = vpack.c.bf16 %v3732, %v3732
        %v3765 = vpack.c.bf16 %v3733, %v3733
        %v3766 = vpack.c.bf16 %v3734, %v3734
        %v3767 = vpack.c.bf16 %v3735, %v3735
        %v3768 = vpack.c.bf16 %v3736, %v3736
        %v3769 = vpack.c.bf16 %v3737, %v3737
        %v3770 = vpack.c.bf16 %v3738, %v3738
        %v3771 = vpack.c.bf16 %v3739, %v3739
        %v3772 = vpack.c.bf16 %v3740, %v3740
        %v3773 = vpack.c.bf16 %v3741, %v3741
        %v3774 = vunpack.c.l.bf16 %v3742
        %v3775 = vunpack.c.l.bf16 %v3743
        %v3776 = vunpack.c.l.bf16 %v3744
        %v3777 = vunpack.c.l.bf16 %v3745
        %v3778 = vunpack.c.l.bf16 %v3746
        %v3779 = vunpack.c.l.bf16 %v3747
        %v3780 = vunpack.c.l.bf16 %v3748
        %v3781 = vunpack.c.l.bf16 %v3749
        %v3782 = vunpack.c.l.bf16 %v3750
        %v3783 = vunpack.c.l.bf16 %v3751
        %v3784 = vunpack.c.l.bf16 %v3752
        %v3785 = vunpack.c.l.bf16 %v3753
        %v3786 = vunpack.c.l.bf16 %v3754
        %v3787 = vunpack.c.l.bf16 %v3755
        %v3788 = vunpack.c.l.bf16 %v3756
        %v3789 = vunpack.c.l.bf16 %v3757
        %v3790 = vunpack.c.l.bf16 %v3758
        %v3791 = vunpack.c.l.bf16 %v3759
        %v3792 = vunpack.c.l.bf16 %v3760
        %v3793 = vunpack.c.l.bf16 %v3761
        %v3794 = vunpack.c.l.bf16 %v3762
        %v3795 = vunpack.c.l.bf16 %v3763
        %v3796 = vunpack.c.l.bf16 %v3764
        %v3797 = vunpack.c.l.bf16 %v3765
        %v3798 = vunpack.c.l.bf16 %v3766
        %v3799 = vunpack.c.l.bf16 %v3767
        %v3800 = vunpack.c.l.bf16 %v3768
        %v3801 = vunpack.c.l.bf16 %v3769
        %v3802 = vunpack.c.l.bf16 %v3770
        %v3803 = vunpack.c.l.bf16 %v3771
        %v3804 = vunpack.c.l.bf16 %v3772
        %v3805 = vunpack.c.l.bf16 %v3773
        %v3806 = vtanh.pop %v3774
        %v3807 = vtanh.pop %v3775
        %v3808 = vtanh.pop %v3776
        %v3809 = vtanh.pop %v3777
        %v3810 = vtanh.pop %v3778
        %v3811 = vtanh.pop %v3779
        %v3812 = vtanh.pop %v3780
        %v3813 = vtanh.pop %v3781
        %v3814 = vtanh.pop %v3782
        %v3815 = vtanh.pop %v3783
        %v3816 = vtanh.pop %v3784
        %v3817 = vtanh.pop %v3785
        %v3818 = vtanh.pop %v3786
        %v3819 = vtanh.pop %v3787
        %v3820 = vtanh.pop %v3788
        %v3821 = vtanh.pop %v3789
        %v3822 = vtanh.pop %v3790
        %v3823 = vtanh.pop %v3791
        %v3824 = vtanh.pop %v3792
        %v3825 = vtanh.pop %v3793
        %v3826 = vtanh.pop %v3794
        %v3827 = vtanh.pop %v3795
        %v3828 = vtanh.pop %v3796
        %v3829 = vtanh.pop %v3797
        %v3830 = vtanh.pop %v3798
        %v3831 = vtanh.pop %v3799
        %v3832 = vtanh.pop %v3800
        %v3833 = vtanh.pop %v3801
        %v3834 = vtanh.pop %v3802
        %v3835 = vtanh.pop %v3803
        %v3836 = vtanh.pop %v3804
        %v3837 = vtanh.pop %v3805
        %v3838 = vpack.c.bf16 %v3806, %v3806
        %v3839 = vpack.c.bf16 %v3807, %v3807
        %v3840 = vpack.c.bf16 %v3808, %v3808
        %v3841 = vpack.c.bf16 %v3809, %v3809
        %v3842 = vpack.c.bf16 %v3810, %v3810
        %v3843 = vpack.c.bf16 %v3811, %v3811
        %v3844 = vpack.c.bf16 %v3812, %v3812
        %v3845 = vpack.c.bf16 %v3813, %v3813
        %v3846 = vpack.c.bf16 %v3814, %v3814
        %v3847 = vpack.c.bf16 %v3815, %v3815
        %v3848 = vpack.c.bf16 %v3816, %v3816
        %v3849 = vpack.c.bf16 %v3817, %v3817
        %v3850 = vpack.c.bf16 %v3818, %v3818
        %v3851 = vpack.c.bf16 %v3819, %v3819
        %v3852 = vpack.c.bf16 %v3820, %v3820
        %v3853 = vpack.c.bf16 %v3821, %v3821
        %v3854 = vpack.c.bf16 %v3822, %v3822
        %v3855 = vpack.c.bf16 %v3823, %v3823
        %v3856 = vpack.c.bf16 %v3824, %v3824
        %v3857 = vpack.c.bf16 %v3825, %v3825
        %v3858 = vpack.c.bf16 %v3826, %v3826
        %v3859 = vpack.c.bf16 %v3827, %v3827
        %v3860 = vpack.c.bf16 %v3828, %v3828
        %v3861 = vpack.c.bf16 %v3829, %v3829
        %v3862 = vpack.c.bf16 %v3830, %v3830
        %v3863 = vpack.c.bf16 %v3831, %v3831
        %v3864 = vpack.c.bf16 %v3832, %v3832
        %v3865 = vpack.c.bf16 %v3833, %v3833
        %v3866 = vpack.c.bf16 %v3834, %v3834
        %v3867 = vpack.c.bf16 %v3835, %v3835
        %v3868 = vpack.c.bf16 %v3836, %v3836
        %v3869 = vpack.c.bf16 %v3837, %v3837
        %v3870 = vunpack.c.l.bf16 %v3838
        %v3871 = vunpack.c.l.bf16 %v3839
        %v3872 = vunpack.c.l.bf16 %v3840
        %v3873 = vunpack.c.l.bf16 %v3841
        %v3874 = vunpack.c.l.bf16 %v3842
        %v3875 = vunpack.c.l.bf16 %v3843
        %v3876 = vunpack.c.l.bf16 %v3844
        %v3877 = vunpack.c.l.bf16 %v3845
        %v3878 = vmul.f32 %v3870, 0.5
        %v3879 = vmul.f32 %v3871, 0.5
        %v3880 = vmul.f32 %v3872, 0.5
        %v3881 = vmul.f32 %v3873, 0.5
        %v3882 = vmul.f32 %v3874, 0.5
        %v3883 = vmul.f32 %v3875, 0.5
        %v3884 = vmul.f32 %v3876, 0.5
        %v3885 = vmul.f32 %v3877, 0.5
        %v3886 = vpack.c.bf16 %v3878, %v3878
        %v3887 = vpack.c.bf16 %v3879, %v3879
        %v3888 = vpack.c.bf16 %v3880, %v3880
        %v3889 = vpack.c.bf16 %v3881, %v3881
        %v3890 = vpack.c.bf16 %v3882, %v3882
        %v3891 = vpack.c.bf16 %v3883, %v3883
        %v3892 = vpack.c.bf16 %v3884, %v3884
        %v3893 = vpack.c.bf16 %v3885, %v3885
        %v3894 = vunpack.c.l.bf16 %v3886
        %v3895 = vunpack.c.l.bf16 %v3887
        %v3896 = vunpack.c.l.bf16 %v3888
        %v3897 = vunpack.c.l.bf16 %v3889
        %v3898 = vunpack.c.l.bf16 %v3890
        %v3899 = vunpack.c.l.bf16 %v3891
        %v3900 = vunpack.c.l.bf16 %v3892
        %v3901 = vunpack.c.l.bf16 %v3893
        %v3902 = vadd.f32 %v3894, 0.5
        %v3903 = vadd.f32 %v3895, 0.5
        %v3904 = vadd.f32 %v3896, 0.5
        %v3905 = vadd.f32 %v3897, 0.5
        %v3906 = vadd.f32 %v3898, 0.5
        %v3907 = vadd.f32 %v3899, 0.5
        %v3908 = vadd.f32 %v3900, 0.5
        %v3909 = vadd.f32 %v3901, 0.5
        %v3910 = vpack.c.bf16 %v3902, %v3902
        %v3911 = vpack.c.bf16 %v3903, %v3903
        %v3912 = vpack.c.bf16 %v3904, %v3904
        %v3913 = vpack.c.bf16 %v3905, %v3905
        %v3914 = vpack.c.bf16 %v3906, %v3906
        %v3915 = vpack.c.bf16 %v3907, %v3907
        %v3916 = vpack.c.bf16 %v3908, %v3908
        %v3917 = vpack.c.bf16 %v3909, %v3909
        %v3918 = vunpack.c.l.bf16 %v3846
        %v3919 = vunpack.c.l.bf16 %v3847
        %v3920 = vunpack.c.l.bf16 %v3848
        %v3921 = vunpack.c.l.bf16 %v3849
        %v3922 = vunpack.c.l.bf16 %v3850
        %v3923 = vunpack.c.l.bf16 %v3851
        %v3924 = vunpack.c.l.bf16 %v3852
        %v3925 = vunpack.c.l.bf16 %v3853
        %v3926 = vmul.f32 %v3918, 0.5
        %v3927 = vmul.f32 %v3919, 0.5
        %v3928 = vmul.f32 %v3920, 0.5
        %v3929 = vmul.f32 %v3921, 0.5
        %v3930 = vmul.f32 %v3922, 0.5
        %v3931 = vmul.f32 %v3923, 0.5
        %v3932 = vmul.f32 %v3924, 0.5
        %v3933 = vmul.f32 %v3925, 0.5
        %v3934 = vpack.c.bf16 %v3926, %v3926
        %v3935 = vpack.c.bf16 %v3927, %v3927
        %v3936 = vpack.c.bf16 %v3928, %v3928
        %v3937 = vpack.c.bf16 %v3929, %v3929
        %v3938 = vpack.c.bf16 %v3930, %v3930
        %v3939 = vpack.c.bf16 %v3931, %v3931
        %v3940 = vpack.c.bf16 %v3932, %v3932
        %v3941 = vpack.c.bf16 %v3933, %v3933
        %v3942 = vunpack.c.l.bf16 %v3934
        %v3943 = vunpack.c.l.bf16 %v3935
        %v3944 = vunpack.c.l.bf16 %v3936
        %v3945 = vunpack.c.l.bf16 %v3937
        %v3946 = vunpack.c.l.bf16 %v3938
        %v3947 = vunpack.c.l.bf16 %v3939
        %v3948 = vunpack.c.l.bf16 %v3940
        %v3949 = vunpack.c.l.bf16 %v3941
        %v3950 = vadd.f32 %v3942, 0.5
        %v3951 = vadd.f32 %v3943, 0.5
        %v3952 = vadd.f32 %v3944, 0.5
        %v3953 = vadd.f32 %v3945, 0.5
        %v3954 = vadd.f32 %v3946, 0.5
        %v3955 = vadd.f32 %v3947, 0.5
        %v3956 = vadd.f32 %v3948, 0.5
        %v3957 = vadd.f32 %v3949, 0.5
        %v3958 = vpack.c.bf16 %v3950, %v3950
        %v3959 = vpack.c.bf16 %v3951, %v3951
        %v3960 = vpack.c.bf16 %v3952, %v3952
        %v3961 = vpack.c.bf16 %v3953, %v3953
        %v3962 = vpack.c.bf16 %v3954, %v3954
        %v3963 = vpack.c.bf16 %v3955, %v3955
        %v3964 = vpack.c.bf16 %v3956, %v3956
        %v3965 = vpack.c.bf16 %v3957, %v3957
        %v3966 = vunpack.c.l.bf16 %v3862
        %v3967 = vunpack.c.l.bf16 %v3863
        %v3968 = vunpack.c.l.bf16 %v3864
        %v3969 = vunpack.c.l.bf16 %v3865
        %v3970 = vunpack.c.l.bf16 %v3866
        %v3971 = vunpack.c.l.bf16 %v3867
        %v3972 = vunpack.c.l.bf16 %v3868
        %v3973 = vunpack.c.l.bf16 %v3869
        %v3974 = vmul.f32 %v3966, 0.5
        %v3975 = vmul.f32 %v3967, 0.5
        %v3976 = vmul.f32 %v3968, 0.5
        %v3977 = vmul.f32 %v3969, 0.5
        %v3978 = vmul.f32 %v3970, 0.5
        %v3979 = vmul.f32 %v3971, 0.5
        %v3980 = vmul.f32 %v3972, 0.5
        %v3981 = vmul.f32 %v3973, 0.5
        %v3982 = vpack.c.bf16 %v3974, %v3974
        %v3983 = vpack.c.bf16 %v3975, %v3975
        %v3984 = vpack.c.bf16 %v3976, %v3976
        %v3985 = vpack.c.bf16 %v3977, %v3977
        %v3986 = vpack.c.bf16 %v3978, %v3978
        %v3987 = vpack.c.bf16 %v3979, %v3979
        %v3988 = vpack.c.bf16 %v3980, %v3980
        %v3989 = vpack.c.bf16 %v3981, %v3981
        %v3990 = vunpack.c.l.bf16 %v3982
        %v3991 = vunpack.c.l.bf16 %v3983
        %v3992 = vunpack.c.l.bf16 %v3984
        %v3993 = vunpack.c.l.bf16 %v3985
        %v3994 = vunpack.c.l.bf16 %v3986
        %v3995 = vunpack.c.l.bf16 %v3987
        %v3996 = vunpack.c.l.bf16 %v3988
        %v3997 = vunpack.c.l.bf16 %v3989
        %v3998 = vadd.f32 %v3990, 0.5
        %v3999 = vadd.f32 %v3991, 0.5
        %v4000 = vadd.f32 %v3992, 0.5
        %v4001 = vadd.f32 %v3993, 0.5
        %v4002 = vadd.f32 %v3994, 0.5
        %v4003 = vadd.f32 %v3995, 0.5
        %v4004 = vadd.f32 %v3996, 0.5
        %v4005 = vadd.f32 %v3997, 0.5
        %v4006 = vpack.c.bf16 %v3998, %v3998
        %v4007 = vpack.c.bf16 %v3999, %v3999
        %v4008 = vpack.c.bf16 %v4000, %v4000
        %v4009 = vpack.c.bf16 %v4001, %v4001
        %v4010 = vpack.c.bf16 %v4002, %v4002
        %v4011 = vpack.c.bf16 %v4003, %v4003
        %v4012 = vpack.c.bf16 %v4004, %v4004
        %v4013 = vpack.c.bf16 %v4005, %v4005
        %v4014 = vunpack.c.l.bf16 %v3910
        %v4015 = vunpack.c.l.bf16 %v3911
        %v4016 = vunpack.c.l.bf16 %v3912
        %v4017 = vunpack.c.l.bf16 %v3913
        %v4018 = vunpack.c.l.bf16 %v3914
        %v4019 = vunpack.c.l.bf16 %v3915
        %v4020 = vunpack.c.l.bf16 %v3916
        %v4021 = vunpack.c.l.bf16 %v3917
        %v4022 = vunpack.c.l.bf16 %v3854
        %v4023 = vunpack.c.l.bf16 %v3855
        %v4024 = vunpack.c.l.bf16 %v3856
        %v4025 = vunpack.c.l.bf16 %v3857
        %v4026 = vunpack.c.l.bf16 %v3858
        %v4027 = vunpack.c.l.bf16 %v3859
        %v4028 = vunpack.c.l.bf16 %v3860
        %v4029 = vunpack.c.l.bf16 %v3861
        %v4030 = vmul.f32 %v4014, %v4022
        %v4031 = vmul.f32 %v4015, %v4023
        %v4032 = vmul.f32 %v4016, %v4024
        %v4033 = vmul.f32 %v4017, %v4025
        %v4034 = vmul.f32 %v4018, %v4026
        %v4035 = vmul.f32 %v4019, %v4027
        %v4036 = vmul.f32 %v4020, %v4028
        %v4037 = vmul.f32 %v4021, %v4029
        %v4038 = vpack.c.bf16 %v4030, %v4030
        %v4039 = vpack.c.bf16 %v4031, %v4031
        %v4040 = vpack.c.bf16 %v4032, %v4032
        %v4041 = vpack.c.bf16 %v4033, %v4033
        %v4042 = vpack.c.bf16 %v4034, %v4034
        %v4043 = vpack.c.bf16 %v4035, %v4035
        %v4044 = vpack.c.bf16 %v4036, %v4036
        %v4045 = vpack.c.bf16 %v4037, %v4037
        %v4046 = vunpack.c.l.bf16 %v4038
        %v4047 = vunpack.c.l.bf16 %v4039
        %v4048 = vunpack.c.l.bf16 %v4040
        %v4049 = vunpack.c.l.bf16 %v4041
        %v4050 = vunpack.c.l.bf16 %v4042
        %v4051 = vunpack.c.l.bf16 %v4043
        %v4052 = vunpack.c.l.bf16 %v4044
        %v4053 = vunpack.c.l.bf16 %v4045
        %v4054 = vunpack.c.l.bf16 %v3958
        %v4055 = vunpack.c.l.bf16 %v3959
        %v4056 = vunpack.c.l.bf16 %v3960
        %v4057 = vunpack.c.l.bf16 %v3961
        %v4058 = vunpack.c.l.bf16 %v3962
        %v4059 = vunpack.c.l.bf16 %v3963
        %v4060 = vunpack.c.l.bf16 %v3964
        %v4061 = vunpack.c.l.bf16 %v3965
        %v4062 = vmul.f32 %v4054, %v3490
        %v4063 = vmul.f32 %v4055, %v3491
        %v4064 = vmul.f32 %v4056, %v3492
        %v4065 = vmul.f32 %v4057, %v3493
        %v4066 = vmul.f32 %v4058, %v3494
        %v4067 = vmul.f32 %v4059, %v3495
        %v4068 = vmul.f32 %v4060, %v3496
        %v4069 = vmul.f32 %v4061, %v3497
        %v4070 = vadd.f32 %v4062, %v4046
        %v4071 = vadd.f32 %v4063, %v4047
        %v4072 = vadd.f32 %v4064, %v4048
        %v4073 = vadd.f32 %v4065, %v4049
        %v4074 = vadd.f32 %v4066, %v4050
        %v4075 = vadd.f32 %v4067, %v4051
        %v4076 = vadd.f32 %v4068, %v4052
        %v4077 = vadd.f32 %v4069, %v4053
        %v4078 = vunpack.c.l.bf16 %v4006
        %v4079 = vunpack.c.l.bf16 %v4007
        %v4080 = vunpack.c.l.bf16 %v4008
        %v4081 = vunpack.c.l.bf16 %v4009
        %v4082 = vunpack.c.l.bf16 %v4010
        %v4083 = vunpack.c.l.bf16 %v4011
        %v4084 = vunpack.c.l.bf16 %v4012
        %v4085 = vunpack.c.l.bf16 %v4013
        %v4086 = vtanh.pop %v4070
        %v4087 = vtanh.pop %v4071
        %v4088 = vtanh.pop %v4072
        %v4089 = vtanh.pop %v4073
        %v4090 = vtanh.pop %v4074
        %v4091 = vtanh.pop %v4075
        %v4092 = vtanh.pop %v4076
        %v4093 = vtanh.pop %v4077
        %v4094 = vmul.f32 %v4078, %v4086
        %v4095 = vmul.f32 %v4079, %v4087
        %v4096 = vmul.f32 %v4080, %v4088
        %v4097 = vmul.f32 %v4081, %v4089
        %v4098 = vmul.f32 %v4082, %v4090
        %v4099 = vmul.f32 %v4083, %v4091
        %v4100 = vmul.f32 %v4084, %v4092
        %v4101 = vmul.f32 %v4085, %v4093
        %v4102 = vpack.c.bf16 %v4095, %v4094
        %v4103 = vpack.c.bf16 %v4097, %v4096
        %v4104 = vpack.c.bf16 %v4099, %v4098
        %v4105 = vpack.c.bf16 %v4101, %v4100
        %v4106 = vld [vmem:[%s4] sm:$0x3]
        %v4107 = vld [vmem:[%s5] sm:$0xf]
        %4109 = vset.pattern.permute.xlu0 0
        %4110 = vperm.xlu0 %4109, %v4107
        %v4111 = vpop.permute.xlu0 %4110
        %v4114 = vsel %vm1160, %v4106, 0
        %4116 = vmatpush.bf16.msra.mxu0 0
        %4117 = vmatpush.bf16.msra.mxu0 0
        %4118 = vmatpush.bf16.msra.mxu0 0
        %4119 = vmatpush.bf16.msra.mxu0 0
        %4120 = vmatpush.bf16.msra.mxu0 %v4105
        %4121 = vmatpush.bf16.msra.mxu0 %v4104
        %4122 = vmatpush.bf16.msra.mxu0 %v4103
        %4123 = vmatpush.bf16.msra.mxu0 %v4102
        %4124 = vmatmul.bf16.gmra.mxu0 %v4114
        %v4125 = vpop.f32.mrf.mxu0
        %v4126 = vadd.f32 %v4111, %v4125
        %v4127 = vpop.f32.mrf.mxu0
        %4128 = vdwg.mxu0
        %4129 = vst [vmem:[%s342] sm:$0xf] %v4126
        %p4130 = scmp.lt.s32.totalorder %s21, 1
        %s4131 = scalar_select %p4130, %s21, 1
        %p4132 = scmp.lt.s32.totalorder %s22, 1
        %s4133 = scalar_select %p4132, %s22, 1
        %s4134 = smul.addr %s4131, 2
        %s4135 = sadd.s32 %s4133, %s4134
        %s4136 = smul.addr %s4135, 4
        %s4137 = scalar_lea.vmem %s6, %s4136
        // Predicated region
        $region83: #{lstm_pixel_forward.1} parent=77 // pred_check
          %p4138 = pneg %p182
        $region84: #{lstm_pixel_forward.1} parent=77 // pred_check_branch
          %4140 = sbr.rel (%p4138) target = $region86
        $region85: #{lstm_pixel_forward.1} parent=77 // pred_region
          _
        $region86: #{lstm_pixel_forward.1} parent=77 // pred_fallthru
          _
      $region78: #{lstm_pixel_forward.1} parent=5 // pred_fallthru
        _
      %p4141 = scmp.le.s32.totalorder 2, %s12
      // Predicated region
      $region87: #{lstm_pixel_forward.1} parent=5 // pred_check
        %p4142 = pneg %p4141
      $region88: #{lstm_pixel_forward.1} parent=5 // pred_check_branch
        %4144 = sbr.rel (%p4142) target = $region90
      $region89: #{lstm_pixel_forward.1} parent=5 // pred_region
        %s4145 = ssub.s32 %s12, 2
        // Predicated region
        $region91: #{lstm_pixel_forward.1} parent=89 // pred_check
          %p4146 = pneg %p188
        $region92: #{lstm_pixel_forward.1} parent=89 // pred_check_branch
          %4148 = sbr.rel (%p4146) target = $region94
        $region93: #{lstm_pixel_forward.1} parent=89 // pred_region
          %p4149 = scmp.lt.s32.totalorder %s23, 1
          %s4150 = scalar_select %p4149, %s23, 1
          %p4151 = scmp.lt.s32.totalorder %s24, 1
          %s4152 = scalar_select %p4151, %s24, 1
          %s4153 = smul.addr %s4150, 2
          %s4154 = sadd.s32 %s4152, %s4153
          %s4155 = smul.addr %s4154, 4
          %s4156 = scalar_lea.vmem %s6, %s4155
        $region94: #{lstm_pixel_forward.1} parent=89 // pred_fallthru
          _
      $region90: #{lstm_pixel_forward.1} parent=5 // pred_fallthru
        _
    $region6: #{lstm_pixel_forward.1} parent=1 // loop_footer
      %s16 = sadd.s32 1, %s12
    $region7: #{lstm_pixel_forward.1} parent=1 // loop_footer_branch
      %11 = sbr.rel target = $region3
    $region8: #{lstm_pixel_forward.1} parent=1 // loop_exit
      _

</llo_original>
